<compile_context>
chip_gen: v7x
topology: tpu7x:2x2x1
jax: 0.10.0
libtpu: 0.0.40
codegen_flags: <defaults>
</compile_context>

<pallas_src>
import functools

import jax
import jax.numpy as jnp
from jax.experimental import pallas as pl
from jax.experimental.pallas import tpu as pltpu

BN_EPS = 1e-5
LANE = 128


def _conv_stats_kernel(x_ref, w_ref, conv_ref, sum_ref, sumsq_ref, *,
                       KH, KW, Cin, Wpad, Wo):
    """One batch image x one Cout tile.

    x_ref    : (L, Cin)  bf16  flattened zero-padded NHWC image, L = (Ho+KH)*Wpad
    w_ref    : (KH*KW*Cin, TC) bf16
    conv_ref : (Mf, TC)  f32   conv over the padded width, Mf = Ho*Wpad
    sum_ref  : (1, TC)   f32   per-channel sum over valid output positions
    sumsq_ref: (1, TC)   f32   per-channel sum of squares over valid positions
    """
    Mf, TC = conv_ref.shape
    acc = jnp.zeros((Mf, TC), jnp.float32)
    # Conv as KH*KW shifted matmuls (stride 1): a (kh, kw) tap of the padded
    # image is a contiguous offset of kh*Wpad + kw in the flattened view.
    for kh in range(KH):
        for kw in range(KW):
            off = kh * Wpad + kw
            tap = kh * KW + kw
            acc = acc + jnp.dot(
                x_ref[pl.ds(off, Mf), :],
                w_ref[pl.ds(tap * Cin, Cin), :],
                preferred_element_type=jnp.float32,
            )
    conv_ref[...] = acc

    # BN batch statistics: mask the 2*padding junk columns (wp >= Wo) that come
    # from computing over the padded width.
    wp = jax.lax.broadcasted_iota(jnp.int32, (Mf, 1), 0) % Wpad
    valid = (wp < Wo).astype(jnp.float32)                  # (Mf, 1)
    masked = acc * valid
    sum_ref[...] = jnp.sum(masked, axis=0, keepdims=True)
    sumsq_ref[...] = jnp.sum(masked * acc, axis=0, keepdims=True)


def _bn_relu_kernel(conv_ref, scale_ref, shift_ref, out_ref, *, apply_relu):
    y = conv_ref[...] * scale_ref[...] + shift_ref[...]   # one FMA per element
    if apply_relu:
        y = jnp.maximum(y, 0.0)
    out_ref[...] = y.astype(out_ref.dtype)


def conv_block_pallas(x_nchw, weight_oihw, gamma, beta, *,
                      stride=1, padding=1, apply_relu=True):
    """Forward pass of ConvBlock. x: (N, Cin, H, W) -> (N, Cout, Ho, Wo)."""
    N, Cin, H, W = x_nchw.shape
    Cout, Cin_w, KH, KW = weight_oihw.shape
    assert Cin_w == Cin
    # TODO(synk): only the module-default stride=1 path is implemented.
    assert stride == 1, "stride != 1 not implemented"
    assert KW <= 2 * padding + 1, "flat-shift conv needs KW <= 2*padding + 1"
    Ho = H + 2 * padding - KH + 1
    Wo = W + 2 * padding - KW + 1

    Wpad = W + 2 * padding
    Hpad = Ho + KH            # one extra zero row so every tap slice stays in bounds
    L = Hpad * Wpad
    Mf = Ho * Wpad            # conv computed over padded width; junk cols masked/sliced

    # ---- glue (plain JAX, ~1x input traffic): NCHW->NHWC, zero-pad, flatten, bf16 ----
    x_nhwc = jnp.transpose(x_nchw, (0, 2, 3, 1))
    xpad = jnp.pad(x_nhwc, ((0, 0), (padding, padding + 1),
                            (padding, padding), (0, 0)))
    x_flat = xpad.reshape(N, L, Cin).astype(jnp.bfloat16)

    # weights (Cout,Cin,KH,KW) -> (KH*KW*Cin, Cout), Cout padded lane-dense (x128)
    TC = LANE
    Cout_pad = ((Cout + TC - 1) // TC) * TC
    Kdim = KH * KW * Cin
    wmat = jnp.transpose(weight_oihw, (2, 3, 1, 0)).reshape(Kdim, Cout)
    wmat = jnp.pad(wmat, ((0, 0), (0, Cout_pad - Cout))).astype(jnp.bfloat16)

    nj = Cout_pad // TC

    # ---- phase 1: conv (MXU) + per-channel sum / sumsq partials ----
    conv, sums, sumsqs = pl.pallas_call(
        functools.partial(_conv_stats_kernel, KH=KH, KW=KW, Cin=Cin,
                          Wpad=Wpad, Wo=Wo),
        out_shape=(
            jax.ShapeDtypeStruct((N, Mf, Cout_pad), jnp.float32),
            jax.ShapeDtypeStruct((N, 1, Cout_pad), jnp.float32),
            jax.ShapeDtypeStruct((N, 1, Cout_pad), jnp.float32),
        ),
        grid=(N, nj),
        in_specs=[
            pl.BlockSpec((None, L, Cin), lambda n, j: (n, 0, 0)),
            pl.BlockSpec((Kdim, TC), lambda n, j: (0, j)),
        ],
        out_specs=(
            pl.BlockSpec((None, Mf, TC), lambda n, j: (n, 0, j)),
            pl.BlockSpec((None, 1, TC), lambda n, j: (n, 0, j)),
            pl.BlockSpec((None, 1, TC), lambda n, j: (n, 0, j)),
        ),
        compiler_params=pltpu.CompilerParams(
            dimension_semantics=("parallel", "parallel")),
        cost_estimate=pl.CostEstimate(
            flops=2 * N * Mf * Kdim * Cout_pad,
            transcendentals=0,
            bytes_accessed=(N * L * Cin * 2 + N * Kdim * Cout_pad * 2
                            + N * (Mf + 2) * Cout_pad * 4),
        ),
    )(x_flat, wmat)

    # ---- tiny per-channel BN fold (plain JAX): mean/var -> (scale, shift) ----
    count = jnp.float32(N * Ho * Wo)
    tot = jnp.sum(sums, axis=(0, 1))
    tot2 = jnp.sum(sumsqs, axis=(0, 1))
    mean = tot / count
    var = jnp.maximum(tot2 / count - mean * mean, 0.0)   # E[x^2]-E[x]^2, f32
    inv_std = jax.lax.rsqrt(var + BN_EPS)
    gamma_p = jnp.pad(gamma.astype(jnp.float32), (0, Cout_pad - Cout))
    beta_p = jnp.pad(beta.astype(jnp.float32), (0, Cout_pad - Cout))
    scale = (gamma_p * inv_std).reshape(1, Cout_pad)
    shift = (beta_p - mean * gamma_p * inv_std).reshape(1, Cout_pad)

    # ---- phase 2: tiled elementwise normalize (+ ReLU) ----
    M2 = N * Mf
    TM = min(256, M2)
    conv_flat = conv.reshape(M2, Cout_pad)
    out2 = pl.pallas_call(
        functools.partial(_bn_relu_kernel, apply_relu=apply_relu),
        out_shape=jax.ShapeDtypeStruct((M2, Cout_pad), jnp.float32),
        grid=(pl.cdiv(M2, TM), nj),
        in_specs=[
            pl.BlockSpec((TM, TC), lambda i, j: (i, j)),
            pl.BlockSpec((1, TC), lambda i, j: (0, j)),
            pl.BlockSpec((1, TC), lambda i, j: (0, j)),
        ],
        out_specs=pl.BlockSpec((TM, TC), lambda i, j: (i, j)),
        compiler_params=pltpu.CompilerParams(
            dimension_semantics=("parallel", "parallel")),
    )(conv_flat, scale, shift)

    out = out2.reshape(N, Ho, Wpad, Cout_pad)[:, :, :Wo, :Cout]
    return jnp.transpose(out, (0, 3, 1, 2))  # back to NCHW


def _reference(x_nchw, weight_oihw, gamma, beta, *, apply_relu=True):
    # Pure-JAX f32 reference: conv (NCHW/OIHW) + training-mode BN + ReLU.
    conv = jax.lax.conv_general_dilated(
        x_nchw, weight_oihw, window_strides=(1, 1), padding=((1, 1), (1, 1)),
        dimension_numbers=("NCHW", "OIHW", "NCHW"))
    mean = jnp.mean(conv, axis=(0, 2, 3), keepdims=True)
    var = jnp.mean(jnp.square(conv - mean), axis=(0, 2, 3), keepdims=True)
    y = (conv - mean) * jax.lax.rsqrt(var + BN_EPS)
    y = y * gamma.reshape(1, -1, 1, 1) + beta.reshape(1, -1, 1, 1)
    return jnp.maximum(y, 0.0) if apply_relu else y


if __name__ == "__main__":
    # Small deterministic problem: batch=2, in_channels=4, out_channels=8, 16x16.
    N, Cin, Cout, H, W = 2, 4, 8, 16, 16
    KH = KW = 3

    key = jax.random.PRNGKey(0)
    kx, kw_, kg, kb = jax.random.split(key, 4)
    x = jax.random.normal(kx, (N, Cin, H, W), dtype=jnp.float32)
    weight = jax.random.normal(kw_, (Cout, Cin, KH, KW), dtype=jnp.float32) * 0.1
    gamma = 1.0 + 0.1 * jax.random.normal(kg, (Cout,), dtype=jnp.float32)
    beta = 0.1 * jax.random.normal(kb, (Cout,), dtype=jnp.float32)

    out = jax.jit(conv_block_pallas)(x, weight, gamma, beta)
    out = jax.block_until_ready(out)

    ref = jax.block_until_ready(_reference(x, weight, gamma, beta))
    assert out.shape == (N, Cout, H, W), out.shape
    err = jnp.max(jnp.abs(out - ref))
    # bf16 MXU inputs (f32 accumulation) vs the f32 reference -> loosened tolerance.
    assert jnp.allclose(out, ref, rtol=5e-2, atol=5e-2), f"max abs err {err}"

    print("KERNEL_OK")
</pallas_src>

<mosaic_0001>
module attributes {stable_mosaic.version = 11 : i64} {
  func.func @_conv_stats_kernel(%arg0: i32, %arg1: i32, %arg2: memref<1x342x4xbf16, #tpu.memory_space<vmem>>, %arg3: memref<36x128xbf16, #tpu.memory_space<vmem>>, %arg4: memref<1x288x128xf32, #tpu.memory_space<vmem>>, %arg5: memref<1x1x128xf32, #tpu.memory_space<vmem>>, %arg6: memref<1x1x128xf32, #tpu.memory_space<vmem>>) attributes {dimension_semantics = [#tpu.dimension_semantics<parallel>, #tpu.dimension_semantics<parallel>], iteration_bounds = array<i64: 2, 1>, scalar_prefetch = 0 : i64, scratch_operands = 0 : i64, tpu.core_type = #tpu.core_type<tc>, window_params = [{transform_indices = @transform_0, window_bounds = array<i64: 1, 342, 4>}, {transform_indices = @transform_1, window_bounds = array<i64: 36, 128>}, {transform_indices = @transform_2, window_bounds = array<i64: 1, 288, 128>}, {transform_indices = @transform_3, window_bounds = array<i64: 1, 1, 128>}, {transform_indices = @transform_4, window_bounds = array<i64: 1, 1, 128>}]} {
    %cst = arith.constant 0.000000e+00 : f32
    %0 = vector.broadcast %cst : f32 to vector<288x128xf32>
    %c0 = arith.constant 0 : index
    %c0_0 = arith.constant 0 : index
    %c0_1 = arith.constant 0 : index
    %1 = vector.load %arg2[%c0, %c0_0, %c0_1] : memref<1x342x4xbf16, #tpu.memory_space<vmem>>, vector<1x288x4xbf16>
    %2 = vector.shape_cast %1 : vector<1x288x4xbf16> to vector<288x4xbf16>
    %c0_2 = arith.constant 0 : index
    %c0_3 = arith.constant 0 : index
    %3 = vector.load %arg3[%c0_2, %c0_3] : memref<36x128xbf16, #tpu.memory_space<vmem>>, vector<4x128xbf16>
    %cst_4 = arith.constant dense<0.000000e+00> : vector<288x128xf32>
    %4 = tpu.matmul %2, %3, %cst_4 {dimension_numbers = #tpu.dot_dimension_numbers<[1], [0], [0], [1], [0, 0, 1, 1], [], []>} : vector<288x4xbf16>, vector<4x128xbf16>, vector<288x128xf32> -> vector<288x128xf32>
    %5 = arith.addf %0, %4 : vector<288x128xf32>
    %c0_5 = arith.constant 0 : index
    %c1 = arith.constant 1 : index
    %c0_6 = arith.constant 0 : index
    %6 = vector.load %arg2[%c0_5, %c1, %c0_6] : memref<1x342x4xbf16, #tpu.memory_space<vmem>>, vector<1x288x4xbf16>
    %7 = vector.shape_cast %6 : vector<1x288x4xbf16> to vector<288x4xbf16>
    %c4 = arith.constant 4 : index
    %c0_7 = arith.constant 0 : index
    %8 = vector.load %arg3[%c4, %c0_7] : memref<36x128xbf16, #tpu.memory_space<vmem>>, vector<4x128xbf16>
    %cst_8 = arith.constant dense<0.000000e+00> : vector<288x128xf32>
    %9 = tpu.matmul %7, %8, %cst_8 {dimension_numbers = #tpu.dot_dimension_numbers<[1], [0], [0], [1], [0, 0, 1, 1], [], []>} : vector<288x4xbf16>, vector<4x128xbf16>, vector<288x128xf32> -> vector<288x128xf32>
    %10 = arith.addf %5, %9 : vector<288x128xf32>
    %c0_9 = arith.constant 0 : index
    %c2 = arith.constant 2 : index
    %c0_10 = arith.constant 0 : index
    %11 = vector.load %arg2[%c0_9, %c2, %c0_10] : memref<1x342x4xbf16, #tpu.memory_space<vmem>>, vector<1x288x4xbf16>
    %12 = vector.shape_cast %11 : vector<1x288x4xbf16> to vector<288x4xbf16>
    %c8 = arith.constant 8 : index
    %c0_11 = arith.constant 0 : index
    %13 = vector.load %arg3[%c8, %c0_11] : memref<36x128xbf16, #tpu.memory_space<vmem>>, vector<4x128xbf16>
    %cst_12 = arith.constant dense<0.000000e+00> : vector<288x128xf32>
    %14 = tpu.matmul %12, %13, %cst_12 {dimension_numbers = #tpu.dot_dimension_numbers<[1], [0], [0], [1], [0, 0, 1, 1], [], []>} : vector<288x4xbf16>, vector<4x128xbf16>, vector<288x128xf32> -> vector<288x128xf32>
    %15 = arith.addf %10, %14 : vector<288x128xf32>
    %c0_13 = arith.constant 0 : index
    %c18 = arith.constant 18 : index
    %c0_14 = arith.constant 0 : index
    %16 = vector.load %arg2[%c0_13, %c18, %c0_14] : memref<1x342x4xbf16, #tpu.memory_space<vmem>>, vector<1x288x4xbf16>
    %17 = vector.shape_cast %16 : vector<1x288x4xbf16> to vector<288x4xbf16>
    %c12 = arith.constant 12 : index
    %c0_15 = arith.constant 0 : index
    %18 = vector.load %arg3[%c12, %c0_15] : memref<36x128xbf16, #tpu.memory_space<vmem>>, vector<4x128xbf16>
    %cst_16 = arith.constant dense<0.000000e+00> : vector<288x128xf32>
    %19 = tpu.matmul %17, %18, %cst_16 {dimension_numbers = #tpu.dot_dimension_numbers<[1], [0], [0], [1], [0, 0, 1, 1], [], []>} : vector<288x4xbf16>, vector<4x128xbf16>, vector<288x128xf32> -> vector<288x128xf32>
    %20 = arith.addf %15, %19 : vector<288x128xf32>
    %c0_17 = arith.constant 0 : index
    %c19 = arith.constant 19 : index
    %c0_18 = arith.constant 0 : index
    %21 = vector.load %arg2[%c0_17, %c19, %c0_18] : memref<1x342x4xbf16, #tpu.memory_space<vmem>>, vector<1x288x4xbf16>
    %22 = vector.shape_cast %21 : vector<1x288x4xbf16> to vector<288x4xbf16>
    %c16 = arith.constant 16 : index
    %c0_19 = arith.constant 0 : index
    %23 = vector.load %arg3[%c16, %c0_19] : memref<36x128xbf16, #tpu.memory_space<vmem>>, vector<4x128xbf16>
    %cst_20 = arith.constant dense<0.000000e+00> : vector<288x128xf32>
    %24 = tpu.matmul %22, %23, %cst_20 {dimension_numbers = #tpu.dot_dimension_numbers<[1], [0], [0], [1], [0, 0, 1, 1], [], []>} : vector<288x4xbf16>, vector<4x128xbf16>, vector<288x128xf32> -> vector<288x128xf32>
    %25 = arith.addf %20, %24 : vector<288x128xf32>
    %c0_21 = arith.constant 0 : index
    %c20 = arith.constant 20 : index
    %c0_22 = arith.constant 0 : index
    %26 = vector.load %arg2[%c0_21, %c20, %c0_22] : memref<1x342x4xbf16, #tpu.memory_space<vmem>>, vector<1x288x4xbf16>
    %27 = vector.shape_cast %26 : vector<1x288x4xbf16> to vector<288x4xbf16>
    %c20_23 = arith.constant 20 : index
    %c0_24 = arith.constant 0 : index
    %28 = vector.load %arg3[%c20_23, %c0_24] : memref<36x128xbf16, #tpu.memory_space<vmem>>, vector<4x128xbf16>
    %cst_25 = arith.constant dense<0.000000e+00> : vector<288x128xf32>
    %29 = tpu.matmul %27, %28, %cst_25 {dimension_numbers = #tpu.dot_dimension_numbers<[1], [0], [0], [1], [0, 0, 1, 1], [], []>} : vector<288x4xbf16>, vector<4x128xbf16>, vector<288x128xf32> -> vector<288x128xf32>
    %30 = arith.addf %25, %29 : vector<288x128xf32>
    %c0_26 = arith.constant 0 : index
    %c36 = arith.constant 36 : index
    %c0_27 = arith.constant 0 : index
    %31 = vector.load %arg2[%c0_26, %c36, %c0_27] : memref<1x342x4xbf16, #tpu.memory_space<vmem>>, vector<1x288x4xbf16>
    %32 = vector.shape_cast %31 : vector<1x288x4xbf16> to vector<288x4xbf16>
    %c24 = arith.constant 24 : index
    %c0_28 = arith.constant 0 : index
    %33 = vector.load %arg3[%c24, %c0_28] : memref<36x128xbf16, #tpu.memory_space<vmem>>, vector<4x128xbf16>
    %cst_29 = arith.constant dense<0.000000e+00> : vector<288x128xf32>
    %34 = tpu.matmul %32, %33, %cst_29 {dimension_numbers = #tpu.dot_dimension_numbers<[1], [0], [0], [1], [0, 0, 1, 1], [], []>} : vector<288x4xbf16>, vector<4x128xbf16>, vector<288x128xf32> -> vector<288x128xf32>
    %35 = arith.addf %30, %34 : vector<288x128xf32>
    %c0_30 = arith.constant 0 : index
    %c37 = arith.constant 37 : index
    %c0_31 = arith.constant 0 : index
    %36 = vector.load %arg2[%c0_30, %c37, %c0_31] : memref<1x342x4xbf16, #tpu.memory_space<vmem>>, vector<1x288x4xbf16>
    %37 = vector.shape_cast %36 : vector<1x288x4xbf16> to vector<288x4xbf16>
    %c28 = arith.constant 28 : index
    %c0_32 = arith.constant 0 : index
    %38 = vector.load %arg3[%c28, %c0_32] : memref<36x128xbf16, #tpu.memory_space<vmem>>, vector<4x128xbf16>
    %cst_33 = arith.constant dense<0.000000e+00> : vector<288x128xf32>
    %39 = tpu.matmul %37, %38, %cst_33 {dimension_numbers = #tpu.dot_dimension_numbers<[1], [0], [0], [1], [0, 0, 1, 1], [], []>} : vector<288x4xbf16>, vector<4x128xbf16>, vector<288x128xf32> -> vector<288x128xf32>
    %40 = arith.addf %35, %39 : vector<288x128xf32>
    %c0_34 = arith.constant 0 : index
    %c38 = arith.constant 38 : index
    %c0_35 = arith.constant 0 : index
    %41 = vector.load %arg2[%c0_34, %c38, %c0_35] : memref<1x342x4xbf16, #tpu.memory_space<vmem>>, vector<1x288x4xbf16>
    %42 = vector.shape_cast %41 : vector<1x288x4xbf16> to vector<288x4xbf16>
    %c32 = arith.constant 32 : index
    %c0_36 = arith.constant 0 : index
    %43 = vector.load %arg3[%c32, %c0_36] : memref<36x128xbf16, #tpu.memory_space<vmem>>, vector<4x128xbf16>
    %cst_37 = arith.constant dense<0.000000e+00> : vector<288x128xf32>
    %44 = tpu.matmul %42, %43, %cst_37 {dimension_numbers = #tpu.dot_dimension_numbers<[1], [0], [0], [1], [0, 0, 1, 1], [], []>} : vector<288x4xbf16>, vector<4x128xbf16>, vector<288x128xf32> -> vector<288x128xf32>
    %45 = arith.addf %40, %44 : vector<288x128xf32>
    %c0_38 = arith.constant 0 : index
    %c0_39 = arith.constant 0 : index
    %c0_40 = arith.constant 0 : index
    %46 = vector.load %arg4[%c0_38, %c0_39, %c0_40] : memref<1x288x128xf32, #tpu.memory_space<vmem>>, vector<1x288x128xf32>
    %47 = vector.shape_cast %46 : vector<1x288x128xf32> to vector<288x128xf32>
    %48 = vector.shape_cast %45 : vector<288x128xf32> to vector<1x288x128xf32>
    tpu.vector_store %arg4[%c0_38, %c0_39, %c0_40], %48 {strides = array<i32>} : memref<1x288x128xf32, #tpu.memory_space<vmem>>, vector<1x288x128xf32>,
    %49 = tpu.iota {dimensions = array<i32: 0>} : vector<288x1xi32>
    %c18_i32 = arith.constant 18 : i32
    %c0_i32 = arith.constant 0 : i32
    %50 = arith.cmpi eq, %c18_i32, %c0_i32 : i32
    %c1_i32 = arith.constant 1 : i32
    %51 = arith.select %50, %c1_i32, %c18_i32 : i32
    %52 = vector.broadcast %51 : i32 to vector<288x1xi32>
    %53 = arith.remsi %49, %52 : vector<288x1xi32>
    %c0_i32_41 = arith.constant 0 : i32
    %54 = vector.broadcast %c0_i32_41 : i32 to vector<288x1xi32>
    %55 = arith.cmpi ne, %53, %54 : vector<288x1xi32>
    %c0_i32_42 = arith.constant 0 : i32
    %56 = vector.broadcast %c0_i32_42 : i32 to vector<288x1xi32>
    %57 = arith.cmpi slt, %53, %56 : vector<288x1xi32>
    %c0_i32_43 = arith.constant 0 : i32
    %58 = arith.cmpi slt, %51, %c0_i32_43 : i32
    %59 = vector.broadcast %58 : i1 to vector<288x1xi1>
    %60 = vector.broadcast %59 : vector<288x1xi1> to vector<288x1xi1>
    %61 = arith.xori %57, %60 : vector<288x1xi1>
    %62 = arith.andi %61, %55 : vector<288x1xi1>
    %63 = vector.broadcast %51 : i32 to vector<288x1xi32>
    %64 = arith.addi %53, %63 : vector<288x1xi32>
    %65 = arith.select %62, %64, %53 : vector<288x1xi1>, vector<288x1xi32>
    %c16_i32 = arith.constant 16 : i32
    %66 = vector.broadcast %c16_i32 : i32 to vector<288x1xi32>
    %67 = arith.cmpi slt, %65, %66 : vector<288x1xi32>
    %68 = arith.extui %67 : vector<288x1xi1> to vector<288x1xi32>
    %69 = arith.sitofp %68 : vector<288x1xi32> to vector<288x1xf32>
    %70 = vector.broadcast %69 : vector<288x1xf32> to vector<288x128xf32>
    %71 = arith.mulf %45, %70 : vector<288x128xf32>
    %cst_44 = arith.constant dense<0.000000e+00> : vector<128xf32>
    %72 = vector.multi_reduction <add>, %71, %cst_44 [0] : vector<288x128xf32> to vector<128xf32>
    %73 = vector.shape_cast %72 : vector<128xf32> to vector<1x128xf32>
    %c0_45 = arith.constant 0 : index
    %c0_46 = arith.constant 0 : index
    %c0_47 = arith.constant 0 : index
    %74 = vector.load %arg5[%c0_45, %c0_46, %c0_47] : memref<1x1x128xf32, #tpu.memory_space<vmem>>, vector<1x1x128xf32>
    %75 = vector.shape_cast %74 : vector<1x1x128xf32> to vector<1x128xf32>
    %76 = vector.shape_cast %73 : vector<1x128xf32> to vector<1x1x128xf32>
    tpu.vector_store %arg5[%c0_45, %c0_46, %c0_47], %76 {strides = array<i32>} : memref<1x1x128xf32, #tpu.memory_space<vmem>>, vector<1x1x128xf32>,
    %77 = arith.mulf %71, %45 : vector<288x128xf32>
    %cst_48 = arith.constant dense<0.000000e+00> : vector<128xf32>
    %78 = vector.multi_reduction <add>, %77, %cst_48 [0] : vector<288x128xf32> to vector<128xf32>
    %79 = vector.shape_cast %78 : vector<128xf32> to vector<1x128xf32>
    %c0_49 = arith.constant 0 : index
    %c0_50 = arith.constant 0 : index
    %c0_51 = arith.constant 0 : index
    %80 = vector.load %arg6[%c0_49, %c0_50, %c0_51] : memref<1x1x128xf32, #tpu.memory_space<vmem>>, vector<1x1x128xf32>
    %81 = vector.shape_cast %80 : vector<1x1x128xf32> to vector<1x128xf32>
    %82 = vector.shape_cast %79 : vector<1x128xf32> to vector<1x1x128xf32>
    tpu.vector_store %arg6[%c0_49, %c0_50, %c0_51], %82 {strides = array<i32>} : memref<1x1x128xf32, #tpu.memory_space<vmem>>, vector<1x1x128xf32>,
    return
  }
  func.func @transform_0(%arg0: i32, %arg1: i32) -> (i32, i32, i32) {
    %c0_i32 = arith.constant 0 : i32
    %c0_i32_0 = arith.constant 0 : i32
    %c0_i32_1 = arith.constant 0 : i32
    return %arg0, %c0_i32, %c0_i32_0 : i32, i32, i32
  }
  func.func @transform_1(%arg0: i32, %arg1: i32) -> (i32, i32) {
    %c0_i32 = arith.constant 0 : i32
    %c0_i32_0 = arith.constant 0 : i32
    return %c0_i32, %arg1 : i32, i32
  }
  func.func @transform_2(%arg0: i32, %arg1: i32) -> (i32, i32, i32) {
    %c0_i32 = arith.constant 0 : i32
    %c0_i32_0 = arith.constant 0 : i32
    return %arg0, %c0_i32, %arg1 : i32, i32, i32
  }
  func.func @transform_3(%arg0: i32, %arg1: i32) -> (i32, i32, i32) {
    %c0_i32 = arith.constant 0 : i32
    %c0_i32_0 = arith.constant 0 : i32
    return %arg0, %c0_i32, %arg1 : i32, i32, i32
  }
  func.func @transform_4(%arg0: i32, %arg1: i32) -> (i32, i32, i32) {
    %c0_i32 = arith.constant 0 : i32
    %c0_i32_0 = arith.constant 0 : i32
    return %arg0, %c0_i32, %arg1 : i32, i32, i32
  }
}

module attributes {stable_mosaic.version = 11 : i64} {
  func.func @_bn_relu_kernel(%arg0: i32, %arg1: i32, %arg2: memref<256x128xf32, #tpu.memory_space<vmem>>, %arg3: memref<1x128xf32, #tpu.memory_space<vmem>>, %arg4: memref<1x128xf32, #tpu.memory_space<vmem>>, %arg5: memref<256x128xf32, #tpu.memory_space<vmem>>) attributes {dimension_semantics = [#tpu.dimension_semantics<parallel>, #tpu.dimension_semantics<parallel>], iteration_bounds = array<i64: 3, 1>, scalar_prefetch = 0 : i64, scratch_operands = 0 : i64, tpu.core_type = #tpu.core_type<tc>, window_params = [{transform_indices = @transform_0, window_bounds = array<i64: 256, 128>}, {transform_indices = @transform_1, window_bounds = array<i64: 1, 128>}, {transform_indices = @transform_2, window_bounds = array<i64: 1, 128>}, {transform_indices = @transform_3, window_bounds = array<i64: 256, 128>}]} {
    %c0 = arith.constant 0 : index
    %c0_0 = arith.constant 0 : index
    %0 = vector.load %arg2[%c0, %c0_0] : memref<256x128xf32, #tpu.memory_space<vmem>>, vector<256x128xf32>
    %c0_1 = arith.constant 0 : index
    %c0_2 = arith.constant 0 : index
    %1 = vector.load %arg3[%c0_1, %c0_2] : memref<1x128xf32, #tpu.memory_space<vmem>>, vector<1x128xf32>
    %2 = vector.broadcast %1 : vector<1x128xf32> to vector<256x128xf32>
    %3 = arith.mulf %0, %2 : vector<256x128xf32>
    %c0_3 = arith.constant 0 : index
    %c0_4 = arith.constant 0 : index
    %4 = vector.load %arg4[%c0_3, %c0_4] : memref<1x128xf32, #tpu.memory_space<vmem>>, vector<1x128xf32>
    %5 = vector.broadcast %4 : vector<1x128xf32> to vector<256x128xf32>
    %6 = arith.addf %3, %5 : vector<256x128xf32>
    %cst = arith.constant 0.000000e+00 : f32
    %7 = vector.broadcast %cst : f32 to vector<256x128xf32>
    %8 = arith.maximumf %6, %7 : vector<256x128xf32>
    %c0_5 = arith.constant 0 : index
    %c0_6 = arith.constant 0 : index
    %9 = vector.load %arg5[%c0_5, %c0_6] : memref<256x128xf32, #tpu.memory_space<vmem>>, vector<256x128xf32>
    tpu.vector_store %arg5[%c0_5, %c0_6], %8 {strides = array<i32>} : memref<256x128xf32, #tpu.memory_space<vmem>>, vector<256x128xf32>,
    return
  }
  func.func @transform_0(%arg0: i32, %arg1: i32) -> (i32, i32) {
    %c0_i32 = arith.constant 0 : i32
    return %arg0, %arg1 : i32, i32
  }
  func.func @transform_1(%arg0: i32, %arg1: i32) -> (i32, i32) {
    %c0_i32 = arith.constant 0 : i32
    %c0_i32_0 = arith.constant 0 : i32
    return %c0_i32, %arg1 : i32, i32
  }
  func.func @transform_2(%arg0: i32, %arg1: i32) -> (i32, i32) {
    %c0_i32 = arith.constant 0 : i32
    %c0_i32_0 = arith.constant 0 : i32
    return %c0_i32, %arg1 : i32, i32
  }
  func.func @transform_3(%arg0: i32, %arg1: i32) -> (i32, i32) {
    %c0_i32 = arith.constant 0 : i32
    return %arg0, %arg1 : i32, i32
  }
}

</mosaic_0001>

<llo_original>
// kernel: conv_block_pallas.3
$region0: #{conv_block_pallas.3}
  #allocation0 [shape = 'u32[]', space=smem, size = 0x4, offset = 0x4, fixed_abs, tag = 'smem constant byte address 0x4 - core index']
  #allocation1 [shape = 'u32[144,128]{1,0:T(1,128)}', space=vmem, size = 0x12000, scoped, tag = 'internal scratch']
  %s0 = inlined_call_operand.vmem [shape: f32[576,128], index: 0, kind: input, shape index: {}]
  %s1 = inlined_call_operand.vmem [shape: f32[1,128], index: 1, kind: input, shape index: {}]
  %s2 = inlined_call_operand.vmem [shape: f32[1,128], index: 2, kind: input, shape index: {}]
  %s3 = inlined_call_operand.vmem [shape: f32[576,128], index: 3, kind: output, shape index: {}]
  %s4 = sld [smem:[#allocation0]]
  $region93: #{conv_block_pallas.3} parent=0
    _
  %s6 = ssub.s32 1, %s4
  %s7 = scalar_select 0, %s6, %s4
  $region1: #{conv_block_pallas.3} parent=0
    #allocation2 [shape = 'u8[262144]{0}', space=vmem, size = 0x40000, scoped, tag = 'output window, operand 0']
    loop: start=0, step=1, limit=5
    $region2: #{conv_block_pallas.3} parent=1 // loop_pre_header
      _
    $region3: #{conv_block_pallas.3} parent=1 // loop_header
      %s9 = sphi 0, %s13
      %p10 = scmp.ge.s32.totalorder %s9, 5
      %s16 = sphi 0, %s28
      %s17 = sphi 0, %s24
      %s18 = sphi 0, %s16
      %s19 = sphi 0, %s17
      %s20 = sphi 0, %s18
      %s21 = sphi 0, %s19
      %s33 = sphi 0, %s35
      %s36 = sphi 0, %s33
      %s37 = sphi 0, %s36
      %s53 = sphi 0, %s37
      %s59 = sphi 0, %s61
      %s62 = sphi 0, %s59
      %s63 = sphi 0, %s62
      %s79 = sphi 0, %s63
      %s85 = sphi 0, %s87
      %s88 = sphi 0, %s85
      %s89 = sphi 0, %s88
      %s105 = sphi 0, %s89
      %s113 = sphi 0, %s115
      %s116 = sphi 0, %s113
      %s117 = sphi 0, %s116
      %s133 = sphi 0, %s117
    $region4: #{conv_block_pallas.3} parent=1 // loop_header_branch
      %12 = sbr.rel (%p10) target = $region8
    $region5: #{conv_block_pallas.3} parent=1 // loop_body
      %s14 = ssub.s32 %s9, 1
      %s15 = ssub.s32 %s9, 2
      %s22 = sadd.s32 1, %s17
      %p23 = scmp.ge.s32.totalorder %s22, 1
      %s24 = scalar_select %p23, 0, %s22
      %s25 = sadd.s32 1, %s16
      %s26 = scalar_select %p23, %s25, %s16
      %p27 = scmp.ge.s32.totalorder %s26, 3
      %s28 = scalar_select %p27, 0, %s26
      %s29 = ssub.s32 %s16, %s28
      %s30 = ssub.s32 %s17, %s24
      %s31 = sor.u32 %s29, %s30
      %p32 = scmp.eq.s32.totalorder %s31, 0
      %s34 = sadd.s32 %s33, 1
      %s35 = scalar_select %p32, %s33, %s34
      %p38 = pneg %p32
      %p39 = scmp.eq.s32.totalorder %s9, 2
      %p40 = por %p38, %p39
      %p41 = scmp.ne.s32.totalorder %s33, %s36
      %p42 = scmp.eq.s32.totalorder %s9, 0
      %p43 = por %p41, %p42
      %p44 = scmp.ne.s32.totalorder %s33, %s36
      %p45 = scmp.eq.s32.totalorder %s14, 2
      %p46 = por %p44, %p45
      %p47 = scmp.ne.s32.totalorder %s36, %s37
      %p48 = scmp.eq.s32.totalorder %s14, 0
      %p49 = por %p47, %p48
      %p50 = scmp.ne.s32.totalorder %s36, %s37
      %p51 = scmp.eq.s32.totalorder %s15, 2
      %p52 = por %p50, %p51
      %p54 = scmp.ne.s32.totalorder %s37, %s53
      %p55 = scmp.eq.s32.totalorder %s15, 0
      %p56 = por %p54, %p55
      %s57 = ssub.s32 %s17, %s24
      %p58 = scmp.eq.s32.totalorder %s57, 0
      %s60 = sadd.s32 %s59, 1
      %s61 = scalar_select %p58, %s59, %s60
      %p64 = pneg %p58
      %p65 = scmp.eq.s32.totalorder %s9, 2
      %p66 = por %p64, %p65
      %p67 = scmp.ne.s32.totalorder %s59, %s62
      %p68 = scmp.eq.s32.totalorder %s9, 0
      %p69 = por %p67, %p68
      %p70 = scmp.ne.s32.totalorder %s59, %s62
      %p71 = scmp.eq.s32.totalorder %s14, 2
      %p72 = por %p70, %p71
      %p73 = scmp.ne.s32.totalorder %s62, %s63
      %p74 = scmp.eq.s32.totalorder %s14, 0
      %p75 = por %p73, %p74
      %p76 = scmp.ne.s32.totalorder %s62, %s63
      %p77 = scmp.eq.s32.totalorder %s15, 2
      %p78 = por %p76, %p77
      %p80 = scmp.ne.s32.totalorder %s63, %s79
      %p81 = scmp.eq.s32.totalorder %s15, 0
      %p82 = por %p80, %p81
      %s83 = ssub.s32 %s17, %s24
      %p84 = scmp.eq.s32.totalorder %s83, 0
      %s86 = sadd.s32 %s85, 1
      %s87 = scalar_select %p84, %s85, %s86
      %p90 = pneg %p84
      %p91 = scmp.eq.s32.totalorder %s9, 2
      %p92 = por %p90, %p91
      %p93 = scmp.ne.s32.totalorder %s85, %s88
      %p94 = scmp.eq.s32.totalorder %s9, 0
      %p95 = por %p93, %p94
      %p96 = scmp.ne.s32.totalorder %s85, %s88
      %p97 = scmp.eq.s32.totalorder %s14, 2
      %p98 = por %p96, %p97
      %p99 = scmp.ne.s32.totalorder %s88, %s89
      %p100 = scmp.eq.s32.totalorder %s14, 0
      %p101 = por %p99, %p100
      %p102 = scmp.ne.s32.totalorder %s88, %s89
      %p103 = scmp.eq.s32.totalorder %s15, 2
      %p104 = por %p102, %p103
      %p106 = scmp.ne.s32.totalorder %s89, %s105
      %p107 = scmp.eq.s32.totalorder %s15, 0
      %p108 = por %p106, %p107
      %s109 = ssub.s32 %s16, %s28
      %s110 = ssub.s32 %s17, %s24
      %s111 = sor.u32 %s109, %s110
      %p112 = scmp.eq.s32.totalorder %s111, 0
      %s114 = sadd.s32 %s113, 1
      %s115 = scalar_select %p112, %s113, %s114
      %p118 = pneg %p112
      %p119 = scmp.eq.s32.totalorder %s9, 2
      %p120 = por %p118, %p119
      %p121 = scmp.ne.s32.totalorder %s113, %s116
      %p122 = scmp.eq.s32.totalorder %s9, 0
      %p123 = por %p121, %p122
      %p124 = scmp.ne.s32.totalorder %s113, %s116
      %p125 = scmp.eq.s32.totalorder %s14, 2
      %p126 = por %p124, %p125
      %p127 = scmp.ne.s32.totalorder %s116, %s117
      %p128 = scmp.eq.s32.totalorder %s14, 0
      %p129 = por %p127, %p128
      %p130 = scmp.ne.s32.totalorder %s116, %s117
      %p131 = scmp.eq.s32.totalorder %s15, 2
      %p132 = por %p130, %p131
      %p134 = scmp.ne.s32.totalorder %s117, %s133
      %p135 = scmp.eq.s32.totalorder %s15, 0
      %p136 = por %p134, %p135
      %p137 = scmp.le.s32.totalorder 1, %s9
      %p138 = scmp.lt.s32.totalorder %s9, 4
      %p139 = pnand %p137, %p138
      %p140 = pneg %p139
      // Predicated region
      $region9: #{conv_block_pallas.3} parent=5 // pred_check
        _
      $region10: #{conv_block_pallas.3} parent=5 // pred_check_branch
        %142 = sbr.rel (%p139) target = $region12
      $region11: #{conv_block_pallas.3} parent=5 // pred_region
        %s143 = ssub.s32 %s9, 1
        // Predicated region
        $region13: #{conv_block_pallas.3} parent=11 // pred_check
          %p144 = pneg %p75
        $region14: #{conv_block_pallas.3} parent=11 // pred_check_branch
          %146 = sbr.rel (%p144) target = $region16
        $region15: #{conv_block_pallas.3} parent=11 // pred_region
          %p147 = scmp.lt.s32.totalorder %s19, 0
          %s148 = scalar_select %p147, %s19, 0
          %s149 = scalar_lea.vmem %s1, %s148
        $region16: #{conv_block_pallas.3} parent=11 // pred_fallthru
          _
        // Predicated region
        $region17: #{conv_block_pallas.3} parent=11 // pred_check
          %p150 = pneg %p101
        $region18: #{conv_block_pallas.3} parent=11 // pred_check_branch
          %152 = sbr.rel (%p150) target = $region20
        $region19: #{conv_block_pallas.3} parent=11 // pred_region
          %p153 = scmp.lt.s32.totalorder %s19, 0
          %s154 = scalar_select %p153, %s19, 0
          %s155 = scalar_lea.vmem %s2, %s154
        $region20: #{conv_block_pallas.3} parent=11 // pred_fallthru
          _
      $region12: #{conv_block_pallas.3} parent=5 // pred_fallthru
        _
      %p156 = scmp.lt.s32.totalorder %s9, 3
      // Predicated region
      $region21: #{conv_block_pallas.3} parent=5 // pred_check
        %p157 = pneg %p156
      $region22: #{conv_block_pallas.3} parent=5 // pred_check_branch
        %159 = sbr.rel (%p157) target = $region24
      $region23: #{conv_block_pallas.3} parent=5 // pred_region
        // Predicated region
        $region25: #{conv_block_pallas.3} parent=23 // pred_check
          %p160 = pneg %p43
        $region26: #{conv_block_pallas.3} parent=23 // pred_check_branch
          %162 = sbr.rel (%p160) target = $region28
        $region27: #{conv_block_pallas.3} parent=23 // pred_region
          %s163 = smul.u32 32, %s16
          %s164 = ssub.s32 72, %s163
          %p165 = scmp.lt.s32.totalorder %s164, 32
          %s166 = scalar_select %p165, %s164, 32
          %s167 = smul.u32 128, %s166
          %p168 = scmp.lt.s32.totalorder %s163, 71
          %s169 = scalar_select %p168, %s163, 71
          %p170 = scmp.lt.s32.totalorder %s17, 0
          %s171 = scalar_select %p170, %s17, 0
          %s172 = sadd.s32 %s171, %s169
          %s173 = smul.addr %s172, 8
          %s174 = scalar_lea.vmem %s0, %s173
          %s175 = smul.u32 32, %s16
          %s176 = ssub.s32 72, %s175
          %p177 = scmp.lt.s32.totalorder %s176, 32
          %s178 = scalar_select %p177, %s176, 32
          %s179 = smul.u32 128, %s178
        $region28: #{conv_block_pallas.3} parent=23 // pred_fallthru
          _
      $region24: #{conv_block_pallas.3} parent=5 // pred_fallthru
        _
      %p180 = scmp.le.s32.totalorder 1, %s9
      %p181 = scmp.lt.s32.totalorder %s9, 4
      %p182 = pnand %p180, %p181
      %p183 = pneg %p182
      // Predicated region
      $region29: #{conv_block_pallas.3} parent=5 // pred_check
        _
      $region30: #{conv_block_pallas.3} parent=5 // pred_check_branch
        %185 = sbr.rel (%p182) target = $region32
      $region31: #{conv_block_pallas.3} parent=5 // pred_region
        %s186 = ssub.s32 %s9, 1
        %s187 = smul.u32 32, %s18
        %s188 = ssub.s32 72, %s187
        %p189 = scmp.lt.s32.totalorder %s188, 32
        %s190 = scalar_select %p189, %s188, 32
        %s191 = smul.u32 128, %s190
        %p192 = scmp.lt.s32.totalorder %s187, 71
        %s193 = scalar_select %p192, %s187, 71
        %p194 = scmp.lt.s32.totalorder %s19, 0
        %s195 = scalar_select %p194, %s19, 0
        %s196 = sadd.s32 %s195, %s193
        %s197 = smul.addr %s196, 8
        %s198 = scalar_lea.vmem %s0, %s197
        %p199 = pneg %p49
        %p200 = pneg %p46
        %p201 = scmp.lt.s32.totalorder %s19, 0
        %s202 = scalar_select %p201, %s19, 0
        %s203 = scalar_lea.vmem %s1, %s202
        %p204 = pneg %p75
        %p205 = pneg %p72
        %p206 = scmp.lt.s32.totalorder %s19, 0
        %s207 = scalar_select %p206, %s19, 0
        %s208 = scalar_lea.vmem %s2, %s207
        %p209 = pneg %p101
        %p210 = pneg %p98
        %p211 = pneg %p129
        %p212 = pneg %p126
        %s213 = sand.u32 %s116, 1
        %s214 = sand.u32 %s116, 1
        %s215 = smul.addr %s214, 256
        %s216 = scalar_lea.vmem [#allocation2], %s215
        %s217 = smul.u32 32, %s18
        %s218 = ssub.s32 72, %s217
        %p219 = scmp.lt.s32.totalorder %s218, 32
        %s220 = scalar_select %p219, %s218, 32
        %s221 = smul.u32 128, %s220
        %p222 = scmp.lt.s32.totalorder %s217, 71
        %s223 = scalar_select %p222, %s217, 71
        %p224 = scmp.lt.s32.totalorder %s19, 0
        %s225 = scalar_select %p224, %s19, 0
        %s226 = sadd.s32 %s225, %s223
        %s227 = smul.addr %s226, 8
        %s228 = scalar_lea.vmem %s0, %s227
        %s229 = smul.u32 32, %s18
        %s230 = ssub.s32 72, %s229
        %p231 = scmp.lt.s32.totalorder %s230, 32
        %s232 = scalar_select %p231, %s230, 32
        %s233 = smul.u32 128, %s232
        %p234 = scmp.lt.s32.totalorder %s19, 0
        %s235 = scalar_select %p234, %s19, 0
        %s236 = scalar_lea.vmem %s1, %s235
        %p237 = scmp.lt.s32.totalorder %s19, 0
        %s238 = scalar_select %p237, %s19, 0
        %s239 = scalar_lea.vmem %s2, %s238
        %s240 = smul.u32 32, %s18
        %s241 = ssub.s32 72, %s240
        %p242 = scmp.lt.s32.totalorder %s241, 32
        %s243 = scalar_select %p242, %s241, 32
        %s244 = smul.u32 128, %s243
        %v245 = vld [vmem:[%s228] sm:$0xff]
        %v246 = vld [vmem:[%s228 + $0x8] sm:$0xff]
        %v247 = vld [vmem:[%s228 + $0x10] sm:$0xff]
        %v248 = vld [vmem:[%s228 + $0x18] sm:$0xff]
        %v249 = vld [vmem:[%s228 + $0x20] sm:$0xff]
        %v250 = vld [vmem:[%s228 + $0x28] sm:$0xff]
        %v251 = vld [vmem:[%s228 + $0x30] sm:$0xff]
        %v252 = vld [vmem:[%s228 + $0x38] sm:$0xff]
        %v253 = vld [vmem:[%s228 + $0x40] sm:$0xff]
        %v254 = vld [vmem:[%s228 + $0x48] sm:$0xff]
        %v255 = vld [vmem:[%s228 + $0x50] sm:$0xff]
        %v256 = vld [vmem:[%s228 + $0x58] sm:$0xff]
        %v257 = vld [vmem:[%s228 + $0x60] sm:$0xff]
        %v258 = vld [vmem:[%s228 + $0x68] sm:$0xff]
        %v259 = vld [vmem:[%s228 + $0x70] sm:$0xff]
        %v260 = vld [vmem:[%s228 + $0x78] sm:$0xff]
        %v261 = vld [vmem:[%s228 + $0x80] sm:$0xff]
        %v262 = vld [vmem:[%s228 + $0x88] sm:$0xff]
        %v263 = vld [vmem:[%s228 + $0x90] sm:$0xff]
        %v264 = vld [vmem:[%s228 + $0x98] sm:$0xff]
        %v265 = vld [vmem:[%s228 + $0xa0] sm:$0xff]
        %v266 = vld [vmem:[%s228 + $0xa8] sm:$0xff]
        %v267 = vld [vmem:[%s228 + $0xb0] sm:$0xff]
        %v268 = vld [vmem:[%s228 + $0xb8] sm:$0xff]
        %v269 = vld [vmem:[%s228 + $0xc0] sm:$0xff]
        %v270 = vld [vmem:[%s228 + $0xc8] sm:$0xff]
        %v271 = vld [vmem:[%s228 + $0xd0] sm:$0xff]
        %v272 = vld [vmem:[%s228 + $0xd8] sm:$0xff]
        %v273 = vld [vmem:[%s228 + $0xe0] sm:$0xff]
        %v274 = vld [vmem:[%s228 + $0xe8] sm:$0xff]
        %v275 = vld [vmem:[%s228 + $0xf0] sm:$0xff]
        %v276 = vld [vmem:[%s228 + $0xf8] sm:$0xff]
        %v277 = vld [vmem:[%s236] sm:$0x1]
        %v279 = vlaneseq
        %v280 = vshrl.u32 %v279, 7
        %v281 = vsub.s32 0, %v280
        %v282 = vrot.slane %v277, %v281
        %v284 = vmul.f32 %v245, %v282
        %v285 = vmul.f32 %v246, %v282
        %v286 = vmul.f32 %v247, %v282
        %v287 = vmul.f32 %v248, %v282
        %v288 = vmul.f32 %v249, %v282
        %v289 = vmul.f32 %v250, %v282
        %v290 = vmul.f32 %v251, %v282
        %v291 = vmul.f32 %v252, %v282
        %v292 = vmul.f32 %v253, %v282
        %v293 = vmul.f32 %v254, %v282
        %v294 = vmul.f32 %v255, %v282
        %v295 = vmul.f32 %v256, %v282
        %v296 = vmul.f32 %v257, %v282
        %v297 = vmul.f32 %v258, %v282
        %v298 = vmul.f32 %v259, %v282
        %v299 = vmul.f32 %v260, %v282
        %v300 = vmul.f32 %v261, %v282
        %v301 = vmul.f32 %v262, %v282
        %v302 = vmul.f32 %v263, %v282
        %v303 = vmul.f32 %v264, %v282
        %v304 = vmul.f32 %v265, %v282
        %v305 = vmul.f32 %v266, %v282
        %v306 = vmul.f32 %v267, %v282
        %v307 = vmul.f32 %v268, %v282
        %v308 = vmul.f32 %v269, %v282
        %v309 = vmul.f32 %v270, %v282
        %v310 = vmul.f32 %v271, %v282
        %v311 = vmul.f32 %v272, %v282
        %v312 = vmul.f32 %v273, %v282
        %v313 = vmul.f32 %v274, %v282
        %v314 = vmul.f32 %v275, %v282
        %v315 = vmul.f32 %v276, %v282
        %v316 = vld [vmem:[%s239] sm:$0x1]
        %v318 = vlaneseq
        %v319 = vshrl.u32 %v318, 7
        %v320 = vsub.s32 0, %v319
        %v321 = vrot.slane %v316, %v320
        %v323 = vadd.f32 %v284, %v321
        %v324 = vadd.f32 %v285, %v321
        %v325 = vadd.f32 %v286, %v321
        %v326 = vadd.f32 %v287, %v321
        %v327 = vadd.f32 %v288, %v321
        %v328 = vadd.f32 %v289, %v321
        %v329 = vadd.f32 %v290, %v321
        %v330 = vadd.f32 %v291, %v321
        %v331 = vadd.f32 %v292, %v321
        %v332 = vadd.f32 %v293, %v321
        %v333 = vadd.f32 %v294, %v321
        %v334 = vadd.f32 %v295, %v321
        %v335 = vadd.f32 %v296, %v321
        %v336 = vadd.f32 %v297, %v321
        %v337 = vadd.f32 %v298, %v321
        %v338 = vadd.f32 %v299, %v321
        %v339 = vadd.f32 %v300, %v321
        %v340 = vadd.f32 %v301, %v321
        %v341 = vadd.f32 %v302, %v321
        %v342 = vadd.f32 %v303, %v321
        %v343 = vadd.f32 %v304, %v321
        %v344 = vadd.f32 %v305, %v321
        %v345 = vadd.f32 %v306, %v321
        %v346 = vadd.f32 %v307, %v321
        %v347 = vadd.f32 %v308, %v321
        %v348 = vadd.f32 %v309, %v321
        %v349 = vadd.f32 %v310, %v321
        %v350 = vadd.f32 %v311, %v321
        %v351 = vadd.f32 %v312, %v321
        %v352 = vadd.f32 %v313, %v321
        %v353 = vadd.f32 %v314, %v321
        %v354 = vadd.f32 %v315, %v321
        %v355 = vmax.f32 %v323, 0.0
        %v356 = vmax.f32 %v324, 0.0
        %v357 = vmax.f32 %v325, 0.0
        %v358 = vmax.f32 %v326, 0.0
        %v359 = vmax.f32 %v327, 0.0
        %v360 = vmax.f32 %v328, 0.0
        %v361 = vmax.f32 %v329, 0.0
        %v362 = vmax.f32 %v330, 0.0
        %v363 = vmax.f32 %v331, 0.0
        %v364 = vmax.f32 %v332, 0.0
        %v365 = vmax.f32 %v333, 0.0
        %v366 = vmax.f32 %v334, 0.0
        %v367 = vmax.f32 %v335, 0.0
        %v368 = vmax.f32 %v336, 0.0
        %v369 = vmax.f32 %v337, 0.0
        %v370 = vmax.f32 %v338, 0.0
        %v371 = vmax.f32 %v339, 0.0
        %v372 = vmax.f32 %v340, 0.0
        %v373 = vmax.f32 %v341, 0.0
        %v374 = vmax.f32 %v342, 0.0
        %v375 = vmax.f32 %v343, 0.0
        %v376 = vmax.f32 %v344, 0.0
        %v377 = vmax.f32 %v345, 0.0
        %v378 = vmax.f32 %v346, 0.0
        %v379 = vmax.f32 %v347, 0.0
        %v380 = vmax.f32 %v348, 0.0
        %v381 = vmax.f32 %v349, 0.0
        %v382 = vmax.f32 %v350, 0.0
        %v383 = vmax.f32 %v351, 0.0
        %v384 = vmax.f32 %v352, 0.0
        %v385 = vmax.f32 %v353, 0.0
        %v386 = vmax.f32 %v354, 0.0
        %387 = vst [vmem:[%s216] sm:$0xff] %v355
        %388 = vst [vmem:[%s216 + $0x8] sm:$0xff] %v356
        %389 = vst [vmem:[%s216 + $0x10] sm:$0xff] %v357
        %390 = vst [vmem:[%s216 + $0x18] sm:$0xff] %v358
        %391 = vst [vmem:[%s216 + $0x20] sm:$0xff] %v359
        %392 = vst [vmem:[%s216 + $0x28] sm:$0xff] %v360
        %393 = vst [vmem:[%s216 + $0x30] sm:$0xff] %v361
        %394 = vst [vmem:[%s216 + $0x38] sm:$0xff] %v362
        %395 = vst [vmem:[%s216 + $0x40] sm:$0xff] %v363
        %396 = vst [vmem:[%s216 + $0x48] sm:$0xff] %v364
        %397 = vst [vmem:[%s216 + $0x50] sm:$0xff] %v365
        %398 = vst [vmem:[%s216 + $0x58] sm:$0xff] %v366
        %399 = vst [vmem:[%s216 + $0x60] sm:$0xff] %v367
        %400 = vst [vmem:[%s216 + $0x68] sm:$0xff] %v368
        %401 = vst [vmem:[%s216 + $0x70] sm:$0xff] %v369
        %402 = vst [vmem:[%s216 + $0x78] sm:$0xff] %v370
        %403 = vst [vmem:[%s216 + $0x80] sm:$0xff] %v371
        %404 = vst [vmem:[%s216 + $0x88] sm:$0xff] %v372
        %405 = vst [vmem:[%s216 + $0x90] sm:$0xff] %v373
        %406 = vst [vmem:[%s216 + $0x98] sm:$0xff] %v374
        %407 = vst [vmem:[%s216 + $0xa0] sm:$0xff] %v375
        %408 = vst [vmem:[%s216 + $0xa8] sm:$0xff] %v376
        %409 = vst [vmem:[%s216 + $0xb0] sm:$0xff] %v377
        %410 = vst [vmem:[%s216 + $0xb8] sm:$0xff] %v378
        %411 = vst [vmem:[%s216 + $0xc0] sm:$0xff] %v379
        %412 = vst [vmem:[%s216 + $0xc8] sm:$0xff] %v380
        %413 = vst [vmem:[%s216 + $0xd0] sm:$0xff] %v381
        %414 = vst [vmem:[%s216 + $0xd8] sm:$0xff] %v382
        %415 = vst [vmem:[%s216 + $0xe0] sm:$0xff] %v383
        %416 = vst [vmem:[%s216 + $0xe8] sm:$0xff] %v384
        %417 = vst [vmem:[%s216 + $0xf0] sm:$0xff] %v385
        %418 = vst [vmem:[%s216 + $0xf8] sm:$0xff] %v386
        %s419 = sand.u32 %s116, 1
        %s420 = sand.u32 %s116, 1
        %s421 = smul.addr %s420, 256
        %s422 = scalar_lea.vmem [#allocation2], %s421
        // Predicated region
        $region33: #{conv_block_pallas.3} parent=31 // pred_check
          %p423 = pneg %p126
        $region34: #{conv_block_pallas.3} parent=31 // pred_check_branch
          %425 = sbr.rel (%p423) target = $region36
        $region35: #{conv_block_pallas.3} parent=31 // pred_region
          %s426 = smul.u32 32, %s18
          %s427 = ssub.s32 72, %s426
          %p428 = scmp.lt.s32.totalorder %s427, 32
          %s429 = scalar_select %p428, %s427, 32
          %s430 = smul.u32 128, %s429
          %p431 = scmp.ne.s32.totalorder 0, %s430
          %s432 = sadd.s32 %s19, %s426
          %s433 = smul.addr %s432, 8
          %s434 = scalar_lea.vmem %s3, %s433
          // Predicated region
          $region37: #{conv_block_pallas.3} parent=35 // pred_check
            %p435 = pneg %p431
          $region38: #{conv_block_pallas.3} parent=35 // pred_check_branch
            %437 = sbr.rel (%p435) target = $region40
          $region39: #{conv_block_pallas.3} parent=35 // pred_region
            // Predicated region
            $region41: #{conv_block_pallas.3} parent=39 // pred_check
              _
            $region42: #{conv_block_pallas.3} parent=39 // pred_check_branch
              %439 = sbr.rel (0) target = $region44
            $region43: #{conv_block_pallas.3} parent=39 // pred_region
              // Predicated region
              $region63: #{conv_block_pallas.3} parent=43 // pred_check
                _
              $region64: #{conv_block_pallas.3} parent=43 // pred_check_branch
                %550 = sbr.rel (0) target = $region66
              $region65: #{conv_block_pallas.3} parent=43 // pred_region
                %s551 = sshrl.u32 %s429, 5
                // While loop
                $region67: #{conv_block_pallas.3} parent=65 // loop_pre_header
                  _
                $region68: #{conv_block_pallas.3} parent=65 // loop_header
                  %s553 = sphi 0, %s555
                  %p554 = scmp.ge.s32.totalorder %s553, %s551
                  %s558 = sphi 0, %s627
                  %s559 = sphi %s422, %s630
                  %s560 = sphi %s434, %s631
                $region69: #{conv_block_pallas.3} parent=65 // loop_header_branch
                  %557 = sbr.rel (%p554) target = $region73
                $region70: #{conv_block_pallas.3} parent=65 // loop_body
                  %v561 = vld [vmem:[%s559] sm:$0xff]
                  %562 = vst [vmem:[%s560] sm:$0xff] %v561
                  %v563 = vld [vmem:[%s559 + $0x8] sm:$0xff]
                  %564 = vst [vmem:[%s560 + $0x8] sm:$0xff] %v563
                  %v565 = vld [vmem:[%s559 + $0x10] sm:$0xff]
                  %566 = vst [vmem:[%s560 + $0x10] sm:$0xff] %v565
                  %v567 = vld [vmem:[%s559 + $0x18] sm:$0xff]
                  %568 = vst [vmem:[%s560 + $0x18] sm:$0xff] %v567
                  %v569 = vld [vmem:[%s559 + $0x20] sm:$0xff]
                  %570 = vst [vmem:[%s560 + $0x20] sm:$0xff] %v569
                  %v571 = vld [vmem:[%s559 + $0x28] sm:$0xff]
                  %572 = vst [vmem:[%s560 + $0x28] sm:$0xff] %v571
                  %v573 = vld [vmem:[%s559 + $0x30] sm:$0xff]
                  %574 = vst [vmem:[%s560 + $0x30] sm:$0xff] %v573
                  %v575 = vld [vmem:[%s559 + $0x38] sm:$0xff]
                  %576 = vst [vmem:[%s560 + $0x38] sm:$0xff] %v575
                  %v577 = vld [vmem:[%s559 + $0x40] sm:$0xff]
                  %578 = vst [vmem:[%s560 + $0x40] sm:$0xff] %v577
                  %v579 = vld [vmem:[%s559 + $0x48] sm:$0xff]
                  %580 = vst [vmem:[%s560 + $0x48] sm:$0xff] %v579
                  %v581 = vld [vmem:[%s559 + $0x50] sm:$0xff]
                  %582 = vst [vmem:[%s560 + $0x50] sm:$0xff] %v581
                  %v583 = vld [vmem:[%s559 + $0x58] sm:$0xff]
                  %584 = vst [vmem:[%s560 + $0x58] sm:$0xff] %v583
                  %v585 = vld [vmem:[%s559 + $0x60] sm:$0xff]
                  %586 = vst [vmem:[%s560 + $0x60] sm:$0xff] %v585
                  %v587 = vld [vmem:[%s559 + $0x68] sm:$0xff]
                  %588 = vst [vmem:[%s560 + $0x68] sm:$0xff] %v587
                  %v589 = vld [vmem:[%s559 + $0x70] sm:$0xff]
                  %590 = vst [vmem:[%s560 + $0x70] sm:$0xff] %v589
                  %v591 = vld [vmem:[%s559 + $0x78] sm:$0xff]
                  %592 = vst [vmem:[%s560 + $0x78] sm:$0xff] %v591
                  %v593 = vld [vmem:[%s559 + $0x80] sm:$0xff]
                  %594 = vst [vmem:[%s560 + $0x80] sm:$0xff] %v593
                  %v595 = vld [vmem:[%s559 + $0x88] sm:$0xff]
                  %596 = vst [vmem:[%s560 + $0x88] sm:$0xff] %v595
                  %v597 = vld [vmem:[%s559 + $0x90] sm:$0xff]
                  %598 = vst [vmem:[%s560 + $0x90] sm:$0xff] %v597
                  %v599 = vld [vmem:[%s559 + $0x98] sm:$0xff]
                  %600 = vst [vmem:[%s560 + $0x98] sm:$0xff] %v599
                  %v601 = vld [vmem:[%s559 + $0xa0] sm:$0xff]
                  %602 = vst [vmem:[%s560 + $0xa0] sm:$0xff] %v601
                  %v603 = vld [vmem:[%s559 + $0xa8] sm:$0xff]
                  %604 = vst [vmem:[%s560 + $0xa8] sm:$0xff] %v603
                  %v605 = vld [vmem:[%s559 + $0xb0] sm:$0xff]
                  %606 = vst [vmem:[%s560 + $0xb0] sm:$0xff] %v605
                  %v607 = vld [vmem:[%s559 + $0xb8] sm:$0xff]
                  %608 = vst [vmem:[%s560 + $0xb8] sm:$0xff] %v607
                  %v609 = vld [vmem:[%s559 + $0xc0] sm:$0xff]
                  %610 = vst [vmem:[%s560 + $0xc0] sm:$0xff] %v609
                  %v611 = vld [vmem:[%s559 + $0xc8] sm:$0xff]
                  %612 = vst [vmem:[%s560 + $0xc8] sm:$0xff] %v611
                  %v613 = vld [vmem:[%s559 + $0xd0] sm:$0xff]
                  %614 = vst [vmem:[%s560 + $0xd0] sm:$0xff] %v613
                  %v615 = vld [vmem:[%s559 + $0xd8] sm:$0xff]
                  %616 = vst [vmem:[%s560 + $0xd8] sm:$0xff] %v615
                  %v617 = vld [vmem:[%s559 + $0xe0] sm:$0xff]
                  %618 = vst [vmem:[%s560 + $0xe0] sm:$0xff] %v617
                  %v619 = vld [vmem:[%s559 + $0xe8] sm:$0xff]
                  %620 = vst [vmem:[%s560 + $0xe8] sm:$0xff] %v619
                  %v621 = vld [vmem:[%s559 + $0xf0] sm:$0xff]
                  %622 = vst [vmem:[%s560 + $0xf0] sm:$0xff] %v621
                  %v623 = vld [vmem:[%s559 + $0xf8] sm:$0xff]
                  %624 = vst [vmem:[%s560 + $0xf8] sm:$0xff] %v623
                  %s625 = sadd.s32 1, %s558
                  %p626 = scmp.ge.s32.totalorder %s625, %s551
                  %s627 = scalar_select %p626, 0, %s625
                  %s628 = smul.u32 %s627, 256
                  %s629 = smul.u32 %s627, 256
                  %s630 = scalar_lea.vmem %s422, %s628 [#allocation2]
                  %s631 = scalar_lea.vmem %s434, %s629
                $region71: #{conv_block_pallas.3} parent=65 // loop_footer
                  %s555 = sadd.s32 %s553, 1
                $region72: #{conv_block_pallas.3} parent=65 // loop_footer_branch
                  %552 = sbr.rel target = $region68
                $region73: #{conv_block_pallas.3} parent=65 // loop_exit
                  _
                %s632 = sshrl.u32 %s429, 5
                %s633 = sand.u32 %s429, 31
                %s634 = smul.u32 %s632, 32
                %s635 = smul.u32 8, %s634
                %s636 = scalar_lea.vmem %s422, %s635 [#allocation2]
                %s637 = smul.u32 8, %s634
                %s638 = scalar_lea.vmem %s434, %s637
                // While loop
                $region74: #{conv_block_pallas.3} parent=65 // loop_pre_header
                  _
                $region75: #{conv_block_pallas.3} parent=65 // loop_header
                  %s640 = sphi 0, %s642
                  %p641 = scmp.ge.s32.totalorder %s640, %s633
                  %s645 = sphi 0, %s652
                  %s646 = sphi %s636, %s655
                  %s647 = sphi %s638, %s656
                $region76: #{conv_block_pallas.3} parent=65 // loop_header_branch
                  %644 = sbr.rel (%p641) target = $region80
                $region77: #{conv_block_pallas.3} parent=65 // loop_body
                  %v648 = vld [vmem:[%s646] sm:$0xff]
                  %649 = vst [vmem:[%s647] sm:$0xff] %v648
                  %s650 = sadd.s32 1, %s645
                  %p651 = scmp.ge.s32.totalorder %s650, %s633
                  %s652 = scalar_select %p651, 0, %s650
                  %s653 = smul.u32 %s652, 8
                  %s654 = smul.u32 %s652, 8
                  %s655 = scalar_lea.vmem %s636, %s653 [#allocation2]
                  %s656 = scalar_lea.vmem %s638, %s654
                $region78: #{conv_block_pallas.3} parent=65 // loop_footer
                  %s642 = sadd.s32 %s640, 1
                $region79: #{conv_block_pallas.3} parent=65 // loop_footer_branch
                  %639 = sbr.rel target = $region75
                $region80: #{conv_block_pallas.3} parent=65 // loop_exit
                  _
              $region66: #{conv_block_pallas.3} parent=43 // pred_fallthru
                _
              // Predicated region
              $region81: #{conv_block_pallas.3} parent=43 // pred_check
                _
              $region82: #{conv_block_pallas.3} parent=43 // pred_check_branch
                %658 = sbr.rel target = $region84
              $region83: #{conv_block_pallas.3} parent=43 // pred_region
                _
              $region84: #{conv_block_pallas.3} parent=43 // pred_fallthru
                _
            $region44: #{conv_block_pallas.3} parent=39 // pred_fallthru
              _
            // Predicated region
            $region45: #{conv_block_pallas.3} parent=39 // pred_check
              _
            $region46: #{conv_block_pallas.3} parent=39 // pred_check_branch
              %441 = sbr.rel target = $region48
            $region47: #{conv_block_pallas.3} parent=39 // pred_region
              %s443 = sshrl.u32 %s429, 5
              // While loop
              $region49: #{conv_block_pallas.3} parent=47 // loop_pre_header
                _
              $region50: #{conv_block_pallas.3} parent=47 // loop_header
                %s445 = sphi 0, %s447
                %p446 = scmp.ge.s32.totalorder %s445, %s443
                %s450 = sphi 0, %s519
                %s451 = sphi %s422, %s522
                %s452 = sphi %s434, %s523
              $region51: #{conv_block_pallas.3} parent=47 // loop_header_branch
                %449 = sbr.rel (%p446) target = $region55
              $region52: #{conv_block_pallas.3} parent=47 // loop_body
                %v453 = vld [vmem:[%s451] sm:$0xff]
                %454 = vst [vmem:[%s452] sm:$0xff] %v453
                %v455 = vld [vmem:[%s451 + $0x8] sm:$0xff]
                %456 = vst [vmem:[%s452 + $0x8] sm:$0xff] %v455
                %v457 = vld [vmem:[%s451 + $0x10] sm:$0xff]
                %458 = vst [vmem:[%s452 + $0x10] sm:$0xff] %v457
                %v459 = vld [vmem:[%s451 + $0x18] sm:$0xff]
                %460 = vst [vmem:[%s452 + $0x18] sm:$0xff] %v459
                %v461 = vld [vmem:[%s451 + $0x20] sm:$0xff]
                %462 = vst [vmem:[%s452 + $0x20] sm:$0xff] %v461
                %v463 = vld [vmem:[%s451 + $0x28] sm:$0xff]
                %464 = vst [vmem:[%s452 + $0x28] sm:$0xff] %v463
                %v465 = vld [vmem:[%s451 + $0x30] sm:$0xff]
                %466 = vst [vmem:[%s452 + $0x30] sm:$0xff] %v465
                %v467 = vld [vmem:[%s451 + $0x38] sm:$0xff]
                %468 = vst [vmem:[%s452 + $0x38] sm:$0xff] %v467
                %v469 = vld [vmem:[%s451 + $0x40] sm:$0xff]
                %470 = vst [vmem:[%s452 + $0x40] sm:$0xff] %v469
                %v471 = vld [vmem:[%s451 + $0x48] sm:$0xff]
                %472 = vst [vmem:[%s452 + $0x48] sm:$0xff] %v471
                %v473 = vld [vmem:[%s451 + $0x50] sm:$0xff]
                %474 = vst [vmem:[%s452 + $0x50] sm:$0xff] %v473
                %v475 = vld [vmem:[%s451 + $0x58] sm:$0xff]
                %476 = vst [vmem:[%s452 + $0x58] sm:$0xff] %v475
                %v477 = vld [vmem:[%s451 + $0x60] sm:$0xff]
                %478 = vst [vmem:[%s452 + $0x60] sm:$0xff] %v477
                %v479 = vld [vmem:[%s451 + $0x68] sm:$0xff]
                %480 = vst [vmem:[%s452 + $0x68] sm:$0xff] %v479
                %v481 = vld [vmem:[%s451 + $0x70] sm:$0xff]
                %482 = vst [vmem:[%s452 + $0x70] sm:$0xff] %v481
                %v483 = vld [vmem:[%s451 + $0x78] sm:$0xff]
                %484 = vst [vmem:[%s452 + $0x78] sm:$0xff] %v483
                %v485 = vld [vmem:[%s451 + $0x80] sm:$0xff]
                %486 = vst [vmem:[%s452 + $0x80] sm:$0xff] %v485
                %v487 = vld [vmem:[%s451 + $0x88] sm:$0xff]
                %488 = vst [vmem:[%s452 + $0x88] sm:$0xff] %v487
                %v489 = vld [vmem:[%s451 + $0x90] sm:$0xff]
                %490 = vst [vmem:[%s452 + $0x90] sm:$0xff] %v489
                %v491 = vld [vmem:[%s451 + $0x98] sm:$0xff]
                %492 = vst [vmem:[%s452 + $0x98] sm:$0xff] %v491
                %v493 = vld [vmem:[%s451 + $0xa0] sm:$0xff]
                %494 = vst [vmem:[%s452 + $0xa0] sm:$0xff] %v493
                %v495 = vld [vmem:[%s451 + $0xa8] sm:$0xff]
                %496 = vst [vmem:[%s452 + $0xa8] sm:$0xff] %v495
                %v497 = vld [vmem:[%s451 + $0xb0] sm:$0xff]
                %498 = vst [vmem:[%s452 + $0xb0] sm:$0xff] %v497
                %v499 = vld [vmem:[%s451 + $0xb8] sm:$0xff]
                %500 = vst [vmem:[%s452 + $0xb8] sm:$0xff] %v499
                %v501 = vld [vmem:[%s451 + $0xc0] sm:$0xff]
                %502 = vst [vmem:[%s452 + $0xc0] sm:$0xff] %v501
                %v503 = vld [vmem:[%s451 + $0xc8] sm:$0xff]
                %504 = vst [vmem:[%s452 + $0xc8] sm:$0xff] %v503
                %v505 = vld [vmem:[%s451 + $0xd0] sm:$0xff]
                %506 = vst [vmem:[%s452 + $0xd0] sm:$0xff] %v505
                %v507 = vld [vmem:[%s451 + $0xd8] sm:$0xff]
                %508 = vst [vmem:[%s452 + $0xd8] sm:$0xff] %v507
                %v509 = vld [vmem:[%s451 + $0xe0] sm:$0xff]
                %510 = vst [vmem:[%s452 + $0xe0] sm:$0xff] %v509
                %v511 = vld [vmem:[%s451 + $0xe8] sm:$0xff]
                %512 = vst [vmem:[%s452 + $0xe8] sm:$0xff] %v511
                %v513 = vld [vmem:[%s451 + $0xf0] sm:$0xff]
                %514 = vst [vmem:[%s452 + $0xf0] sm:$0xff] %v513
                %v515 = vld [vmem:[%s451 + $0xf8] sm:$0xff]
                %516 = vst [vmem:[%s452 + $0xf8] sm:$0xff] %v515
                %s517 = sadd.s32 1, %s450
                %p518 = scmp.ge.s32.totalorder %s517, %s443
                %s519 = scalar_select %p518, 0, %s517
                %s520 = smul.u32 %s519, 256
                %s521 = smul.u32 %s519, 256
                %s522 = scalar_lea.vmem %s422, %s520 [#allocation2]
                %s523 = scalar_lea.vmem %s434, %s521
              $region53: #{conv_block_pallas.3} parent=47 // loop_footer
                %s447 = sadd.s32 %s445, 1
              $region54: #{conv_block_pallas.3} parent=47 // loop_footer_branch
                %444 = sbr.rel target = $region50
              $region55: #{conv_block_pallas.3} parent=47 // loop_exit
                _
              %s524 = sshrl.u32 %s429, 5
              %s525 = sand.u32 %s429, 31
              %s526 = smul.u32 %s524, 32
              %s527 = smul.u32 8, %s526
              %s528 = scalar_lea.vmem %s422, %s527 [#allocation2]
              %s529 = smul.u32 8, %s526
              %s530 = scalar_lea.vmem %s434, %s529
              // While loop
              $region56: #{conv_block_pallas.3} parent=47 // loop_pre_header
                _
              $region57: #{conv_block_pallas.3} parent=47 // loop_header
                %s532 = sphi 0, %s534
                %p533 = scmp.ge.s32.totalorder %s532, %s525
                %s537 = sphi 0, %s544
                %s538 = sphi %s528, %s547
                %s539 = sphi %s530, %s548
              $region58: #{conv_block_pallas.3} parent=47 // loop_header_branch
                %536 = sbr.rel (%p533) target = $region62
              $region59: #{conv_block_pallas.3} parent=47 // loop_body
                %v540 = vld [vmem:[%s538] sm:$0xff]
                %541 = vst [vmem:[%s539] sm:$0xff] %v540
                %s542 = sadd.s32 1, %s537
                %p543 = scmp.ge.s32.totalorder %s542, %s525
                %s544 = scalar_select %p543, 0, %s542
                %s545 = smul.u32 %s544, 8
                %s546 = smul.u32 %s544, 8
                %s547 = scalar_lea.vmem %s528, %s545 [#allocation2]
                %s548 = scalar_lea.vmem %s530, %s546
              $region60: #{conv_block_pallas.3} parent=47 // loop_footer
                %s534 = sadd.s32 %s532, 1
              $region61: #{conv_block_pallas.3} parent=47 // loop_footer_branch
                %531 = sbr.rel target = $region57
              $region62: #{conv_block_pallas.3} parent=47 // loop_exit
                _
            $region48: #{conv_block_pallas.3} parent=39 // pred_fallthru
              _
          $region40: #{conv_block_pallas.3} parent=35 // pred_fallthru
            _
          %659 = vnop
        $region36: #{conv_block_pallas.3} parent=31 // pred_fallthru
          _
      $region32: #{conv_block_pallas.3} parent=5 // pred_fallthru
        _
      %p660 = scmp.le.s32.totalorder 2, %s9
      // Predicated region
      $region85: #{conv_block_pallas.3} parent=5 // pred_check
        %p661 = pneg %p660
      $region86: #{conv_block_pallas.3} parent=5 // pred_check_branch
        %663 = sbr.rel (%p661) target = $region88
      $region87: #{conv_block_pallas.3} parent=5 // pred_region
        %s664 = ssub.s32 %s9, 2
        // Predicated region
        $region89: #{conv_block_pallas.3} parent=87 // pred_check
          %p665 = pneg %p132
        $region90: #{conv_block_pallas.3} parent=87 // pred_check_branch
          %667 = sbr.rel (%p665) target = $region92
        $region91: #{conv_block_pallas.3} parent=87 // pred_region
          %s668 = sand.u32 %s117, 1
          %s669 = sand.u32 %s117, 1
          %s670 = smul.addr %s669, 256
          %s671 = scalar_lea.vmem [#allocation2], %s670
        $region92: #{conv_block_pallas.3} parent=87 // pred_fallthru
          _
      $region88: #{conv_block_pallas.3} parent=5 // pred_fallthru
        _
    $region6: #{conv_block_pallas.3} parent=1 // loop_footer
      %s13 = sadd.s32 1, %s9
    $region7: #{conv_block_pallas.3} parent=1 // loop_footer_branch
      %8 = sbr.rel target = $region3
    $region8: #{conv_block_pallas.3} parent=1 // loop_exit
      _

// kernel: conv_block_pallas.2
$region0: #{conv_block_pallas.2}
  #allocation0 [shape = 'u32[]', space=smem, size = 0x4, offset = 0x4, fixed_abs, tag = 'smem constant byte address 0x4 - core index']
  #allocation1 [shape = 'u32[144,128]{1,0:T(1,128)}', space=vmem, size = 0x12000, scoped, tag = 'internal scratch']
  %s0 = inlined_call_operand.vmem [shape: bf16[2,342,4], index: 0, kind: input, shape index: {}]
  %s1 = inlined_call_operand.vmem [shape: bf16[36,128], index: 1, kind: input, shape index: {}]
  %s2 = inlined_call_operand.vmem [shape: f32[2,288,128], index: 2, kind: output, shape index: {0}]
  %s3 = inlined_call_operand.vmem [shape: f32[2,1,128], index: 3, kind: output, shape index: {1}]
  %s4 = inlined_call_operand.vmem [shape: f32[2,1,128], index: 4, kind: output, shape index: {2}]
  %5 = xla_tuple %s2, %s3, %s4
  %s6 = sld [smem:[#allocation0]]
  $region57: #{conv_block_pallas.2} parent=0
    _
  %s8 = ssub.s32 1, %s6
  %s9 = scalar_select 0, %s8, %s6
  loop: start=0, step=1, limit=4
  $region2: #{conv_block_pallas.2} parent=0 // loop_pre_header
    _
  $region3: #{conv_block_pallas.2} parent=0 // loop_header
    %s11 = sphi 0, %s15
    %p12 = scmp.ge.s32.totalorder %s11, 4
    %s18 = sphi 0, %s30
    %s19 = sphi 0, %s26
    %s20 = sphi 0, %s18
    %s21 = sphi 0, %s19
    %s22 = sphi 0, %s20
    %s23 = sphi 0, %s21
    %s33 = sphi 0, %s35
    %s36 = sphi 0, %s33
    %s37 = sphi 0, %s36
    %s53 = sphi 0, %s37
    %s59 = sphi 0, %s61
    %s62 = sphi 0, %s59
    %s63 = sphi 0, %s62
    %s79 = sphi 0, %s63
    %s87 = sphi 0, %s89
    %s90 = sphi 0, %s87
    %s91 = sphi 0, %s90
    %s107 = sphi 0, %s91
    %s115 = sphi 0, %s117
    %s118 = sphi 0, %s115
    %s119 = sphi 0, %s118
    %s135 = sphi 0, %s119
    %s143 = sphi 0, %s145
    %s146 = sphi 0, %s143
    %s147 = sphi 0, %s146
    %s163 = sphi 0, %s147
  $region4: #{conv_block_pallas.2} parent=0 // loop_header_branch
    %14 = sbr.rel (%p12) target = $region8
  $region5: #{conv_block_pallas.2} parent=0 // loop_body
    %s16 = ssub.s32 %s11, 1
    %s17 = ssub.s32 %s11, 2
    %s24 = sadd.s32 1, %s19
    %p25 = scmp.ge.s32.totalorder %s24, 1
    %s26 = scalar_select %p25, 0, %s24
    %s27 = sadd.s32 1, %s18
    %s28 = scalar_select %p25, %s27, %s18
    %p29 = scmp.ge.s32.totalorder %s28, 2
    %s30 = scalar_select %p29, 0, %s28
    %s31 = ssub.s32 %s18, %s30
    %p32 = scmp.eq.s32.totalorder %s31, 0
    %s34 = sadd.s32 %s33, 1
    %s35 = scalar_select %p32, %s33, %s34
    %p38 = pneg %p32
    %p39 = scmp.eq.s32.totalorder %s11, 1
    %p40 = por %p38, %p39
    %p41 = scmp.ne.s32.totalorder %s33, %s36
    %p42 = scmp.eq.s32.totalorder %s11, 0
    %p43 = por %p41, %p42
    %p44 = scmp.ne.s32.totalorder %s33, %s36
    %p45 = scmp.eq.s32.totalorder %s16, 1
    %p46 = por %p44, %p45
    %p47 = scmp.ne.s32.totalorder %s36, %s37
    %p48 = scmp.eq.s32.totalorder %s16, 0
    %p49 = por %p47, %p48
    %p50 = scmp.ne.s32.totalorder %s36, %s37
    %p51 = scmp.eq.s32.totalorder %s17, 1
    %p52 = por %p50, %p51
    %p54 = scmp.ne.s32.totalorder %s37, %s53
    %p55 = scmp.eq.s32.totalorder %s17, 0
    %p56 = por %p54, %p55
    %s57 = ssub.s32 %s19, %s26
    %p58 = scmp.eq.s32.totalorder %s57, 0
    %s60 = sadd.s32 %s59, 1
    %s61 = scalar_select %p58, %s59, %s60
    %p64 = pneg %p58
    %p65 = scmp.eq.s32.totalorder %s11, 1
    %p66 = por %p64, %p65
    %p67 = scmp.ne.s32.totalorder %s59, %s62
    %p68 = scmp.eq.s32.totalorder %s11, 0
    %p69 = por %p67, %p68
    %p70 = scmp.ne.s32.totalorder %s59, %s62
    %p71 = scmp.eq.s32.totalorder %s16, 1
    %p72 = por %p70, %p71
    %p73 = scmp.ne.s32.totalorder %s62, %s63
    %p74 = scmp.eq.s32.totalorder %s16, 0
    %p75 = por %p73, %p74
    %p76 = scmp.ne.s32.totalorder %s62, %s63
    %p77 = scmp.eq.s32.totalorder %s17, 1
    %p78 = por %p76, %p77
    %p80 = scmp.ne.s32.totalorder %s63, %s79
    %p81 = scmp.eq.s32.totalorder %s17, 0
    %p82 = por %p80, %p81
    %s83 = ssub.s32 %s18, %s30
    %s84 = ssub.s32 %s19, %s26
    %s85 = sor.u32 %s83, %s84
    %p86 = scmp.eq.s32.totalorder %s85, 0
    %s88 = sadd.s32 %s87, 1
    %s89 = scalar_select %p86, %s87, %s88
    %p92 = pneg %p86
    %p93 = scmp.eq.s32.totalorder %s11, 1
    %p94 = por %p92, %p93
    %p95 = scmp.ne.s32.totalorder %s87, %s90
    %p96 = scmp.eq.s32.totalorder %s11, 0
    %p97 = por %p95, %p96
    %p98 = scmp.ne.s32.totalorder %s87, %s90
    %p99 = scmp.eq.s32.totalorder %s16, 1
    %p100 = por %p98, %p99
    %p101 = scmp.ne.s32.totalorder %s90, %s91
    %p102 = scmp.eq.s32.totalorder %s16, 0
    %p103 = por %p101, %p102
    %p104 = scmp.ne.s32.totalorder %s90, %s91
    %p105 = scmp.eq.s32.totalorder %s17, 1
    %p106 = por %p104, %p105
    %p108 = scmp.ne.s32.totalorder %s91, %s107
    %p109 = scmp.eq.s32.totalorder %s17, 0
    %p110 = por %p108, %p109
    %s111 = ssub.s32 %s18, %s30
    %s112 = ssub.s32 %s19, %s26
    %s113 = sor.u32 %s111, %s112
    %p114 = scmp.eq.s32.totalorder %s113, 0
    %s116 = sadd.s32 %s115, 1
    %s117 = scalar_select %p114, %s115, %s116
    %p120 = pneg %p114
    %p121 = scmp.eq.s32.totalorder %s11, 1
    %p122 = por %p120, %p121
    %p123 = scmp.ne.s32.totalorder %s115, %s118
    %p124 = scmp.eq.s32.totalorder %s11, 0
    %p125 = por %p123, %p124
    %p126 = scmp.ne.s32.totalorder %s115, %s118
    %p127 = scmp.eq.s32.totalorder %s16, 1
    %p128 = por %p126, %p127
    %p129 = scmp.ne.s32.totalorder %s118, %s119
    %p130 = scmp.eq.s32.totalorder %s16, 0
    %p131 = por %p129, %p130
    %p132 = scmp.ne.s32.totalorder %s118, %s119
    %p133 = scmp.eq.s32.totalorder %s17, 1
    %p134 = por %p132, %p133
    %p136 = scmp.ne.s32.totalorder %s119, %s135
    %p137 = scmp.eq.s32.totalorder %s17, 0
    %p138 = por %p136, %p137
    %s139 = ssub.s32 %s18, %s30
    %s140 = ssub.s32 %s19, %s26
    %s141 = sor.u32 %s139, %s140
    %p142 = scmp.eq.s32.totalorder %s141, 0
    %s144 = sadd.s32 %s143, 1
    %s145 = scalar_select %p142, %s143, %s144
    %p148 = pneg %p142
    %p149 = scmp.eq.s32.totalorder %s11, 1
    %p150 = por %p148, %p149
    %p151 = scmp.ne.s32.totalorder %s143, %s146
    %p152 = scmp.eq.s32.totalorder %s11, 0
    %p153 = por %p151, %p152
    %p154 = scmp.ne.s32.totalorder %s143, %s146
    %p155 = scmp.eq.s32.totalorder %s16, 1
    %p156 = por %p154, %p155
    %p157 = scmp.ne.s32.totalorder %s146, %s147
    %p158 = scmp.eq.s32.totalorder %s16, 0
    %p159 = por %p157, %p158
    %p160 = scmp.ne.s32.totalorder %s146, %s147
    %p161 = scmp.eq.s32.totalorder %s17, 1
    %p162 = por %p160, %p161
    %p164 = scmp.ne.s32.totalorder %s147, %s163
    %p165 = scmp.eq.s32.totalorder %s17, 0
    %p166 = por %p164, %p165
    %p167 = scmp.le.s32.totalorder 1, %s11
    %p168 = scmp.lt.s32.totalorder %s11, 3
    %p169 = pnand %p167, %p168
    %p170 = pneg %p169
    // Predicated region
    $region9: #{conv_block_pallas.2} parent=5 // pred_check
      _
    $region10: #{conv_block_pallas.2} parent=5 // pred_check_branch
      %172 = sbr.rel (%p169) target = $region12
    $region11: #{conv_block_pallas.2} parent=5 // pred_region
      %s173 = ssub.s32 %s11, 1
      // Predicated region
      $region13: #{conv_block_pallas.2} parent=11 // pred_check
        %p174 = pneg %p75
      $region14: #{conv_block_pallas.2} parent=11 // pred_check_branch
        %176 = sbr.rel (%p174) target = $region16
      $region15: #{conv_block_pallas.2} parent=11 // pred_region
        %p177 = scmp.lt.s32.totalorder %s21, 0
        %s178 = scalar_select %p177, %s21, 0
        %s179 = smul.addr %s178, 4
        %s180 = scalar_lea.vmem %s1, %s179
      $region16: #{conv_block_pallas.2} parent=11 // pred_fallthru
        _
    $region12: #{conv_block_pallas.2} parent=5 // pred_fallthru
      _
    %p181 = scmp.lt.s32.totalorder %s11, 2
    // Predicated region
    $region17: #{conv_block_pallas.2} parent=5 // pred_check
      %p182 = pneg %p181
    $region18: #{conv_block_pallas.2} parent=5 // pred_check_branch
      %184 = sbr.rel (%p182) target = $region20
    $region19: #{conv_block_pallas.2} parent=5 // pred_region
      // Predicated region
      $region21: #{conv_block_pallas.2} parent=19 // pred_check
        %p185 = pneg %p43
      $region22: #{conv_block_pallas.2} parent=19 // pred_check_branch
        %187 = sbr.rel (%p185) target = $region24
      $region23: #{conv_block_pallas.2} parent=19 // pred_region
        %p188 = scmp.lt.s32.totalorder %s18, 1
        %s189 = scalar_select %p188, %s18, 1
        %s190 = smul.addr %s189, 43
        %s191 = smul.addr %s190, 4
        %s192 = scalar_lea.vmem %s0, %s191
      $region24: #{conv_block_pallas.2} parent=19 // pred_fallthru
        _
    $region20: #{conv_block_pallas.2} parent=5 // pred_fallthru
      _
    %p193 = scmp.le.s32.totalorder 1, %s11
    %p194 = scmp.lt.s32.totalorder %s11, 3
    %p195 = pnand %p193, %p194
    %p196 = pneg %p195
    // Predicated region
    $region25: #{conv_block_pallas.2} parent=5 // pred_check
      _
    $region26: #{conv_block_pallas.2} parent=5 // pred_check_branch
      %198 = sbr.rel (%p195) target = $region28
    $region27: #{conv_block_pallas.2} parent=5 // pred_region
      %s199 = ssub.s32 %s11, 1
      %p200 = scmp.lt.s32.totalorder %s20, 1
      %s201 = scalar_select %p200, %s20, 1
      %s202 = smul.addr %s201, 43
      %s203 = smul.addr %s202, 4
      %s204 = scalar_lea.vmem %s0, %s203
      %p205 = pneg %p49
      %p206 = pneg %p46
      %p207 = scmp.lt.s32.totalorder %s21, 0
      %s208 = scalar_select %p207, %s21, 0
      %s209 = smul.addr %s208, 4
      %s210 = scalar_lea.vmem %s1, %s209
      %p211 = pneg %p75
      %p212 = pneg %p72
      %p213 = pneg %p103
      %p214 = pneg %p100
      %p215 = scmp.lt.s32.totalorder %s20, 1
      %s216 = scalar_select %p215, %s20, 1
      %p217 = scmp.lt.s32.totalorder %s21, 0
      %s218 = scalar_select %p217, %s21, 0
      %s219 = smul.addr %s216, 36
      %s220 = sadd.s32 %s218, %s219
      %s221 = smul.addr %s220, 8
      %s222 = scalar_lea.vmem %s2, %s221
      %p223 = pneg %p131
      %p224 = pneg %p128
      %p225 = scmp.lt.s32.totalorder %s20, 1
      %s226 = scalar_select %p225, %s20, 1
      %p227 = scmp.lt.s32.totalorder %s21, 0
      %s228 = scalar_select %p227, %s21, 0
      %s229 = sadd.s32 %s228, %s226
      %s230 = scalar_lea.vmem %s3, %s229
      %p231 = pneg %p159
      %p232 = pneg %p156
      %p233 = scmp.lt.s32.totalorder %s20, 1
      %s234 = scalar_select %p233, %s20, 1
      %p235 = scmp.lt.s32.totalorder %s21, 0
      %s236 = scalar_select %p235, %s21, 0
      %s237 = sadd.s32 %s236, %s234
      %s238 = scalar_lea.vmem %s4, %s237
      %p239 = scmp.lt.s32.totalorder %s20, 1
      %s240 = scalar_select %p239, %s20, 1
      %s241 = smul.addr %s240, 43
      %s242 = smul.addr %s241, 4
      %s243 = scalar_lea.vmem %s0, %s242
      %p244 = scmp.lt.s32.totalorder %s21, 0
      %s245 = scalar_select %p244, %s21, 0
      %s246 = smul.addr %s245, 4
      %s247 = scalar_lea.vmem %s1, %s246
      %p248 = scmp.lt.s32.totalorder %s20, 1
      %s249 = scalar_select %p248, %s20, 1
      %p250 = scmp.lt.s32.totalorder %s21, 0
      %s251 = scalar_select %p250, %s21, 0
      %s252 = smul.addr %s249, 36
      %s253 = sadd.s32 %s251, %s252
      %s254 = smul.addr %s253, 8
      %s255 = scalar_lea.vmem %s2, %s254
      %p256 = scmp.lt.s32.totalorder %s20, 1
      %s257 = scalar_select %p256, %s20, 1
      %p258 = scmp.lt.s32.totalorder %s21, 0
      %s259 = scalar_select %p258, %s21, 0
      %s260 = sadd.s32 %s259, %s257
      %s261 = scalar_lea.vmem %s3, %s260
      %p262 = scmp.lt.s32.totalorder %s20, 1
      %s263 = scalar_select %p262, %s20, 1
      %p264 = scmp.lt.s32.totalorder %s21, 0
      %s265 = scalar_select %p264, %s21, 0
      %s266 = sadd.s32 %s265, %s263
      %s267 = scalar_lea.vmem %s4, %s266
      %v269 = vld [vmem:[%s243] sm:$0xf]
      %v270 = vld [vmem:[%s243 + $0x4] sm:$0xf]
      %v271 = vld [vmem:[%s243 + $0x8] sm:$0xf]
      %v272 = vld [vmem:[%s243 + $0xc] sm:$0xf]
      %v273 = vld [vmem:[%s243 + $0x10] sm:$0xf]
      %v274 = vld [vmem:[%s243 + $0x14] sm:$0xf]
      %v275 = vld [vmem:[%s243 + $0x18] sm:$0xf]
      %v276 = vld [vmem:[%s243 + $0x1c] sm:$0xf]
      %v277 = vld [vmem:[%s243 + $0x20] sm:$0xf]
      %v278 = vld [vmem:[%s243 + $0x24] sm:$0xf]
      %v279 = vld [vmem:[%s243 + $0x28] sm:$0xf]
      %v280 = vld [vmem:[%s243 + $0x2c] sm:$0xf]
      %v281 = vld [vmem:[%s243 + $0x30] sm:$0xf]
      %v282 = vld [vmem:[%s243 + $0x34] sm:$0xf]
      %v283 = vld [vmem:[%s243 + $0x38] sm:$0xf]
      %v284 = vld [vmem:[%s243 + $0x3c] sm:$0xf]
      %v285 = vld [vmem:[%s243 + $0x40] sm:$0xf]
      %v286 = vld [vmem:[%s243 + $0x44] sm:$0xf]
      %v287 = vld [vmem:[%s243 + $0x48] sm:$0xf]
      %v288 = vld [vmem:[%s243 + $0x4c] sm:$0xf]
      %v289 = vld [vmem:[%s243 + $0x50] sm:$0xf]
      %v290 = vld [vmem:[%s243 + $0x54] sm:$0xf]
      %v291 = vld [vmem:[%s243 + $0x58] sm:$0xf]
      %v292 = vld [vmem:[%s243 + $0x5c] sm:$0xf]
      %v293 = vld [vmem:[%s243 + $0x60] sm:$0xf]
      %v294 = vld [vmem:[%s243 + $0x64] sm:$0xf]
      %v295 = vld [vmem:[%s243 + $0x68] sm:$0xf]
      %v296 = vld [vmem:[%s243 + $0x6c] sm:$0xf]
      %v297 = vld [vmem:[%s243 + $0x70] sm:$0xf]
      %v298 = vld [vmem:[%s243 + $0x74] sm:$0xf]
      %v299 = vld [vmem:[%s243 + $0x78] sm:$0xf]
      %v300 = vld [vmem:[%s243 + $0x7c] sm:$0xf]
      %v301 = vld [vmem:[%s243 + $0x80] sm:$0xf]
      %v302 = vld [vmem:[%s243 + $0x84] sm:$0xf]
      %v303 = vld [vmem:[%s243 + $0x88] sm:$0xf]
      %v304 = vld [vmem:[%s243 + $0x8c] sm:$0xf]
      %v305 = vld [vmem:[%s247] sm:$0x3]
      %v306 = vld [vmem:[%s243 + $0x90] sm:$0x1]
      %v307 = vld [vmem:[%s247] sm:$0xc]
      %v345 = vunpack.c.l.b16 %v269
      %v346 = vunpack.c.l.b16 %v270
      %v347 = vunpack.c.l.b16 %v271
      %v348 = vunpack.c.l.b16 %v272
      %v349 = vunpack.c.l.b16 %v273
      %v350 = vunpack.c.l.b16 %v274
      %v351 = vunpack.c.l.b16 %v275
      %v352 = vunpack.c.l.b16 %v276
      %v353 = vunpack.c.l.b16 %v277
      %v354 = vunpack.c.l.b16 %v278
      %v355 = vunpack.c.l.b16 %v279
      %v356 = vunpack.c.l.b16 %v280
      %v357 = vunpack.c.l.b16 %v281
      %v358 = vunpack.c.l.b16 %v282
      %v359 = vunpack.c.l.b16 %v283
      %v360 = vunpack.c.l.b16 %v284
      %v361 = vunpack.c.l.b16 %v285
      %v362 = vunpack.c.l.b16 %v286
      %v363 = vunpack.c.l.b16 %v287
      %v364 = vunpack.c.l.b16 %v288
      %v365 = vunpack.c.l.b16 %v289
      %v366 = vunpack.c.l.b16 %v290
      %v367 = vunpack.c.l.b16 %v291
      %v368 = vunpack.c.l.b16 %v292
      %v369 = vunpack.c.l.b16 %v293
      %v370 = vunpack.c.l.b16 %v294
      %v371 = vunpack.c.l.b16 %v295
      %v372 = vunpack.c.l.b16 %v296
      %v373 = vunpack.c.l.b16 %v297
      %v374 = vunpack.c.l.b16 %v298
      %v375 = vunpack.c.l.b16 %v299
      %v376 = vunpack.c.l.b16 %v300
      %v377 = vunpack.c.l.b16 %v301
      %v378 = vunpack.c.l.b16 %v302
      %v379 = vunpack.c.l.b16 %v303
      %v380 = vunpack.c.l.b16 %v304
      %v381 = vunpack.c.l.b16 %v306
      %v382 = vpack.c.b16 %v346, %v345
      %v383 = vpack.c.b16 %v348, %v347
      %v384 = vpack.c.b16 %v350, %v349
      %v385 = vpack.c.b16 %v352, %v351
      %v386 = vpack.c.b16 %v354, %v353
      %v387 = vpack.c.b16 %v356, %v355
      %v388 = vpack.c.b16 %v358, %v357
      %v389 = vpack.c.b16 %v360, %v359
      %v390 = vpack.c.b16 %v362, %v361
      %v391 = vpack.c.b16 %v364, %v363
      %v392 = vpack.c.b16 %v366, %v365
      %v393 = vpack.c.b16 %v368, %v367
      %v394 = vpack.c.b16 %v370, %v369
      %v395 = vpack.c.b16 %v372, %v371
      %v396 = vpack.c.b16 %v374, %v373
      %v397 = vpack.c.b16 %v376, %v375
      %v398 = vpack.c.b16 %v378, %v377
      %v399 = vpack.c.b16 %v380, %v379
      %v400 = vpack.c.b16 %v381, %v381
      %vm401 = vsmask.f32 7424
      %v403 = vshrl.u32 %v382, 16
      %v405 = vshll.u32 %v382, 16
      %v407 = vrot.slane %v405, 1
      %v408 = vor.u32 %v403, %v407
      %v410 = vshll.u32 %v383, 16
      %v412 = vrot.slane %v410, 1
      %v413 = vsel %vm401, %v408, %v412
      %v414 = vshrl.u32 %v383, 16
      %v416 = vor.u32 %v414, %v412
      %v418 = vshll.u32 %v384, 16
      %v420 = vrot.slane %v418, 1
      %v421 = vsel %vm401, %v416, %v420
      %v422 = vshrl.u32 %v384, 16
      %v424 = vor.u32 %v422, %v420
      %v426 = vshll.u32 %v385, 16
      %v428 = vrot.slane %v426, 1
      %v429 = vsel %vm401, %v424, %v428
      %v430 = vshrl.u32 %v385, 16
      %v432 = vor.u32 %v430, %v428
      %v434 = vshll.u32 %v386, 16
      %v436 = vrot.slane %v434, 1
      %v437 = vsel %vm401, %v432, %v436
      %v438 = vshrl.u32 %v386, 16
      %v440 = vor.u32 %v438, %v436
      %v442 = vshll.u32 %v387, 16
      %v444 = vrot.slane %v442, 1
      %v445 = vsel %vm401, %v440, %v444
      %v446 = vshrl.u32 %v387, 16
      %v448 = vor.u32 %v446, %v444
      %v450 = vshll.u32 %v388, 16
      %v452 = vrot.slane %v450, 1
      %v453 = vsel %vm401, %v448, %v452
      %v454 = vshrl.u32 %v388, 16
      %v456 = vor.u32 %v454, %v452
      %v458 = vshll.u32 %v389, 16
      %v460 = vrot.slane %v458, 1
      %v461 = vsel %vm401, %v456, %v460
      %v462 = vshrl.u32 %v389, 16
      %v464 = vor.u32 %v462, %v460
      %v466 = vshll.u32 %v390, 16
      %v468 = vrot.slane %v466, 1
      %v469 = vsel %vm401, %v464, %v468
      %v470 = vshrl.u32 %v390, 16
      %v472 = vor.u32 %v470, %v468
      %v474 = vshll.u32 %v391, 16
      %v476 = vrot.slane %v474, 1
      %v477 = vsel %vm401, %v472, %v476
      %v478 = vshrl.u32 %v391, 16
      %v480 = vor.u32 %v478, %v476
      %v482 = vshll.u32 %v392, 16
      %v484 = vrot.slane %v482, 1
      %v485 = vsel %vm401, %v480, %v484
      %v486 = vshrl.u32 %v392, 16
      %v488 = vor.u32 %v486, %v484
      %v490 = vshll.u32 %v393, 16
      %v492 = vrot.slane %v490, 1
      %v493 = vsel %vm401, %v488, %v492
      %v494 = vshrl.u32 %v393, 16
      %v496 = vor.u32 %v494, %v492
      %v498 = vshll.u32 %v394, 16
      %v500 = vrot.slane %v498, 1
      %v501 = vsel %vm401, %v496, %v500
      %v502 = vshrl.u32 %v394, 16
      %v504 = vor.u32 %v502, %v500
      %v506 = vshll.u32 %v395, 16
      %v508 = vrot.slane %v506, 1
      %v509 = vsel %vm401, %v504, %v508
      %v510 = vshrl.u32 %v395, 16
      %v512 = vor.u32 %v510, %v508
      %v514 = vshll.u32 %v396, 16
      %v516 = vrot.slane %v514, 1
      %v517 = vsel %vm401, %v512, %v516
      %v518 = vshrl.u32 %v396, 16
      %v520 = vor.u32 %v518, %v516
      %v522 = vshll.u32 %v397, 16
      %v524 = vrot.slane %v522, 1
      %v525 = vsel %vm401, %v520, %v524
      %v526 = vshrl.u32 %v397, 16
      %v528 = vor.u32 %v526, %v524
      %v530 = vshll.u32 %v398, 16
      %v532 = vrot.slane %v530, 1
      %v533 = vsel %vm401, %v528, %v532
      %v534 = vshrl.u32 %v398, 16
      %v536 = vor.u32 %v534, %v532
      %v538 = vshll.u32 %v399, 16
      %v540 = vrot.slane %v538, 1
      %v541 = vsel %vm401, %v536, %v540
      %v542 = vshrl.u32 %v399, 16
      %v544 = vor.u32 %v542, %v540
      %v546 = vshll.u32 %v400, 16
      %v548 = vrot.slane %v546, 1
      %v549 = vsel %vm401, %v544, %v548
      %v551 = vunpack.c.l.b16 %v307
      %v552 = vpack.c.b16 %v551, %v551
      %v553 = vrot.slane %v552, 2
      %vm554 = vcmask 31744
      %v556 = vsel %vm554, %v413, 0
      %v559 = vsel %vm554, %v421, 0
      %v562 = vsel %vm554, %v429, 0
      %v565 = vsel %vm554, %v437, 0
      %v568 = vsel %vm554, %v445, 0
      %v571 = vsel %vm554, %v453, 0
      %v574 = vsel %vm554, %v461, 0
      %v577 = vsel %vm554, %v469, 0
      %v580 = vsel %vm554, %v477, 0
      %v583 = vsel %vm554, %v485, 0
      %v586 = vsel %vm554, %v493, 0
      %v589 = vsel %vm554, %v501, 0
      %v592 = vsel %vm554, %v509, 0
      %v595 = vsel %vm554, %v517, 0
      %v598 = vsel %vm554, %v525, 0
      %v601 = vsel %vm554, %v533, 0
      %v604 = vsel %vm554, %v541, 0
      %v607 = vsel %vm554, %v549, 0
      %vm609 = vcmask 1041408
      %v611 = vsel %vm609, %v553, 0
      %613 = vmatprep.subr.bf16.mxu0 0
      %614 = vmatpush1.bf16.msra.mxu0 %v611
      %615 = vmatprep.subr.bf16.mxu0 0
      %616 = vmatpush1.bf16.msra.mxu0 0
      %617 = vmatprep.subr.bf16.mxu0 0
      %618 = vmatpush1.bf16.msra.mxu0 0
      %619 = vmatprep.subr.bf16.mxu0 0
      %620 = vmatpush1.bf16.msra.mxu0 0
      %621 = vmatprep.subr.bf16.mxu0 0
      %622 = vmatpush1.bf16.msra.mxu0 0
      %623 = vmatprep.subr.bf16.mxu0 0
      %624 = vmatpush1.bf16.msra.mxu0 0
      %625 = vmatprep.subr.bf16.mxu0 0
      %626 = vmatpush1.bf16.msra.mxu0 0
      %627 = vmatprep.subr.bf16.mxu0 0
      %628 = vmatpush1.bf16.msra.mxu0 0
      %629 = vmatprep.subr.bf16.mxu0 0
      %630 = vmatpush1.bf16.msra.mxu0 0
      %631 = vmatprep.subr.bf16.mxu0 0
      %632 = vmatpush1.bf16.msra.mxu0 0
      %633 = vmatprep.subr.bf16.mxu0 0
      %634 = vmatpush1.bf16.msra.mxu0 0
      %635 = vmatprep.subr.bf16.mxu0 0
      %636 = vmatpush1.bf16.msra.mxu0 0
      %637 = vmatprep.subr.bf16.mxu0 0
      %638 = vmatpush1.bf16.msra.mxu0 0
      %639 = vmatprep.subr.bf16.mxu0 0
      %640 = vmatpush1.bf16.msra.mxu0 0
      %641 = vmatprep.subr.bf16.mxu0 0
      %642 = vmatpush1.bf16.msra.mxu0 0
      %643 = vmatprep.subr.bf16.mxu0 0
      %644 = vmatpush1.bf16.msra.mxu0 0
      %645 = vmatprep.mubr.bf16.mxu0 0
      %646 = vmatmul.mubr.bf16.gmra.mrb[0].mxu0 %v556
      %v647 = vpop.f32.mrb[0].mxu0
      %v648 = vadd.f32 0.0, %v647
      %v649 = vpop.f32.mrb[0].mxu0
      %v650 = vpop.f32.mrb[0].mxu0
      %v651 = vadd.f32 0.0, %v650
      %v652 = vpop.f32.mrb[0].mxu0
      %653 = vmatprep.mubr.bf16.mxu0 0
      %654 = vmatmul.mubr.bf16.gmra.mrb[0].mxu0 %v559
      %v655 = vpop.f32.mrb[0].mxu0
      %v656 = vadd.f32 0.0, %v655
      %v657 = vpop.f32.mrb[0].mxu0
      %v658 = vpop.f32.mrb[0].mxu0
      %v659 = vadd.f32 0.0, %v658
      %v660 = vpop.f32.mrb[0].mxu0
      %661 = vmatprep.mubr.bf16.mxu0 0
      %662 = vmatmul.mubr.bf16.gmra.mrb[0].mxu0 %v562
      %v663 = vpop.f32.mrb[0].mxu0
      %v664 = vadd.f32 0.0, %v663
      %v665 = vpop.f32.mrb[0].mxu0
      %v666 = vpop.f32.mrb[0].mxu0
      %v667 = vadd.f32 0.0, %v666
      %v668 = vpop.f32.mrb[0].mxu0
      %669 = vmatprep.mubr.bf16.mxu0 0
      %670 = vmatmul.mubr.bf16.gmra.mrb[0].mxu0 %v565
      %v671 = vpop.f32.mrb[0].mxu0
      %v672 = vadd.f32 0.0, %v671
      %v673 = vpop.f32.mrb[0].mxu0
      %v674 = vpop.f32.mrb[0].mxu0
      %v675 = vadd.f32 0.0, %v674
      %v676 = vpop.f32.mrb[0].mxu0
      %677 = vmatprep.mubr.bf16.mxu0 0
      %678 = vmatmul.mubr.bf16.gmra.mrb[0].mxu0 %v568
      %v679 = vpop.f32.mrb[0].mxu0
      %v680 = vadd.f32 0.0, %v679
      %v681 = vpop.f32.mrb[0].mxu0
      %v682 = vpop.f32.mrb[0].mxu0
      %v683 = vadd.f32 0.0, %v682
      %v684 = vpop.f32.mrb[0].mxu0
      %685 = vmatprep.mubr.bf16.mxu0 0
      %686 = vmatmul.mubr.bf16.gmra.mrb[0].mxu0 %v571
      %v687 = vpop.f32.mrb[0].mxu0
      %v688 = vadd.f32 0.0, %v687
      %v689 = vpop.f32.mrb[0].mxu0
      %v690 = vpop.f32.mrb[0].mxu0
      %v691 = vadd.f32 0.0, %v690
      %v692 = vpop.f32.mrb[0].mxu0
      %693 = vmatprep.mubr.bf16.mxu0 0
      %694 = vmatmul.mubr.bf16.gmra.mrb[0].mxu0 %v574
      %v695 = vpop.f32.mrb[0].mxu0
      %v696 = vadd.f32 0.0, %v695
      %v697 = vpop.f32.mrb[0].mxu0
      %v698 = vpop.f32.mrb[0].mxu0
      %v699 = vadd.f32 0.0, %v698
      %v700 = vpop.f32.mrb[0].mxu0
      %701 = vmatprep.mubr.bf16.mxu0 0
      %702 = vmatmul.mubr.bf16.gmra.mrb[0].mxu0 %v577
      %v703 = vpop.f32.mrb[0].mxu0
      %v704 = vadd.f32 0.0, %v703
      %v705 = vpop.f32.mrb[0].mxu0
      %v706 = vpop.f32.mrb[0].mxu0
      %v707 = vadd.f32 0.0, %v706
      %v708 = vpop.f32.mrb[0].mxu0
      %709 = vmatprep.mubr.bf16.mxu0 0
      %710 = vmatmul.mubr.bf16.gmra.mrb[0].mxu0 %v580
      %v711 = vpop.f32.mrb[0].mxu0
      %v712 = vadd.f32 0.0, %v711
      %v713 = vpop.f32.mrb[0].mxu0
      %v714 = vpop.f32.mrb[0].mxu0
      %v715 = vadd.f32 0.0, %v714
      %v716 = vpop.f32.mrb[0].mxu0
      %717 = vmatprep.mubr.bf16.mxu0 0
      %718 = vmatmul.mubr.bf16.gmra.mrb[0].mxu0 %v583
      %v719 = vpop.f32.mrb[0].mxu0
      %v720 = vadd.f32 0.0, %v719
      %v721 = vpop.f32.mrb[0].mxu0
      %v722 = vpop.f32.mrb[0].mxu0
      %v723 = vadd.f32 0.0, %v722
      %v724 = vpop.f32.mrb[0].mxu0
      %725 = vmatprep.mubr.bf16.mxu0 0
      %726 = vmatmul.mubr.bf16.gmra.mrb[0].mxu0 %v586
      %v727 = vpop.f32.mrb[0].mxu0
      %v728 = vadd.f32 0.0, %v727
      %v729 = vpop.f32.mrb[0].mxu0
      %v730 = vpop.f32.mrb[0].mxu0
      %v731 = vadd.f32 0.0, %v730
      %v732 = vpop.f32.mrb[0].mxu0
      %733 = vmatprep.mubr.bf16.mxu0 0
      %734 = vmatmul.mubr.bf16.gmra.mrb[0].mxu0 %v589
      %v735 = vpop.f32.mrb[0].mxu0
      %v736 = vadd.f32 0.0, %v735
      %v737 = vpop.f32.mrb[0].mxu0
      %v738 = vpop.f32.mrb[0].mxu0
      %v739 = vadd.f32 0.0, %v738
      %v740 = vpop.f32.mrb[0].mxu0
      %741 = vmatprep.mubr.bf16.mxu0 0
      %742 = vmatmul.mubr.bf16.gmra.mrb[0].mxu0 %v592
      %v743 = vpop.f32.mrb[0].mxu0
      %v744 = vadd.f32 0.0, %v743
      %v745 = vpop.f32.mrb[0].mxu0
      %v746 = vpop.f32.mrb[0].mxu0
      %v747 = vadd.f32 0.0, %v746
      %v748 = vpop.f32.mrb[0].mxu0
      %749 = vmatprep.mubr.bf16.mxu0 0
      %750 = vmatmul.mubr.bf16.gmra.mrb[0].mxu0 %v595
      %v751 = vpop.f32.mrb[0].mxu0
      %v752 = vadd.f32 0.0, %v751
      %v753 = vpop.f32.mrb[0].mxu0
      %v754 = vpop.f32.mrb[0].mxu0
      %v755 = vadd.f32 0.0, %v754
      %v756 = vpop.f32.mrb[0].mxu0
      %757 = vmatprep.mubr.bf16.mxu0 0
      %758 = vmatmul.mubr.bf16.gmra.mrb[0].mxu0 %v598
      %v759 = vpop.f32.mrb[0].mxu0
      %v760 = vadd.f32 0.0, %v759
      %v761 = vpop.f32.mrb[0].mxu0
      %v762 = vpop.f32.mrb[0].mxu0
      %v763 = vadd.f32 0.0, %v762
      %v764 = vpop.f32.mrb[0].mxu0
      %765 = vmatprep.mubr.bf16.mxu0 0
      %766 = vmatmul.mubr.bf16.gmra.mrb[0].mxu0 %v601
      %v767 = vpop.f32.mrb[0].mxu0
      %v768 = vadd.f32 0.0, %v767
      %v769 = vpop.f32.mrb[0].mxu0
      %v770 = vpop.f32.mrb[0].mxu0
      %v771 = vadd.f32 0.0, %v770
      %v772 = vpop.f32.mrb[0].mxu0
      %773 = vmatprep.mubr.bf16.mxu0 0
      %774 = vmatmul.mubr.bf16.gmra.mrb[0].mxu0 %v604
      %v775 = vpop.f32.mrb[0].mxu0
      %v776 = vadd.f32 0.0, %v775
      %v777 = vpop.f32.mrb[0].mxu0
      %v778 = vpop.f32.mrb[0].mxu0
      %v779 = vadd.f32 0.0, %v778
      %v780 = vpop.f32.mrb[0].mxu0
      %781 = vmatprep.mubr.bf16.mxu0 0
      %782 = vmatmul.mubr.bf16.gmra.mrb[0].mxu0 %v607
      %v783 = vpop.f32.mrb[0].mxu0
      %v784 = vadd.f32 0.0, %v783
      %v785 = vpop.f32.mrb[0].mxu0
      %v786 = vpop.f32.mrb[0].mxu0
      %v787 = vadd.f32 0.0, %v786
      %v788 = vpop.f32.mrb[0].mxu0
      %789 = vdwg.mxu0
      %v790 = vsel %vm554, %v382, 0
      %v792 = vsel %vm554, %v383, 0
      %v794 = vsel %vm554, %v384, 0
      %v796 = vsel %vm554, %v385, 0
      %v798 = vsel %vm554, %v386, 0
      %v800 = vsel %vm554, %v387, 0
      %v802 = vsel %vm554, %v388, 0
      %v804 = vsel %vm554, %v389, 0
      %v806 = vsel %vm554, %v390, 0
      %v808 = vsel %vm554, %v391, 0
      %v810 = vsel %vm554, %v392, 0
      %v812 = vsel %vm554, %v393, 0
      %v814 = vsel %vm554, %v394, 0
      %v816 = vsel %vm554, %v395, 0
      %v818 = vsel %vm554, %v396, 0
      %v820 = vsel %vm554, %v397, 0
      %v822 = vsel %vm554, %v398, 0
      %v824 = vsel %vm554, %v399, 0
      %v827 = vsel %vm609, %v305, 0
      %829 = vmatprep.subr.bf16.mxu0 0
      %830 = vmatpush1.bf16.msra.mxu0 %v827
      %831 = vmatprep.subr.bf16.mxu0 0
      %832 = vmatpush1.bf16.msra.mxu0 0
      %833 = vmatprep.subr.bf16.mxu0 0
      %834 = vmatpush1.bf16.msra.mxu0 0
      %835 = vmatprep.subr.bf16.mxu0 0
      %836 = vmatpush1.bf16.msra.mxu0 0
      %837 = vmatprep.subr.bf16.mxu0 0
      %838 = vmatpush1.bf16.msra.mxu0 0
      %839 = vmatprep.subr.bf16.mxu0 0
      %840 = vmatpush1.bf16.msra.mxu0 0
      %841 = vmatprep.subr.bf16.mxu0 0
      %842 = vmatpush1.bf16.msra.mxu0 0
      %843 = vmatprep.subr.bf16.mxu0 0
      %844 = vmatpush1.bf16.msra.mxu0 0
      %845 = vmatprep.subr.bf16.mxu0 0
      %846 = vmatpush1.bf16.msra.mxu0 0
      %847 = vmatprep.subr.bf16.mxu0 0
      %848 = vmatpush1.bf16.msra.mxu0 0
      %849 = vmatprep.subr.bf16.mxu0 0
      %850 = vmatpush1.bf16.msra.mxu0 0
      %851 = vmatprep.subr.bf16.mxu0 0
      %852 = vmatpush1.bf16.msra.mxu0 0
      %853 = vmatprep.subr.bf16.mxu0 0
      %854 = vmatpush1.bf16.msra.mxu0 0
      %855 = vmatprep.subr.bf16.mxu0 0
      %856 = vmatpush1.bf16.msra.mxu0 0
      %857 = vmatprep.subr.bf16.mxu0 0
      %858 = vmatpush1.bf16.msra.mxu0 0
      %859 = vmatprep.subr.bf16.mxu0 0
      %860 = vmatpush1.bf16.msra.mxu0 0
      %861 = vmatprep.mubr.bf16.mxu0 0
      %862 = vmatmul.mubr.bf16.gmra.mrb[0].mxu0 %v790
      %v863 = vpop.f32.mrb[0].mxu0
      %v864 = vadd.f32 %v648, %v863
      %v865 = vpop.f32.mrb[0].mxu0
      %v866 = vpop.f32.mrb[0].mxu0
      %v867 = vadd.f32 %v651, %v866
      %v868 = vpop.f32.mrb[0].mxu0
      %869 = vmatprep.mubr.bf16.mxu0 0
      %870 = vmatmul.mubr.bf16.gmra.mrb[0].mxu0 %v792
      %v871 = vpop.f32.mrb[0].mxu0
      %v872 = vadd.f32 %v656, %v871
      %v873 = vpop.f32.mrb[0].mxu0
      %v874 = vpop.f32.mrb[0].mxu0
      %v875 = vadd.f32 %v659, %v874
      %v876 = vpop.f32.mrb[0].mxu0
      %877 = vmatprep.mubr.bf16.mxu0 0
      %878 = vmatmul.mubr.bf16.gmra.mrb[0].mxu0 %v794
      %v879 = vpop.f32.mrb[0].mxu0
      %v880 = vadd.f32 %v664, %v879
      %v881 = vpop.f32.mrb[0].mxu0
      %v882 = vpop.f32.mrb[0].mxu0
      %v883 = vadd.f32 %v667, %v882
      %v884 = vpop.f32.mrb[0].mxu0
      %885 = vmatprep.mubr.bf16.mxu0 0
      %886 = vmatmul.mubr.bf16.gmra.mrb[0].mxu0 %v796
      %v887 = vpop.f32.mrb[0].mxu0
      %v888 = vadd.f32 %v672, %v887
      %v889 = vpop.f32.mrb[0].mxu0
      %v890 = vpop.f32.mrb[0].mxu0
      %v891 = vadd.f32 %v675, %v890
      %v892 = vpop.f32.mrb[0].mxu0
      %893 = vmatprep.mubr.bf16.mxu0 0
      %894 = vmatmul.mubr.bf16.gmra.mrb[0].mxu0 %v798
      %v895 = vpop.f32.mrb[0].mxu0
      %v896 = vadd.f32 %v680, %v895
      %v897 = vpop.f32.mrb[0].mxu0
      %v898 = vpop.f32.mrb[0].mxu0
      %v899 = vadd.f32 %v683, %v898
      %v900 = vpop.f32.mrb[0].mxu0
      %901 = vmatprep.mubr.bf16.mxu0 0
      %902 = vmatmul.mubr.bf16.gmra.mrb[0].mxu0 %v800
      %v903 = vpop.f32.mrb[0].mxu0
      %v904 = vadd.f32 %v688, %v903
      %v905 = vpop.f32.mrb[0].mxu0
      %v906 = vpop.f32.mrb[0].mxu0
      %v907 = vadd.f32 %v691, %v906
      %v908 = vpop.f32.mrb[0].mxu0
      %909 = vmatprep.mubr.bf16.mxu0 0
      %910 = vmatmul.mubr.bf16.gmra.mrb[0].mxu0 %v802
      %v911 = vpop.f32.mrb[0].mxu0
      %v912 = vadd.f32 %v696, %v911
      %v913 = vpop.f32.mrb[0].mxu0
      %v914 = vpop.f32.mrb[0].mxu0
      %v915 = vadd.f32 %v699, %v914
      %v916 = vpop.f32.mrb[0].mxu0
      %917 = vmatprep.mubr.bf16.mxu0 0
      %918 = vmatmul.mubr.bf16.gmra.mrb[0].mxu0 %v804
      %v919 = vpop.f32.mrb[0].mxu0
      %v920 = vadd.f32 %v704, %v919
      %v921 = vpop.f32.mrb[0].mxu0
      %v922 = vpop.f32.mrb[0].mxu0
      %v923 = vadd.f32 %v707, %v922
      %v924 = vpop.f32.mrb[0].mxu0
      %925 = vmatprep.mubr.bf16.mxu0 0
      %926 = vmatmul.mubr.bf16.gmra.mrb[0].mxu0 %v806
      %v927 = vpop.f32.mrb[0].mxu0
      %v928 = vadd.f32 %v712, %v927
      %v929 = vpop.f32.mrb[0].mxu0
      %v930 = vpop.f32.mrb[0].mxu0
      %v931 = vadd.f32 %v715, %v930
      %v932 = vpop.f32.mrb[0].mxu0
      %933 = vmatprep.mubr.bf16.mxu0 0
      %934 = vmatmul.mubr.bf16.gmra.mrb[0].mxu0 %v808
      %v935 = vpop.f32.mrb[0].mxu0
      %v936 = vadd.f32 %v720, %v935
      %v937 = vpop.f32.mrb[0].mxu0
      %v938 = vpop.f32.mrb[0].mxu0
      %v939 = vadd.f32 %v723, %v938
      %v940 = vpop.f32.mrb[0].mxu0
      %941 = vmatprep.mubr.bf16.mxu0 0
      %942 = vmatmul.mubr.bf16.gmra.mrb[0].mxu0 %v810
      %v943 = vpop.f32.mrb[0].mxu0
      %v944 = vadd.f32 %v728, %v943
      %v945 = vpop.f32.mrb[0].mxu0
      %v946 = vpop.f32.mrb[0].mxu0
      %v947 = vadd.f32 %v731, %v946
      %v948 = vpop.f32.mrb[0].mxu0
      %949 = vmatprep.mubr.bf16.mxu0 0
      %950 = vmatmul.mubr.bf16.gmra.mrb[0].mxu0 %v812
      %v951 = vpop.f32.mrb[0].mxu0
      %v952 = vadd.f32 %v736, %v951
      %v953 = vpop.f32.mrb[0].mxu0
      %v954 = vpop.f32.mrb[0].mxu0
      %v955 = vadd.f32 %v739, %v954
      %v956 = vpop.f32.mrb[0].mxu0
      %957 = vmatprep.mubr.bf16.mxu0 0
      %958 = vmatmul.mubr.bf16.gmra.mrb[0].mxu0 %v814
      %v959 = vpop.f32.mrb[0].mxu0
      %v960 = vadd.f32 %v744, %v959
      %v961 = vpop.f32.mrb[0].mxu0
      %v962 = vpop.f32.mrb[0].mxu0
      %v963 = vadd.f32 %v747, %v962
      %v964 = vpop.f32.mrb[0].mxu0
      %965 = vmatprep.mubr.bf16.mxu0 0
      %966 = vmatmul.mubr.bf16.gmra.mrb[0].mxu0 %v816
      %v967 = vpop.f32.mrb[0].mxu0
      %v968 = vadd.f32 %v752, %v967
      %v969 = vpop.f32.mrb[0].mxu0
      %v970 = vpop.f32.mrb[0].mxu0
      %v971 = vadd.f32 %v755, %v970
      %v972 = vpop.f32.mrb[0].mxu0
      %973 = vmatprep.mubr.bf16.mxu0 0
      %974 = vmatmul.mubr.bf16.gmra.mrb[0].mxu0 %v818
      %v975 = vpop.f32.mrb[0].mxu0
      %v976 = vadd.f32 %v760, %v975
      %v977 = vpop.f32.mrb[0].mxu0
      %v978 = vpop.f32.mrb[0].mxu0
      %v979 = vadd.f32 %v763, %v978
      %v980 = vpop.f32.mrb[0].mxu0
      %981 = vmatprep.mubr.bf16.mxu0 0
      %982 = vmatmul.mubr.bf16.gmra.mrb[0].mxu0 %v820
      %v983 = vpop.f32.mrb[0].mxu0
      %v984 = vadd.f32 %v768, %v983
      %v985 = vpop.f32.mrb[0].mxu0
      %v986 = vpop.f32.mrb[0].mxu0
      %v987 = vadd.f32 %v771, %v986
      %v988 = vpop.f32.mrb[0].mxu0
      %989 = vmatprep.mubr.bf16.mxu0 0
      %990 = vmatmul.mubr.bf16.gmra.mrb[0].mxu0 %v822
      %v991 = vpop.f32.mrb[0].mxu0
      %v992 = vadd.f32 %v776, %v991
      %v993 = vpop.f32.mrb[0].mxu0
      %v994 = vpop.f32.mrb[0].mxu0
      %v995 = vadd.f32 %v779, %v994
      %v996 = vpop.f32.mrb[0].mxu0
      %997 = vmatprep.mubr.bf16.mxu0 0
      %998 = vmatmul.mubr.bf16.gmra.mrb[0].mxu0 %v824
      %v999 = vpop.f32.mrb[0].mxu0
      %v1000 = vadd.f32 %v784, %v999
      %v1001 = vpop.f32.mrb[0].mxu0
      %v1002 = vpop.f32.mrb[0].mxu0
      %v1003 = vadd.f32 %v787, %v1002
      %v1004 = vpop.f32.mrb[0].mxu0
      %1005 = vdwg.mxu0
      %v1006 = vld [vmem:[%s243] sm:$0xe]
      %v1007 = vld [vmem:[%s247 + $0x4] sm:$0x3]
      %v1009 = vunpack.c.l.b16 %v1006
      %v1010 = vpack.c.b16 %v346, %v1009
      %vm1011 = vcmask 1046528
      %v1012 = vrot.slane %v1010, 1
      %v1013 = vrot.slane %v383, 1
      %v1014 = vsel %vm1011, %v1012, %v1013
      %v1015 = vrot.slane %v384, 1
      %v1016 = vsel %vm1011, %v1013, %v1015
      %v1017 = vrot.slane %v385, 1
      %v1018 = vsel %vm1011, %v1015, %v1017
      %v1019 = vrot.slane %v386, 1
      %v1020 = vsel %vm1011, %v1017, %v1019
      %v1021 = vrot.slane %v387, 1
      %v1022 = vsel %vm1011, %v1019, %v1021
      %v1023 = vrot.slane %v388, 1
      %v1024 = vsel %vm1011, %v1021, %v1023
      %v1025 = vrot.slane %v389, 1
      %v1026 = vsel %vm1011, %v1023, %v1025
      %v1027 = vrot.slane %v390, 1
      %v1028 = vsel %vm1011, %v1025, %v1027
      %v1029 = vrot.slane %v391, 1
      %v1030 = vsel %vm1011, %v1027, %v1029
      %v1031 = vrot.slane %v392, 1
      %v1032 = vsel %vm1011, %v1029, %v1031
      %v1033 = vrot.slane %v393, 1
      %v1034 = vsel %vm1011, %v1031, %v1033
      %v1035 = vrot.slane %v394, 1
      %v1036 = vsel %vm1011, %v1033, %v1035
      %v1037 = vrot.slane %v395, 1
      %v1038 = vsel %vm1011, %v1035, %v1037
      %v1039 = vrot.slane %v396, 1
      %v1040 = vsel %vm1011, %v1037, %v1039
      %v1041 = vrot.slane %v397, 1
      %v1042 = vsel %vm1011, %v1039, %v1041
      %v1043 = vrot.slane %v398, 1
      %v1044 = vsel %vm1011, %v1041, %v1043
      %v1045 = vrot.slane %v399, 1
      %v1046 = vsel %vm1011, %v1043, %v1045
      %v1047 = vrot.slane %v400, 1
      %v1048 = vsel %vm1011, %v1045, %v1047
      %v1050 = vsel %vm554, %v1014, 0
      %v1053 = vsel %vm554, %v1016, 0
      %v1056 = vsel %vm554, %v1018, 0
      %v1059 = vsel %vm554, %v1020, 0
      %v1062 = vsel %vm554, %v1022, 0
      %v1065 = vsel %vm554, %v1024, 0
      %v1068 = vsel %vm554, %v1026, 0
      %v1071 = vsel %vm554, %v1028, 0
      %v1074 = vsel %vm554, %v1030, 0
      %v1077 = vsel %vm554, %v1032, 0
      %v1080 = vsel %vm554, %v1034, 0
      %v1083 = vsel %vm554, %v1036, 0
      %v1086 = vsel %vm554, %v1038, 0
      %v1089 = vsel %vm554, %v1040, 0
      %v1092 = vsel %vm554, %v1042, 0
      %v1095 = vsel %vm554, %v1044, 0
      %v1098 = vsel %vm554, %v1046, 0
      %v1101 = vsel %vm554, %v1048, 0
      %v1104 = vsel %vm609, %v1007, 0
      %1106 = vmatprep.subr.bf16.mxu0 0
      %1107 = vmatpush1.bf16.msra.mxu0 %v1104
      %1108 = vmatprep.subr.bf16.mxu0 0
      %1109 = vmatpush1.bf16.msra.mxu0 0
      %1110 = vmatprep.subr.bf16.mxu0 0
      %1111 = vmatpush1.bf16.msra.mxu0 0
      %1112 = vmatprep.subr.bf16.mxu0 0
      %1113 = vmatpush1.bf16.msra.mxu0 0
      %1114 = vmatprep.subr.bf16.mxu0 0
      %1115 = vmatpush1.bf16.msra.mxu0 0
      %1116 = vmatprep.subr.bf16.mxu0 0
      %1117 = vmatpush1.bf16.msra.mxu0 0
      %1118 = vmatprep.subr.bf16.mxu0 0
      %1119 = vmatpush1.bf16.msra.mxu0 0
      %1120 = vmatprep.subr.bf16.mxu0 0
      %1121 = vmatpush1.bf16.msra.mxu0 0
      %1122 = vmatprep.subr.bf16.mxu0 0
      %1123 = vmatpush1.bf16.msra.mxu0 0
      %1124 = vmatprep.subr.bf16.mxu0 0
      %1125 = vmatpush1.bf16.msra.mxu0 0
      %1126 = vmatprep.subr.bf16.mxu0 0
      %1127 = vmatpush1.bf16.msra.mxu0 0
      %1128 = vmatprep.subr.bf16.mxu0 0
      %1129 = vmatpush1.bf16.msra.mxu0 0
      %1130 = vmatprep.subr.bf16.mxu0 0
      %1131 = vmatpush1.bf16.msra.mxu0 0
      %1132 = vmatprep.subr.bf16.mxu0 0
      %1133 = vmatpush1.bf16.msra.mxu0 0
      %1134 = vmatprep.subr.bf16.mxu0 0
      %1135 = vmatpush1.bf16.msra.mxu0 0
      %1136 = vmatprep.subr.bf16.mxu0 0
      %1137 = vmatpush1.bf16.msra.mxu0 0
      %1138 = vmatprep.mubr.bf16.mxu0 0
      %1139 = vmatmul.mubr.bf16.gmra.mrb[0].mxu0 %v1050
      %v1140 = vpop.f32.mrb[0].mxu0
      %v1141 = vadd.f32 0.0, %v1140
      %v1142 = vpop.f32.mrb[0].mxu0
      %v1143 = vpop.f32.mrb[0].mxu0
      %v1144 = vadd.f32 0.0, %v1143
      %v1145 = vpop.f32.mrb[0].mxu0
      %1146 = vmatprep.mubr.bf16.mxu0 0
      %1147 = vmatmul.mubr.bf16.gmra.mrb[0].mxu0 %v1053
      %v1148 = vpop.f32.mrb[0].mxu0
      %v1149 = vadd.f32 0.0, %v1148
      %v1150 = vpop.f32.mrb[0].mxu0
      %v1151 = vpop.f32.mrb[0].mxu0
      %v1152 = vadd.f32 0.0, %v1151
      %v1153 = vpop.f32.mrb[0].mxu0
      %1154 = vmatprep.mubr.bf16.mxu0 0
      %1155 = vmatmul.mubr.bf16.gmra.mrb[0].mxu0 %v1056
      %v1156 = vpop.f32.mrb[0].mxu0
      %v1157 = vadd.f32 0.0, %v1156
      %v1158 = vpop.f32.mrb[0].mxu0
      %v1159 = vpop.f32.mrb[0].mxu0
      %v1160 = vadd.f32 0.0, %v1159
      %v1161 = vpop.f32.mrb[0].mxu0
      %1162 = vmatprep.mubr.bf16.mxu0 0
      %1163 = vmatmul.mubr.bf16.gmra.mrb[0].mxu0 %v1059
      %v1164 = vpop.f32.mrb[0].mxu0
      %v1165 = vadd.f32 0.0, %v1164
      %v1166 = vpop.f32.mrb[0].mxu0
      %v1167 = vpop.f32.mrb[0].mxu0
      %v1168 = vadd.f32 0.0, %v1167
      %v1169 = vpop.f32.mrb[0].mxu0
      %1170 = vmatprep.mubr.bf16.mxu0 0
      %1171 = vmatmul.mubr.bf16.gmra.mrb[0].mxu0 %v1062
      %v1172 = vpop.f32.mrb[0].mxu0
      %v1173 = vadd.f32 0.0, %v1172
      %v1174 = vpop.f32.mrb[0].mxu0
      %v1175 = vpop.f32.mrb[0].mxu0
      %v1176 = vadd.f32 0.0, %v1175
      %v1177 = vpop.f32.mrb[0].mxu0
      %1178 = vmatprep.mubr.bf16.mxu0 0
      %1179 = vmatmul.mubr.bf16.gmra.mrb[0].mxu0 %v1065
      %v1180 = vpop.f32.mrb[0].mxu0
      %v1181 = vadd.f32 0.0, %v1180
      %v1182 = vpop.f32.mrb[0].mxu0
      %v1183 = vpop.f32.mrb[0].mxu0
      %v1184 = vadd.f32 0.0, %v1183
      %v1185 = vpop.f32.mrb[0].mxu0
      %1186 = vmatprep.mubr.bf16.mxu0 0
      %1187 = vmatmul.mubr.bf16.gmra.mrb[0].mxu0 %v1068
      %v1188 = vpop.f32.mrb[0].mxu0
      %v1189 = vadd.f32 0.0, %v1188
      %v1190 = vpop.f32.mrb[0].mxu0
      %v1191 = vpop.f32.mrb[0].mxu0
      %v1192 = vadd.f32 0.0, %v1191
      %v1193 = vpop.f32.mrb[0].mxu0
      %1194 = vmatprep.mubr.bf16.mxu0 0
      %1195 = vmatmul.mubr.bf16.gmra.mrb[0].mxu0 %v1071
      %v1196 = vpop.f32.mrb[0].mxu0
      %v1197 = vadd.f32 0.0, %v1196
      %v1198 = vpop.f32.mrb[0].mxu0
      %v1199 = vpop.f32.mrb[0].mxu0
      %v1200 = vadd.f32 0.0, %v1199
      %v1201 = vpop.f32.mrb[0].mxu0
      %1202 = vmatprep.mubr.bf16.mxu0 0
      %1203 = vmatmul.mubr.bf16.gmra.mrb[0].mxu0 %v1074
      %v1204 = vpop.f32.mrb[0].mxu0
      %v1205 = vadd.f32 0.0, %v1204
      %v1206 = vpop.f32.mrb[0].mxu0
      %v1207 = vpop.f32.mrb[0].mxu0
      %v1208 = vadd.f32 0.0, %v1207
      %v1209 = vpop.f32.mrb[0].mxu0
      %1210 = vmatprep.mubr.bf16.mxu0 0
      %1211 = vmatmul.mubr.bf16.gmra.mrb[0].mxu0 %v1077
      %v1212 = vpop.f32.mrb[0].mxu0
      %v1213 = vadd.f32 0.0, %v1212
      %v1214 = vpop.f32.mrb[0].mxu0
      %v1215 = vpop.f32.mrb[0].mxu0
      %v1216 = vadd.f32 0.0, %v1215
      %v1217 = vpop.f32.mrb[0].mxu0
      %1218 = vmatprep.mubr.bf16.mxu0 0
      %1219 = vmatmul.mubr.bf16.gmra.mrb[0].mxu0 %v1080
      %v1220 = vpop.f32.mrb[0].mxu0
      %v1221 = vadd.f32 0.0, %v1220
      %v1222 = vpop.f32.mrb[0].mxu0
      %v1223 = vpop.f32.mrb[0].mxu0
      %v1224 = vadd.f32 0.0, %v1223
      %v1225 = vpop.f32.mrb[0].mxu0
      %1226 = vmatprep.mubr.bf16.mxu0 0
      %1227 = vmatmul.mubr.bf16.gmra.mrb[0].mxu0 %v1083
      %v1228 = vpop.f32.mrb[0].mxu0
      %v1229 = vadd.f32 0.0, %v1228
      %v1230 = vpop.f32.mrb[0].mxu0
      %v1231 = vpop.f32.mrb[0].mxu0
      %v1232 = vadd.f32 0.0, %v1231
      %v1233 = vpop.f32.mrb[0].mxu0
      %1234 = vmatprep.mubr.bf16.mxu0 0
      %1235 = vmatmul.mubr.bf16.gmra.mrb[0].mxu0 %v1086
      %v1236 = vpop.f32.mrb[0].mxu0
      %v1237 = vadd.f32 0.0, %v1236
      %v1238 = vpop.f32.mrb[0].mxu0
      %v1239 = vpop.f32.mrb[0].mxu0
      %v1240 = vadd.f32 0.0, %v1239
      %v1241 = vpop.f32.mrb[0].mxu0
      %1242 = vmatprep.mubr.bf16.mxu0 0
      %1243 = vmatmul.mubr.bf16.gmra.mrb[0].mxu0 %v1089
      %v1244 = vpop.f32.mrb[0].mxu0
      %v1245 = vadd.f32 0.0, %v1244
      %v1246 = vpop.f32.mrb[0].mxu0
      %v1247 = vpop.f32.mrb[0].mxu0
      %v1248 = vadd.f32 0.0, %v1247
      %v1249 = vpop.f32.mrb[0].mxu0
      %1250 = vmatprep.mubr.bf16.mxu0 0
      %1251 = vmatmul.mubr.bf16.gmra.mrb[0].mxu0 %v1092
      %v1252 = vpop.f32.mrb[0].mxu0
      %v1253 = vadd.f32 0.0, %v1252
      %v1254 = vpop.f32.mrb[0].mxu0
      %v1255 = vpop.f32.mrb[0].mxu0
      %v1256 = vadd.f32 0.0, %v1255
      %v1257 = vpop.f32.mrb[0].mxu0
      %1258 = vmatprep.mubr.bf16.mxu0 0
      %1259 = vmatmul.mubr.bf16.gmra.mrb[0].mxu0 %v1095
      %v1260 = vpop.f32.mrb[0].mxu0
      %v1261 = vadd.f32 0.0, %v1260
      %v1262 = vpop.f32.mrb[0].mxu0
      %v1263 = vpop.f32.mrb[0].mxu0
      %v1264 = vadd.f32 0.0, %v1263
      %v1265 = vpop.f32.mrb[0].mxu0
      %1266 = vmatprep.mubr.bf16.mxu0 0
      %1267 = vmatmul.mubr.bf16.gmra.mrb[0].mxu0 %v1098
      %v1268 = vpop.f32.mrb[0].mxu0
      %v1269 = vadd.f32 0.0, %v1268
      %v1270 = vpop.f32.mrb[0].mxu0
      %v1271 = vpop.f32.mrb[0].mxu0
      %v1272 = vadd.f32 0.0, %v1271
      %v1273 = vpop.f32.mrb[0].mxu0
      %1274 = vmatprep.mubr.bf16.mxu0 0
      %1275 = vmatmul.mubr.bf16.gmra.mrb[0].mxu0 %v1101
      %v1276 = vpop.f32.mrb[0].mxu0
      %v1277 = vadd.f32 0.0, %v1276
      %v1278 = vpop.f32.mrb[0].mxu0
      %v1279 = vpop.f32.mrb[0].mxu0
      %v1280 = vadd.f32 0.0, %v1279
      %v1281 = vpop.f32.mrb[0].mxu0
      %1282 = vdwg.mxu0
      %v1283 = vadd.f32 %v864, %v1141
      %v1284 = vadd.f32 %v867, %v1144
      %v1285 = vadd.f32 %v872, %v1149
      %v1286 = vadd.f32 %v875, %v1152
      %v1287 = vadd.f32 %v880, %v1157
      %v1288 = vadd.f32 %v883, %v1160
      %v1289 = vadd.f32 %v888, %v1165
      %v1290 = vadd.f32 %v891, %v1168
      %v1291 = vadd.f32 %v896, %v1173
      %v1292 = vadd.f32 %v899, %v1176
      %v1293 = vadd.f32 %v904, %v1181
      %v1294 = vadd.f32 %v907, %v1184
      %v1295 = vadd.f32 %v912, %v1189
      %v1296 = vadd.f32 %v915, %v1192
      %v1297 = vadd.f32 %v920, %v1197
      %v1298 = vadd.f32 %v923, %v1200
      %v1299 = vadd.f32 %v928, %v1205
      %v1300 = vadd.f32 %v931, %v1208
      %v1301 = vadd.f32 %v936, %v1213
      %v1302 = vadd.f32 %v939, %v1216
      %v1303 = vadd.f32 %v944, %v1221
      %v1304 = vadd.f32 %v947, %v1224
      %v1305 = vadd.f32 %v952, %v1229
      %v1306 = vadd.f32 %v955, %v1232
      %v1307 = vadd.f32 %v960, %v1237
      %v1308 = vadd.f32 %v963, %v1240
      %v1309 = vadd.f32 %v968, %v1245
      %v1310 = vadd.f32 %v971, %v1248
      %v1311 = vadd.f32 %v976, %v1253
      %v1312 = vadd.f32 %v979, %v1256
      %v1313 = vadd.f32 %v984, %v1261
      %v1314 = vadd.f32 %v987, %v1264
      %v1315 = vadd.f32 %v992, %v1269
      %v1316 = vadd.f32 %v995, %v1272
      %v1317 = vadd.f32 %v1000, %v1277
      %v1318 = vadd.f32 %v1003, %v1280
      %v1319 = vld [vmem:[%s243 + $0x8] sm:$0xe]
      %v1320 = vld [vmem:[%s243 + $0xc] sm:$0xf]
      %v1321 = vld [vmem:[%s243 + $0x10] sm:$0xf]
      %v1322 = vld [vmem:[%s243 + $0x14] sm:$0xf]
      %v1323 = vld [vmem:[%s243 + $0x18] sm:$0xf]
      %v1324 = vld [vmem:[%s243 + $0x1c] sm:$0xf]
      %v1325 = vld [vmem:[%s243 + $0x20] sm:$0xf]
      %v1326 = vld [vmem:[%s243 + $0x24] sm:$0xf]
      %v1327 = vld [vmem:[%s243 + $0x28] sm:$0xf]
      %v1328 = vld [vmem:[%s243 + $0x2c] sm:$0xf]
      %v1329 = vld [vmem:[%s243 + $0x30] sm:$0xf]
      %v1330 = vld [vmem:[%s243 + $0x34] sm:$0xf]
      %v1331 = vld [vmem:[%s243 + $0x38] sm:$0xf]
      %v1332 = vld [vmem:[%s243 + $0x3c] sm:$0xf]
      %v1333 = vld [vmem:[%s243 + $0x40] sm:$0xf]
      %v1334 = vld [vmem:[%s243 + $0x44] sm:$0xf]
      %v1335 = vld [vmem:[%s243 + $0x48] sm:$0xf]
      %v1336 = vld [vmem:[%s243 + $0x4c] sm:$0xf]
      %v1337 = vld [vmem:[%s243 + $0x50] sm:$0xf]
      %v1338 = vld [vmem:[%s243 + $0x54] sm:$0xf]
      %v1339 = vld [vmem:[%s243 + $0x58] sm:$0xf]
      %v1340 = vld [vmem:[%s243 + $0x5c] sm:$0xf]
      %v1341 = vld [vmem:[%s243 + $0x60] sm:$0xf]
      %v1342 = vld [vmem:[%s243 + $0x64] sm:$0xf]
      %v1343 = vld [vmem:[%s243 + $0x68] sm:$0xf]
      %v1344 = vld [vmem:[%s243 + $0x6c] sm:$0xf]
      %v1345 = vld [vmem:[%s243 + $0x70] sm:$0xf]
      %v1346 = vld [vmem:[%s243 + $0x74] sm:$0xf]
      %v1347 = vld [vmem:[%s243 + $0x78] sm:$0xf]
      %v1348 = vld [vmem:[%s243 + $0x7c] sm:$0xf]
      %v1349 = vld [vmem:[%s243 + $0x80] sm:$0xf]
      %v1350 = vld [vmem:[%s243 + $0x84] sm:$0xf]
      %v1351 = vld [vmem:[%s243 + $0x88] sm:$0xf]
      %v1352 = vld [vmem:[%s243 + $0x8c] sm:$0xf]
      %v1353 = vld [vmem:[%s243 + $0x90] sm:$0xf]
      %v1354 = vld [vmem:[%s243 + $0x94] sm:$0xf]
      %v1355 = vld [vmem:[%s243 + $0x98] sm:$0x1]
      %v1356 = vld [vmem:[%s247 + $0x4] sm:$0xc]
      %v1394 = vunpack.c.l.b16 %v1319
      %v1395 = vunpack.c.l.b16 %v1320
      %v1396 = vunpack.c.l.b16 %v1321
      %v1397 = vunpack.c.l.b16 %v1322
      %v1398 = vunpack.c.l.b16 %v1323
      %v1399 = vunpack.c.l.b16 %v1324
      %v1400 = vunpack.c.l.b16 %v1325
      %v1401 = vunpack.c.l.b16 %v1326
      %v1402 = vunpack.c.l.b16 %v1327
      %v1403 = vunpack.c.l.b16 %v1328
      %v1404 = vunpack.c.l.b16 %v1329
      %v1405 = vunpack.c.l.b16 %v1330
      %v1406 = vunpack.c.l.b16 %v1331
      %v1407 = vunpack.c.l.b16 %v1332
      %v1408 = vunpack.c.l.b16 %v1333
      %v1409 = vunpack.c.l.b16 %v1334
      %v1410 = vunpack.c.l.b16 %v1335
      %v1411 = vunpack.c.l.b16 %v1336
      %v1412 = vunpack.c.l.b16 %v1337
      %v1413 = vunpack.c.l.b16 %v1338
      %v1414 = vunpack.c.l.b16 %v1339
      %v1415 = vunpack.c.l.b16 %v1340
      %v1416 = vunpack.c.l.b16 %v1341
      %v1417 = vunpack.c.l.b16 %v1342
      %v1418 = vunpack.c.l.b16 %v1343
      %v1419 = vunpack.c.l.b16 %v1344
      %v1420 = vunpack.c.l.b16 %v1345
      %v1421 = vunpack.c.l.b16 %v1346
      %v1422 = vunpack.c.l.b16 %v1347
      %v1423 = vunpack.c.l.b16 %v1348
      %v1424 = vunpack.c.l.b16 %v1349
      %v1425 = vunpack.c.l.b16 %v1350
      %v1426 = vunpack.c.l.b16 %v1351
      %v1427 = vunpack.c.l.b16 %v1352
      %v1428 = vunpack.c.l.b16 %v1353
      %v1429 = vunpack.c.l.b16 %v1354
      %v1430 = vunpack.c.l.b16 %v1355
      %v1431 = vpack.c.b16 %v1395, %v1394
      %v1432 = vpack.c.b16 %v1397, %v1396
      %v1433 = vpack.c.b16 %v1399, %v1398
      %v1434 = vpack.c.b16 %v1401, %v1400
      %v1435 = vpack.c.b16 %v1403, %v1402
      %v1436 = vpack.c.b16 %v1405, %v1404
      %v1437 = vpack.c.b16 %v1407, %v1406
      %v1438 = vpack.c.b16 %v1409, %v1408
      %v1439 = vpack.c.b16 %v1411, %v1410
      %v1440 = vpack.c.b16 %v1413, %v1412
      %v1441 = vpack.c.b16 %v1415, %v1414
      %v1442 = vpack.c.b16 %v1417, %v1416
      %v1443 = vpack.c.b16 %v1419, %v1418
      %v1444 = vpack.c.b16 %v1421, %v1420
      %v1445 = vpack.c.b16 %v1423, %v1422
      %v1446 = vpack.c.b16 %v1425, %v1424
      %v1447 = vpack.c.b16 %v1427, %v1426
      %v1448 = vpack.c.b16 %v1429, %v1428
      %v1449 = vpack.c.b16 %v1430, %v1430
      %v1450 = vrot.slane %v1431, 1
      %v1451 = vrot.slane %v1432, 1
      %v1452 = vsel %vm1011, %v1450, %v1451
      %v1453 = vrot.slane %v1433, 1
      %v1454 = vsel %vm1011, %v1451, %v1453
      %v1455 = vrot.slane %v1434, 1
      %v1456 = vsel %vm1011, %v1453, %v1455
      %v1457 = vrot.slane %v1435, 1
      %v1458 = vsel %vm1011, %v1455, %v1457
      %v1459 = vrot.slane %v1436, 1
      %v1460 = vsel %vm1011, %v1457, %v1459
      %v1461 = vrot.slane %v1437, 1
      %v1462 = vsel %vm1011, %v1459, %v1461
      %v1463 = vrot.slane %v1438, 1
      %v1464 = vsel %vm1011, %v1461, %v1463
      %v1465 = vrot.slane %v1439, 1
      %v1466 = vsel %vm1011, %v1463, %v1465
      %v1467 = vrot.slane %v1440, 1
      %v1468 = vsel %vm1011, %v1465, %v1467
      %v1469 = vrot.slane %v1441, 1
      %v1470 = vsel %vm1011, %v1467, %v1469
      %v1471 = vrot.slane %v1442, 1
      %v1472 = vsel %vm1011, %v1469, %v1471
      %v1473 = vrot.slane %v1443, 1
      %v1474 = vsel %vm1011, %v1471, %v1473
      %v1475 = vrot.slane %v1444, 1
      %v1476 = vsel %vm1011, %v1473, %v1475
      %v1477 = vrot.slane %v1445, 1
      %v1478 = vsel %vm1011, %v1475, %v1477
      %v1479 = vrot.slane %v1446, 1
      %v1480 = vsel %vm1011, %v1477, %v1479
      %v1481 = vrot.slane %v1447, 1
      %v1482 = vsel %vm1011, %v1479, %v1481
      %v1483 = vrot.slane %v1448, 1
      %v1484 = vsel %vm1011, %v1481, %v1483
      %v1485 = vrot.slane %v1449, 1
      %v1486 = vsel %vm1011, %v1483, %v1485
      %v1488 = vunpack.c.l.b16 %v1356
      %v1489 = vpack.c.b16 %v1488, %v1488
      %v1490 = vrot.slane %v1489, 2
      %v1492 = vsel %vm554, %v1452, 0
      %v1495 = vsel %vm554, %v1454, 0
      %v1498 = vsel %vm554, %v1456, 0
      %v1501 = vsel %vm554, %v1458, 0
      %v1504 = vsel %vm554, %v1460, 0
      %v1507 = vsel %vm554, %v1462, 0
      %v1510 = vsel %vm554, %v1464, 0
      %v1513 = vsel %vm554, %v1466, 0
      %v1516 = vsel %vm554, %v1468, 0
      %v1519 = vsel %vm554, %v1470, 0
      %v1522 = vsel %vm554, %v1472, 0
      %v1525 = vsel %vm554, %v1474, 0
      %v1528 = vsel %vm554, %v1476, 0
      %v1531 = vsel %vm554, %v1478, 0
      %v1534 = vsel %vm554, %v1480, 0
      %v1537 = vsel %vm554, %v1482, 0
      %v1540 = vsel %vm554, %v1484, 0
      %v1543 = vsel %vm554, %v1486, 0
      %v1546 = vsel %vm609, %v1490, 0
      %1548 = vmatprep.subr.bf16.mxu0 0
      %1549 = vmatpush1.bf16.msra.mxu0 %v1546
      %1550 = vmatprep.subr.bf16.mxu0 0
      %1551 = vmatpush1.bf16.msra.mxu0 0
      %1552 = vmatprep.subr.bf16.mxu0 0
      %1553 = vmatpush1.bf16.msra.mxu0 0
      %1554 = vmatprep.subr.bf16.mxu0 0
      %1555 = vmatpush1.bf16.msra.mxu0 0
      %1556 = vmatprep.subr.bf16.mxu0 0
      %1557 = vmatpush1.bf16.msra.mxu0 0
      %1558 = vmatprep.subr.bf16.mxu0 0
      %1559 = vmatpush1.bf16.msra.mxu0 0
      %1560 = vmatprep.subr.bf16.mxu0 0
      %1561 = vmatpush1.bf16.msra.mxu0 0
      %1562 = vmatprep.subr.bf16.mxu0 0
      %1563 = vmatpush1.bf16.msra.mxu0 0
      %1564 = vmatprep.subr.bf16.mxu0 0
      %1565 = vmatpush1.bf16.msra.mxu0 0
      %1566 = vmatprep.subr.bf16.mxu0 0
      %1567 = vmatpush1.bf16.msra.mxu0 0
      %1568 = vmatprep.subr.bf16.mxu0 0
      %1569 = vmatpush1.bf16.msra.mxu0 0
      %1570 = vmatprep.subr.bf16.mxu0 0
      %1571 = vmatpush1.bf16.msra.mxu0 0
      %1572 = vmatprep.subr.bf16.mxu0 0
      %1573 = vmatpush1.bf16.msra.mxu0 0
      %1574 = vmatprep.subr.bf16.mxu0 0
      %1575 = vmatpush1.bf16.msra.mxu0 0
      %1576 = vmatprep.subr.bf16.mxu0 0
      %1577 = vmatpush1.bf16.msra.mxu0 0
      %1578 = vmatprep.subr.bf16.mxu0 0
      %1579 = vmatpush1.bf16.msra.mxu0 0
      %1580 = vmatprep.mubr.bf16.mxu0 0
      %1581 = vmatmul.mubr.bf16.gmra.mrb[0].mxu0 %v1492
      %v1582 = vpop.f32.mrb[0].mxu0
      %v1583 = vadd.f32 0.0, %v1582
      %v1584 = vpop.f32.mrb[0].mxu0
      %v1585 = vpop.f32.mrb[0].mxu0
      %v1586 = vadd.f32 0.0, %v1585
      %v1587 = vpop.f32.mrb[0].mxu0
      %1588 = vmatprep.mubr.bf16.mxu0 0
      %1589 = vmatmul.mubr.bf16.gmra.mrb[0].mxu0 %v1495
      %v1590 = vpop.f32.mrb[0].mxu0
      %v1591 = vadd.f32 0.0, %v1590
      %v1592 = vpop.f32.mrb[0].mxu0
      %v1593 = vpop.f32.mrb[0].mxu0
      %v1594 = vadd.f32 0.0, %v1593
      %v1595 = vpop.f32.mrb[0].mxu0
      %1596 = vmatprep.mubr.bf16.mxu0 0
      %1597 = vmatmul.mubr.bf16.gmra.mrb[0].mxu0 %v1498
      %v1598 = vpop.f32.mrb[0].mxu0
      %v1599 = vadd.f32 0.0, %v1598
      %v1600 = vpop.f32.mrb[0].mxu0
      %v1601 = vpop.f32.mrb[0].mxu0
      %v1602 = vadd.f32 0.0, %v1601
      %v1603 = vpop.f32.mrb[0].mxu0
      %1604 = vmatprep.mubr.bf16.mxu0 0
      %1605 = vmatmul.mubr.bf16.gmra.mrb[0].mxu0 %v1501
      %v1606 = vpop.f32.mrb[0].mxu0
      %v1607 = vadd.f32 0.0, %v1606
      %v1608 = vpop.f32.mrb[0].mxu0
      %v1609 = vpop.f32.mrb[0].mxu0
      %v1610 = vadd.f32 0.0, %v1609
      %v1611 = vpop.f32.mrb[0].mxu0
      %1612 = vmatprep.mubr.bf16.mxu0 0
      %1613 = vmatmul.mubr.bf16.gmra.mrb[0].mxu0 %v1504
      %v1614 = vpop.f32.mrb[0].mxu0
      %v1615 = vadd.f32 0.0, %v1614
      %v1616 = vpop.f32.mrb[0].mxu0
      %v1617 = vpop.f32.mrb[0].mxu0
      %v1618 = vadd.f32 0.0, %v1617
      %v1619 = vpop.f32.mrb[0].mxu0
      %1620 = vmatprep.mubr.bf16.mxu0 0
      %1621 = vmatmul.mubr.bf16.gmra.mrb[0].mxu0 %v1507
      %v1622 = vpop.f32.mrb[0].mxu0
      %v1623 = vadd.f32 0.0, %v1622
      %v1624 = vpop.f32.mrb[0].mxu0
      %v1625 = vpop.f32.mrb[0].mxu0
      %v1626 = vadd.f32 0.0, %v1625
      %v1627 = vpop.f32.mrb[0].mxu0
      %1628 = vmatprep.mubr.bf16.mxu0 0
      %1629 = vmatmul.mubr.bf16.gmra.mrb[0].mxu0 %v1510
      %v1630 = vpop.f32.mrb[0].mxu0
      %v1631 = vadd.f32 0.0, %v1630
      %v1632 = vpop.f32.mrb[0].mxu0
      %v1633 = vpop.f32.mrb[0].mxu0
      %v1634 = vadd.f32 0.0, %v1633
      %v1635 = vpop.f32.mrb[0].mxu0
      %1636 = vmatprep.mubr.bf16.mxu0 0
      %1637 = vmatmul.mubr.bf16.gmra.mrb[0].mxu0 %v1513
      %v1638 = vpop.f32.mrb[0].mxu0
      %v1639 = vadd.f32 0.0, %v1638
      %v1640 = vpop.f32.mrb[0].mxu0
      %v1641 = vpop.f32.mrb[0].mxu0
      %v1642 = vadd.f32 0.0, %v1641
      %v1643 = vpop.f32.mrb[0].mxu0
      %1644 = vmatprep.mubr.bf16.mxu0 0
      %1645 = vmatmul.mubr.bf16.gmra.mrb[0].mxu0 %v1516
      %v1646 = vpop.f32.mrb[0].mxu0
      %v1647 = vadd.f32 0.0, %v1646
      %v1648 = vpop.f32.mrb[0].mxu0
      %v1649 = vpop.f32.mrb[0].mxu0
      %v1650 = vadd.f32 0.0, %v1649
      %v1651 = vpop.f32.mrb[0].mxu0
      %1652 = vmatprep.mubr.bf16.mxu0 0
      %1653 = vmatmul.mubr.bf16.gmra.mrb[0].mxu0 %v1519
      %v1654 = vpop.f32.mrb[0].mxu0
      %v1655 = vadd.f32 0.0, %v1654
      %v1656 = vpop.f32.mrb[0].mxu0
      %v1657 = vpop.f32.mrb[0].mxu0
      %v1658 = vadd.f32 0.0, %v1657
      %v1659 = vpop.f32.mrb[0].mxu0
      %1660 = vmatprep.mubr.bf16.mxu0 0
      %1661 = vmatmul.mubr.bf16.gmra.mrb[0].mxu0 %v1522
      %v1662 = vpop.f32.mrb[0].mxu0
      %v1663 = vadd.f32 0.0, %v1662
      %v1664 = vpop.f32.mrb[0].mxu0
      %v1665 = vpop.f32.mrb[0].mxu0
      %v1666 = vadd.f32 0.0, %v1665
      %v1667 = vpop.f32.mrb[0].mxu0
      %1668 = vmatprep.mubr.bf16.mxu0 0
      %1669 = vmatmul.mubr.bf16.gmra.mrb[0].mxu0 %v1525
      %v1670 = vpop.f32.mrb[0].mxu0
      %v1671 = vadd.f32 0.0, %v1670
      %v1672 = vpop.f32.mrb[0].mxu0
      %v1673 = vpop.f32.mrb[0].mxu0
      %v1674 = vadd.f32 0.0, %v1673
      %v1675 = vpop.f32.mrb[0].mxu0
      %1676 = vmatprep.mubr.bf16.mxu0 0
      %1677 = vmatmul.mubr.bf16.gmra.mrb[0].mxu0 %v1528
      %v1678 = vpop.f32.mrb[0].mxu0
      %v1679 = vadd.f32 0.0, %v1678
      %v1680 = vpop.f32.mrb[0].mxu0
      %v1681 = vpop.f32.mrb[0].mxu0
      %v1682 = vadd.f32 0.0, %v1681
      %v1683 = vpop.f32.mrb[0].mxu0
      %1684 = vmatprep.mubr.bf16.mxu0 0
      %1685 = vmatmul.mubr.bf16.gmra.mrb[0].mxu0 %v1531
      %v1686 = vpop.f32.mrb[0].mxu0
      %v1687 = vadd.f32 0.0, %v1686
      %v1688 = vpop.f32.mrb[0].mxu0
      %v1689 = vpop.f32.mrb[0].mxu0
      %v1690 = vadd.f32 0.0, %v1689
      %v1691 = vpop.f32.mrb[0].mxu0
      %1692 = vmatprep.mubr.bf16.mxu0 0
      %1693 = vmatmul.mubr.bf16.gmra.mrb[0].mxu0 %v1534
      %v1694 = vpop.f32.mrb[0].mxu0
      %v1695 = vadd.f32 0.0, %v1694
      %v1696 = vpop.f32.mrb[0].mxu0
      %v1697 = vpop.f32.mrb[0].mxu0
      %v1698 = vadd.f32 0.0, %v1697
      %v1699 = vpop.f32.mrb[0].mxu0
      %1700 = vmatprep.mubr.bf16.mxu0 0
      %1701 = vmatmul.mubr.bf16.gmra.mrb[0].mxu0 %v1537
      %v1702 = vpop.f32.mrb[0].mxu0
      %v1703 = vadd.f32 0.0, %v1702
      %v1704 = vpop.f32.mrb[0].mxu0
      %v1705 = vpop.f32.mrb[0].mxu0
      %v1706 = vadd.f32 0.0, %v1705
      %v1707 = vpop.f32.mrb[0].mxu0
      %1708 = vmatprep.mubr.bf16.mxu0 0
      %1709 = vmatmul.mubr.bf16.gmra.mrb[0].mxu0 %v1540
      %v1710 = vpop.f32.mrb[0].mxu0
      %v1711 = vadd.f32 0.0, %v1710
      %v1712 = vpop.f32.mrb[0].mxu0
      %v1713 = vpop.f32.mrb[0].mxu0
      %v1714 = vadd.f32 0.0, %v1713
      %v1715 = vpop.f32.mrb[0].mxu0
      %1716 = vmatprep.mubr.bf16.mxu0 0
      %1717 = vmatmul.mubr.bf16.gmra.mrb[0].mxu0 %v1543
      %v1718 = vpop.f32.mrb[0].mxu0
      %v1719 = vadd.f32 0.0, %v1718
      %v1720 = vpop.f32.mrb[0].mxu0
      %v1721 = vpop.f32.mrb[0].mxu0
      %v1722 = vadd.f32 0.0, %v1721
      %v1723 = vpop.f32.mrb[0].mxu0
      %1724 = vdwg.mxu0
      %v1725 = vadd.f32 %v1283, %v1583
      %v1726 = vadd.f32 %v1284, %v1586
      %v1727 = vadd.f32 %v1285, %v1591
      %v1728 = vadd.f32 %v1286, %v1594
      %v1729 = vadd.f32 %v1287, %v1599
      %v1730 = vadd.f32 %v1288, %v1602
      %v1731 = vadd.f32 %v1289, %v1607
      %v1732 = vadd.f32 %v1290, %v1610
      %v1733 = vadd.f32 %v1291, %v1615
      %v1734 = vadd.f32 %v1292, %v1618
      %v1735 = vadd.f32 %v1293, %v1623
      %v1736 = vadd.f32 %v1294, %v1626
      %v1737 = vadd.f32 %v1295, %v1631
      %v1738 = vadd.f32 %v1296, %v1634
      %v1739 = vadd.f32 %v1297, %v1639
      %v1740 = vadd.f32 %v1298, %v1642
      %v1741 = vadd.f32 %v1299, %v1647
      %v1742 = vadd.f32 %v1300, %v1650
      %v1743 = vadd.f32 %v1301, %v1655
      %v1744 = vadd.f32 %v1302, %v1658
      %v1745 = vadd.f32 %v1303, %v1663
      %v1746 = vadd.f32 %v1304, %v1666
      %v1747 = vadd.f32 %v1305, %v1671
      %v1748 = vadd.f32 %v1306, %v1674
      %v1749 = vadd.f32 %v1307, %v1679
      %v1750 = vadd.f32 %v1308, %v1682
      %v1751 = vadd.f32 %v1309, %v1687
      %v1752 = vadd.f32 %v1310, %v1690
      %v1753 = vadd.f32 %v1311, %v1695
      %v1754 = vadd.f32 %v1312, %v1698
      %v1755 = vadd.f32 %v1313, %v1703
      %v1756 = vadd.f32 %v1314, %v1706
      %v1757 = vadd.f32 %v1315, %v1711
      %v1758 = vadd.f32 %v1316, %v1714
      %v1759 = vadd.f32 %v1317, %v1719
      %v1760 = vadd.f32 %v1318, %v1722
      %v1761 = vld [vmem:[%s243 + $0x98] sm:$0x3]
      %v1762 = vld [vmem:[%s247 + $0x8] sm:$0x3]
      %v1764 = vunpack.c.l.b16 %v1761
      %v1765 = vpack.c.b16 %v1764, %v1764
      %vm1766 = vsmask.f32 6400
      %v1768 = vshrl.u32 %v1431, 16
      %v1770 = vrot.slane %v1768, 1
      %v1771 = vshll.u32 %v1431, 16
      %v1773 = vrot.slane %v1771, 2
      %v1774 = vor.u32 %v1770, %v1773
      %v1776 = vshrl.u32 %v1432, 16
      %v1778 = vrot.slane %v1776, 1
      %v1779 = vshll.u32 %v1432, 16
      %v1781 = vrot.slane %v1779, 2
      %v1782 = vor.u32 %v1778, %v1781
      %v1783 = vsel %vm1766, %v1774, %v1782
      %v1785 = vshrl.u32 %v1433, 16
      %v1787 = vrot.slane %v1785, 1
      %v1788 = vshll.u32 %v1433, 16
      %v1790 = vrot.slane %v1788, 2
      %v1791 = vor.u32 %v1787, %v1790
      %v1792 = vsel %vm1766, %v1782, %v1791
      %v1794 = vshrl.u32 %v1434, 16
      %v1796 = vrot.slane %v1794, 1
      %v1797 = vshll.u32 %v1434, 16
      %v1799 = vrot.slane %v1797, 2
      %v1800 = vor.u32 %v1796, %v1799
      %v1801 = vsel %vm1766, %v1791, %v1800
      %v1803 = vshrl.u32 %v1435, 16
      %v1805 = vrot.slane %v1803, 1
      %v1806 = vshll.u32 %v1435, 16
      %v1808 = vrot.slane %v1806, 2
      %v1809 = vor.u32 %v1805, %v1808
      %v1810 = vsel %vm1766, %v1800, %v1809
      %v1812 = vshrl.u32 %v1436, 16
      %v1814 = vrot.slane %v1812, 1
      %v1815 = vshll.u32 %v1436, 16
      %v1817 = vrot.slane %v1815, 2
      %v1818 = vor.u32 %v1814, %v1817
      %v1819 = vsel %vm1766, %v1809, %v1818
      %v1821 = vshrl.u32 %v1437, 16
      %v1823 = vrot.slane %v1821, 1
      %v1824 = vshll.u32 %v1437, 16
      %v1826 = vrot.slane %v1824, 2
      %v1827 = vor.u32 %v1823, %v1826
      %v1828 = vsel %vm1766, %v1818, %v1827
      %v1830 = vshrl.u32 %v1438, 16
      %v1832 = vrot.slane %v1830, 1
      %v1833 = vshll.u32 %v1438, 16
      %v1835 = vrot.slane %v1833, 2
      %v1836 = vor.u32 %v1832, %v1835
      %v1837 = vsel %vm1766, %v1827, %v1836
      %v1839 = vshrl.u32 %v1439, 16
      %v1841 = vrot.slane %v1839, 1
      %v1842 = vshll.u32 %v1439, 16
      %v1844 = vrot.slane %v1842, 2
      %v1845 = vor.u32 %v1841, %v1844
      %v1846 = vsel %vm1766, %v1836, %v1845
      %v1848 = vshrl.u32 %v1440, 16
      %v1850 = vrot.slane %v1848, 1
      %v1851 = vshll.u32 %v1440, 16
      %v1853 = vrot.slane %v1851, 2
      %v1854 = vor.u32 %v1850, %v1853
      %v1855 = vsel %vm1766, %v1845, %v1854
      %v1857 = vshrl.u32 %v1441, 16
      %v1859 = vrot.slane %v1857, 1
      %v1860 = vshll.u32 %v1441, 16
      %v1862 = vrot.slane %v1860, 2
      %v1863 = vor.u32 %v1859, %v1862
      %v1864 = vsel %vm1766, %v1854, %v1863
      %v1866 = vshrl.u32 %v1442, 16
      %v1868 = vrot.slane %v1866, 1
      %v1869 = vshll.u32 %v1442, 16
      %v1871 = vrot.slane %v1869, 2
      %v1872 = vor.u32 %v1868, %v1871
      %v1873 = vsel %vm1766, %v1863, %v1872
      %v1875 = vshrl.u32 %v1443, 16
      %v1877 = vrot.slane %v1875, 1
      %v1878 = vshll.u32 %v1443, 16
      %v1880 = vrot.slane %v1878, 2
      %v1881 = vor.u32 %v1877, %v1880
      %v1882 = vsel %vm1766, %v1872, %v1881
      %v1884 = vshrl.u32 %v1444, 16
      %v1886 = vrot.slane %v1884, 1
      %v1887 = vshll.u32 %v1444, 16
      %v1889 = vrot.slane %v1887, 2
      %v1890 = vor.u32 %v1886, %v1889
      %v1891 = vsel %vm1766, %v1881, %v1890
      %v1893 = vshrl.u32 %v1445, 16
      %v1895 = vrot.slane %v1893, 1
      %v1896 = vshll.u32 %v1445, 16
      %v1898 = vrot.slane %v1896, 2
      %v1899 = vor.u32 %v1895, %v1898
      %v1900 = vsel %vm1766, %v1890, %v1899
      %v1902 = vshrl.u32 %v1446, 16
      %v1904 = vrot.slane %v1902, 1
      %v1905 = vshll.u32 %v1446, 16
      %v1907 = vrot.slane %v1905, 2
      %v1908 = vor.u32 %v1904, %v1907
      %v1909 = vsel %vm1766, %v1899, %v1908
      %v1911 = vshrl.u32 %v1447, 16
      %v1913 = vrot.slane %v1911, 1
      %v1914 = vshll.u32 %v1447, 16
      %v1916 = vrot.slane %v1914, 2
      %v1917 = vor.u32 %v1913, %v1916
      %v1918 = vsel %vm1766, %v1908, %v1917
      %v1920 = vshrl.u32 %v1448, 16
      %v1922 = vrot.slane %v1920, 1
      %v1923 = vshll.u32 %v1448, 16
      %v1925 = vrot.slane %v1923, 2
      %v1926 = vor.u32 %v1922, %v1925
      %v1927 = vsel %vm1766, %v1917, %v1926
      %v1929 = vshrl.u32 %v1765, 16
      %v1931 = vrot.slane %v1929, 1
      %v1932 = vshll.u32 %v1765, 16
      %v1934 = vrot.slane %v1932, 2
      %v1935 = vor.u32 %v1931, %v1934
      %v1936 = vsel %vm1766, %v1926, %v1935
      %v1938 = vsel %vm554, %v1783, 0
      %v1941 = vsel %vm554, %v1792, 0
      %v1944 = vsel %vm554, %v1801, 0
      %v1947 = vsel %vm554, %v1810, 0
      %v1950 = vsel %vm554, %v1819, 0
      %v1953 = vsel %vm554, %v1828, 0
      %v1956 = vsel %vm554, %v1837, 0
      %v1959 = vsel %vm554, %v1846, 0
      %v1962 = vsel %vm554, %v1855, 0
      %v1965 = vsel %vm554, %v1864, 0
      %v1968 = vsel %vm554, %v1873, 0
      %v1971 = vsel %vm554, %v1882, 0
      %v1974 = vsel %vm554, %v1891, 0
      %v1977 = vsel %vm554, %v1900, 0
      %v1980 = vsel %vm554, %v1909, 0
      %v1983 = vsel %vm554, %v1918, 0
      %v1986 = vsel %vm554, %v1927, 0
      %v1989 = vsel %vm554, %v1936, 0
      %v1992 = vsel %vm609, %v1762, 0
      %1994 = vmatprep.subr.bf16.mxu0 0
      %1995 = vmatpush1.bf16.msra.mxu0 %v1992
      %1996 = vmatprep.subr.bf16.mxu0 0
      %1997 = vmatpush1.bf16.msra.mxu0 0
      %1998 = vmatprep.subr.bf16.mxu0 0
      %1999 = vmatpush1.bf16.msra.mxu0 0
      %2000 = vmatprep.subr.bf16.mxu0 0
      %2001 = vmatpush1.bf16.msra.mxu0 0
      %2002 = vmatprep.subr.bf16.mxu0 0
      %2003 = vmatpush1.bf16.msra.mxu0 0
      %2004 = vmatprep.subr.bf16.mxu0 0
      %2005 = vmatpush1.bf16.msra.mxu0 0
      %2006 = vmatprep.subr.bf16.mxu0 0
      %2007 = vmatpush1.bf16.msra.mxu0 0
      %2008 = vmatprep.subr.bf16.mxu0 0
      %2009 = vmatpush1.bf16.msra.mxu0 0
      %2010 = vmatprep.subr.bf16.mxu0 0
      %2011 = vmatpush1.bf16.msra.mxu0 0
      %2012 = vmatprep.subr.bf16.mxu0 0
      %2013 = vmatpush1.bf16.msra.mxu0 0
      %2014 = vmatprep.subr.bf16.mxu0 0
      %2015 = vmatpush1.bf16.msra.mxu0 0
      %2016 = vmatprep.subr.bf16.mxu0 0
      %2017 = vmatpush1.bf16.msra.mxu0 0
      %2018 = vmatprep.subr.bf16.mxu0 0
      %2019 = vmatpush1.bf16.msra.mxu0 0
      %2020 = vmatprep.subr.bf16.mxu0 0
      %2021 = vmatpush1.bf16.msra.mxu0 0
      %2022 = vmatprep.subr.bf16.mxu0 0
      %2023 = vmatpush1.bf16.msra.mxu0 0
      %2024 = vmatprep.subr.bf16.mxu0 0
      %2025 = vmatpush1.bf16.msra.mxu0 0
      %2026 = vmatprep.mubr.bf16.mxu0 0
      %2027 = vmatmul.mubr.bf16.gmra.mrb[0].mxu0 %v1938
      %v2028 = vpop.f32.mrb[0].mxu0
      %v2029 = vadd.f32 0.0, %v2028
      %v2030 = vpop.f32.mrb[0].mxu0
      %v2031 = vpop.f32.mrb[0].mxu0
      %v2032 = vadd.f32 0.0, %v2031
      %v2033 = vpop.f32.mrb[0].mxu0
      %2034 = vmatprep.mubr.bf16.mxu0 0
      %2035 = vmatmul.mubr.bf16.gmra.mrb[0].mxu0 %v1941
      %v2036 = vpop.f32.mrb[0].mxu0
      %v2037 = vadd.f32 0.0, %v2036
      %v2038 = vpop.f32.mrb[0].mxu0
      %v2039 = vpop.f32.mrb[0].mxu0
      %v2040 = vadd.f32 0.0, %v2039
      %v2041 = vpop.f32.mrb[0].mxu0
      %2042 = vmatprep.mubr.bf16.mxu0 0
      %2043 = vmatmul.mubr.bf16.gmra.mrb[0].mxu0 %v1944
      %v2044 = vpop.f32.mrb[0].mxu0
      %v2045 = vadd.f32 0.0, %v2044
      %v2046 = vpop.f32.mrb[0].mxu0
      %v2047 = vpop.f32.mrb[0].mxu0
      %v2048 = vadd.f32 0.0, %v2047
      %v2049 = vpop.f32.mrb[0].mxu0
      %2050 = vmatprep.mubr.bf16.mxu0 0
      %2051 = vmatmul.mubr.bf16.gmra.mrb[0].mxu0 %v1947
      %v2052 = vpop.f32.mrb[0].mxu0
      %v2053 = vadd.f32 0.0, %v2052
      %v2054 = vpop.f32.mrb[0].mxu0
      %v2055 = vpop.f32.mrb[0].mxu0
      %v2056 = vadd.f32 0.0, %v2055
      %v2057 = vpop.f32.mrb[0].mxu0
      %2058 = vmatprep.mubr.bf16.mxu0 0
      %2059 = vmatmul.mubr.bf16.gmra.mrb[0].mxu0 %v1950
      %v2060 = vpop.f32.mrb[0].mxu0
      %v2061 = vadd.f32 0.0, %v2060
      %v2062 = vpop.f32.mrb[0].mxu0
      %v2063 = vpop.f32.mrb[0].mxu0
      %v2064 = vadd.f32 0.0, %v2063
      %v2065 = vpop.f32.mrb[0].mxu0
      %2066 = vmatprep.mubr.bf16.mxu0 0
      %2067 = vmatmul.mubr.bf16.gmra.mrb[0].mxu0 %v1953
      %v2068 = vpop.f32.mrb[0].mxu0
      %v2069 = vadd.f32 0.0, %v2068
      %v2070 = vpop.f32.mrb[0].mxu0
      %v2071 = vpop.f32.mrb[0].mxu0
      %v2072 = vadd.f32 0.0, %v2071
      %v2073 = vpop.f32.mrb[0].mxu0
      %2074 = vmatprep.mubr.bf16.mxu0 0
      %2075 = vmatmul.mubr.bf16.gmra.mrb[0].mxu0 %v1956
      %v2076 = vpop.f32.mrb[0].mxu0
      %v2077 = vadd.f32 0.0, %v2076
      %v2078 = vpop.f32.mrb[0].mxu0
      %v2079 = vpop.f32.mrb[0].mxu0
      %v2080 = vadd.f32 0.0, %v2079
      %v2081 = vpop.f32.mrb[0].mxu0
      %2082 = vmatprep.mubr.bf16.mxu0 0
      %2083 = vmatmul.mubr.bf16.gmra.mrb[0].mxu0 %v1959
      %v2084 = vpop.f32.mrb[0].mxu0
      %v2085 = vadd.f32 0.0, %v2084
      %v2086 = vpop.f32.mrb[0].mxu0
      %v2087 = vpop.f32.mrb[0].mxu0
      %v2088 = vadd.f32 0.0, %v2087
      %v2089 = vpop.f32.mrb[0].mxu0
      %2090 = vmatprep.mubr.bf16.mxu0 0
      %2091 = vmatmul.mubr.bf16.gmra.mrb[0].mxu0 %v1962
      %v2092 = vpop.f32.mrb[0].mxu0
      %v2093 = vadd.f32 0.0, %v2092
      %v2094 = vpop.f32.mrb[0].mxu0
      %v2095 = vpop.f32.mrb[0].mxu0
      %v2096 = vadd.f32 0.0, %v2095
      %v2097 = vpop.f32.mrb[0].mxu0
      %2098 = vmatprep.mubr.bf16.mxu0 0
      %2099 = vmatmul.mubr.bf16.gmra.mrb[0].mxu0 %v1965
      %v2100 = vpop.f32.mrb[0].mxu0
      %v2101 = vadd.f32 0.0, %v2100
      %v2102 = vpop.f32.mrb[0].mxu0
      %v2103 = vpop.f32.mrb[0].mxu0
      %v2104 = vadd.f32 0.0, %v2103
      %v2105 = vpop.f32.mrb[0].mxu0
      %2106 = vmatprep.mubr.bf16.mxu0 0
      %2107 = vmatmul.mubr.bf16.gmra.mrb[0].mxu0 %v1968
      %v2108 = vpop.f32.mrb[0].mxu0
      %v2109 = vadd.f32 0.0, %v2108
      %v2110 = vpop.f32.mrb[0].mxu0
      %v2111 = vpop.f32.mrb[0].mxu0
      %v2112 = vadd.f32 0.0, %v2111
      %v2113 = vpop.f32.mrb[0].mxu0
      %2114 = vmatprep.mubr.bf16.mxu0 0
      %2115 = vmatmul.mubr.bf16.gmra.mrb[0].mxu0 %v1971
      %v2116 = vpop.f32.mrb[0].mxu0
      %v2117 = vadd.f32 0.0, %v2116
      %v2118 = vpop.f32.mrb[0].mxu0
      %v2119 = vpop.f32.mrb[0].mxu0
      %v2120 = vadd.f32 0.0, %v2119
      %v2121 = vpop.f32.mrb[0].mxu0
      %2122 = vmatprep.mubr.bf16.mxu0 0
      %2123 = vmatmul.mubr.bf16.gmra.mrb[0].mxu0 %v1974
      %v2124 = vpop.f32.mrb[0].mxu0
      %v2125 = vadd.f32 0.0, %v2124
      %v2126 = vpop.f32.mrb[0].mxu0
      %v2127 = vpop.f32.mrb[0].mxu0
      %v2128 = vadd.f32 0.0, %v2127
      %v2129 = vpop.f32.mrb[0].mxu0
      %2130 = vmatprep.mubr.bf16.mxu0 0
      %2131 = vmatmul.mubr.bf16.gmra.mrb[0].mxu0 %v1977
      %v2132 = vpop.f32.mrb[0].mxu0
      %v2133 = vadd.f32 0.0, %v2132
      %v2134 = vpop.f32.mrb[0].mxu0
      %v2135 = vpop.f32.mrb[0].mxu0
      %v2136 = vadd.f32 0.0, %v2135
      %v2137 = vpop.f32.mrb[0].mxu0
      %2138 = vmatprep.mubr.bf16.mxu0 0
      %2139 = vmatmul.mubr.bf16.gmra.mrb[0].mxu0 %v1980
      %v2140 = vpop.f32.mrb[0].mxu0
      %v2141 = vadd.f32 0.0, %v2140
      %v2142 = vpop.f32.mrb[0].mxu0
      %v2143 = vpop.f32.mrb[0].mxu0
      %v2144 = vadd.f32 0.0, %v2143
      %v2145 = vpop.f32.mrb[0].mxu0
      %2146 = vmatprep.mubr.bf16.mxu0 0
      %2147 = vmatmul.mubr.bf16.gmra.mrb[0].mxu0 %v1983
      %v2148 = vpop.f32.mrb[0].mxu0
      %v2149 = vadd.f32 0.0, %v2148
      %v2150 = vpop.f32.mrb[0].mxu0
      %v2151 = vpop.f32.mrb[0].mxu0
      %v2152 = vadd.f32 0.0, %v2151
      %v2153 = vpop.f32.mrb[0].mxu0
      %2154 = vmatprep.mubr.bf16.mxu0 0
      %2155 = vmatmul.mubr.bf16.gmra.mrb[0].mxu0 %v1986
      %v2156 = vpop.f32.mrb[0].mxu0
      %v2157 = vadd.f32 0.0, %v2156
      %v2158 = vpop.f32.mrb[0].mxu0
      %v2159 = vpop.f32.mrb[0].mxu0
      %v2160 = vadd.f32 0.0, %v2159
      %v2161 = vpop.f32.mrb[0].mxu0
      %2162 = vmatprep.mubr.bf16.mxu0 0
      %2163 = vmatmul.mubr.bf16.gmra.mrb[0].mxu0 %v1989
      %v2164 = vpop.f32.mrb[0].mxu0
      %v2165 = vadd.f32 0.0, %v2164
      %v2166 = vpop.f32.mrb[0].mxu0
      %v2167 = vpop.f32.mrb[0].mxu0
      %v2168 = vadd.f32 0.0, %v2167
      %v2169 = vpop.f32.mrb[0].mxu0
      %2170 = vdwg.mxu0
      %v2171 = vadd.f32 %v1725, %v2029
      %v2172 = vadd.f32 %v1726, %v2032
      %v2173 = vadd.f32 %v1727, %v2037
      %v2174 = vadd.f32 %v1728, %v2040
      %v2175 = vadd.f32 %v1729, %v2045
      %v2176 = vadd.f32 %v1730, %v2048
      %v2177 = vadd.f32 %v1731, %v2053
      %v2178 = vadd.f32 %v1732, %v2056
      %v2179 = vadd.f32 %v1733, %v2061
      %v2180 = vadd.f32 %v1734, %v2064
      %v2181 = vadd.f32 %v1735, %v2069
      %v2182 = vadd.f32 %v1736, %v2072
      %v2183 = vadd.f32 %v1737, %v2077
      %v2184 = vadd.f32 %v1738, %v2080
      %v2185 = vadd.f32 %v1739, %v2085
      %v2186 = vadd.f32 %v1740, %v2088
      %v2187 = vadd.f32 %v1741, %v2093
      %v2188 = vadd.f32 %v1742, %v2096
      %v2189 = vadd.f32 %v1743, %v2101
      %v2190 = vadd.f32 %v1744, %v2104
      %v2191 = vadd.f32 %v1745, %v2109
      %v2192 = vadd.f32 %v1746, %v2112
      %v2193 = vadd.f32 %v1747, %v2117
      %v2194 = vadd.f32 %v1748, %v2120
      %v2195 = vadd.f32 %v1749, %v2125
      %v2196 = vadd.f32 %v1750, %v2128
      %v2197 = vadd.f32 %v1751, %v2133
      %v2198 = vadd.f32 %v1752, %v2136
      %v2199 = vadd.f32 %v1753, %v2141
      %v2200 = vadd.f32 %v1754, %v2144
      %v2201 = vadd.f32 %v1755, %v2149
      %v2202 = vadd.f32 %v1756, %v2152
      %v2203 = vadd.f32 %v1757, %v2157
      %v2204 = vadd.f32 %v1758, %v2160
      %v2205 = vadd.f32 %v1759, %v2165
      %v2206 = vadd.f32 %v1760, %v2168
      %v2207 = vld [vmem:[%s243 + $0x8] sm:$0xc]
      %v2208 = vld [vmem:[%s247 + $0x8] sm:$0xc]
      %v2210 = vunpack.c.l.b16 %v2207
      %v2211 = vpack.c.b16 %v1395, %v2210
      %vm2212 = vcmask 1045504
      %v2213 = vrot.slane %v2211, 2
      %v2214 = vrot.slane %v1432, 2
      %v2215 = vsel %vm2212, %v2213, %v2214
      %v2216 = vrot.slane %v1433, 2
      %v2217 = vsel %vm2212, %v2214, %v2216
      %v2218 = vrot.slane %v1434, 2
      %v2219 = vsel %vm2212, %v2216, %v2218
      %v2220 = vrot.slane %v1435, 2
      %v2221 = vsel %vm2212, %v2218, %v2220
      %v2222 = vrot.slane %v1436, 2
      %v2223 = vsel %vm2212, %v2220, %v2222
      %v2224 = vrot.slane %v1437, 2
      %v2225 = vsel %vm2212, %v2222, %v2224
      %v2226 = vrot.slane %v1438, 2
      %v2227 = vsel %vm2212, %v2224, %v2226
      %v2228 = vrot.slane %v1439, 2
      %v2229 = vsel %vm2212, %v2226, %v2228
      %v2230 = vrot.slane %v1440, 2
      %v2231 = vsel %vm2212, %v2228, %v2230
      %v2232 = vrot.slane %v1441, 2
      %v2233 = vsel %vm2212, %v2230, %v2232
      %v2234 = vrot.slane %v1442, 2
      %v2235 = vsel %vm2212, %v2232, %v2234
      %v2236 = vrot.slane %v1443, 2
      %v2237 = vsel %vm2212, %v2234, %v2236
      %v2238 = vrot.slane %v1444, 2
      %v2239 = vsel %vm2212, %v2236, %v2238
      %v2240 = vrot.slane %v1445, 2
      %v2241 = vsel %vm2212, %v2238, %v2240
      %v2242 = vrot.slane %v1446, 2
      %v2243 = vsel %vm2212, %v2240, %v2242
      %v2244 = vrot.slane %v1447, 2
      %v2245 = vsel %vm2212, %v2242, %v2244
      %v2246 = vrot.slane %v1448, 2
      %v2247 = vsel %vm2212, %v2244, %v2246
      %v2248 = vrot.slane %v1765, 2
      %v2249 = vsel %vm2212, %v2246, %v2248
      %v2251 = vunpack.c.l.b16 %v2208
      %v2252 = vpack.c.b16 %v2251, %v2251
      %v2253 = vrot.slane %v2252, 2
      %v2255 = vsel %vm554, %v2215, 0
      %v2258 = vsel %vm554, %v2217, 0
      %v2261 = vsel %vm554, %v2219, 0
      %v2264 = vsel %vm554, %v2221, 0
      %v2267 = vsel %vm554, %v2223, 0
      %v2270 = vsel %vm554, %v2225, 0
      %v2273 = vsel %vm554, %v2227, 0
      %v2276 = vsel %vm554, %v2229, 0
      %v2279 = vsel %vm554, %v2231, 0
      %v2282 = vsel %vm554, %v2233, 0
      %v2285 = vsel %vm554, %v2235, 0
      %v2288 = vsel %vm554, %v2237, 0
      %v2291 = vsel %vm554, %v2239, 0
      %v2294 = vsel %vm554, %v2241, 0
      %v2297 = vsel %vm554, %v2243, 0
      %v2300 = vsel %vm554, %v2245, 0
      %v2303 = vsel %vm554, %v2247, 0
      %v2306 = vsel %vm554, %v2249, 0
      %v2309 = vsel %vm609, %v2253, 0
      %2311 = vmatprep.subr.bf16.mxu0 0
      %2312 = vmatpush1.bf16.msra.mxu0 %v2309
      %2313 = vmatprep.subr.bf16.mxu0 0
      %2314 = vmatpush1.bf16.msra.mxu0 0
      %2315 = vmatprep.subr.bf16.mxu0 0
      %2316 = vmatpush1.bf16.msra.mxu0 0
      %2317 = vmatprep.subr.bf16.mxu0 0
      %2318 = vmatpush1.bf16.msra.mxu0 0
      %2319 = vmatprep.subr.bf16.mxu0 0
      %2320 = vmatpush1.bf16.msra.mxu0 0
      %2321 = vmatprep.subr.bf16.mxu0 0
      %2322 = vmatpush1.bf16.msra.mxu0 0
      %2323 = vmatprep.subr.bf16.mxu0 0
      %2324 = vmatpush1.bf16.msra.mxu0 0
      %2325 = vmatprep.subr.bf16.mxu0 0
      %2326 = vmatpush1.bf16.msra.mxu0 0
      %2327 = vmatprep.subr.bf16.mxu0 0
      %2328 = vmatpush1.bf16.msra.mxu0 0
      %2329 = vmatprep.subr.bf16.mxu0 0
      %2330 = vmatpush1.bf16.msra.mxu0 0
      %2331 = vmatprep.subr.bf16.mxu0 0
      %2332 = vmatpush1.bf16.msra.mxu0 0
      %2333 = vmatprep.subr.bf16.mxu0 0
      %2334 = vmatpush1.bf16.msra.mxu0 0
      %2335 = vmatprep.subr.bf16.mxu0 0
      %2336 = vmatpush1.bf16.msra.mxu0 0
      %2337 = vmatprep.subr.bf16.mxu0 0
      %2338 = vmatpush1.bf16.msra.mxu0 0
      %2339 = vmatprep.subr.bf16.mxu0 0
      %2340 = vmatpush1.bf16.msra.mxu0 0
      %2341 = vmatprep.subr.bf16.mxu0 0
      %2342 = vmatpush1.bf16.msra.mxu0 0
      %2343 = vmatprep.mubr.bf16.mxu0 0
      %2344 = vmatmul.mubr.bf16.gmra.mrb[0].mxu0 %v2255
      %v2345 = vpop.f32.mrb[0].mxu0
      %v2346 = vadd.f32 0.0, %v2345
      %v2347 = vpop.f32.mrb[0].mxu0
      %v2348 = vpop.f32.mrb[0].mxu0
      %v2349 = vadd.f32 0.0, %v2348
      %v2350 = vpop.f32.mrb[0].mxu0
      %2351 = vmatprep.mubr.bf16.mxu0 0
      %2352 = vmatmul.mubr.bf16.gmra.mrb[0].mxu0 %v2258
      %v2353 = vpop.f32.mrb[0].mxu0
      %v2354 = vadd.f32 0.0, %v2353
      %v2355 = vpop.f32.mrb[0].mxu0
      %v2356 = vpop.f32.mrb[0].mxu0
      %v2357 = vadd.f32 0.0, %v2356
      %v2358 = vpop.f32.mrb[0].mxu0
      %2359 = vmatprep.mubr.bf16.mxu0 0
      %2360 = vmatmul.mubr.bf16.gmra.mrb[0].mxu0 %v2261
      %v2361 = vpop.f32.mrb[0].mxu0
      %v2362 = vadd.f32 0.0, %v2361
      %v2363 = vpop.f32.mrb[0].mxu0
      %v2364 = vpop.f32.mrb[0].mxu0
      %v2365 = vadd.f32 0.0, %v2364
      %v2366 = vpop.f32.mrb[0].mxu0
      %2367 = vmatprep.mubr.bf16.mxu0 0
      %2368 = vmatmul.mubr.bf16.gmra.mrb[0].mxu0 %v2264
      %v2369 = vpop.f32.mrb[0].mxu0
      %v2370 = vadd.f32 0.0, %v2369
      %v2371 = vpop.f32.mrb[0].mxu0
      %v2372 = vpop.f32.mrb[0].mxu0
      %v2373 = vadd.f32 0.0, %v2372
      %v2374 = vpop.f32.mrb[0].mxu0
      %2375 = vmatprep.mubr.bf16.mxu0 0
      %2376 = vmatmul.mubr.bf16.gmra.mrb[0].mxu0 %v2267
      %v2377 = vpop.f32.mrb[0].mxu0
      %v2378 = vadd.f32 0.0, %v2377
      %v2379 = vpop.f32.mrb[0].mxu0
      %v2380 = vpop.f32.mrb[0].mxu0
      %v2381 = vadd.f32 0.0, %v2380
      %v2382 = vpop.f32.mrb[0].mxu0
      %2383 = vmatprep.mubr.bf16.mxu0 0
      %2384 = vmatmul.mubr.bf16.gmra.mrb[0].mxu0 %v2270
      %v2385 = vpop.f32.mrb[0].mxu0
      %v2386 = vadd.f32 0.0, %v2385
      %v2387 = vpop.f32.mrb[0].mxu0
      %v2388 = vpop.f32.mrb[0].mxu0
      %v2389 = vadd.f32 0.0, %v2388
      %v2390 = vpop.f32.mrb[0].mxu0
      %2391 = vmatprep.mubr.bf16.mxu0 0
      %2392 = vmatmul.mubr.bf16.gmra.mrb[0].mxu0 %v2273
      %v2393 = vpop.f32.mrb[0].mxu0
      %v2394 = vadd.f32 0.0, %v2393
      %v2395 = vpop.f32.mrb[0].mxu0
      %v2396 = vpop.f32.mrb[0].mxu0
      %v2397 = vadd.f32 0.0, %v2396
      %v2398 = vpop.f32.mrb[0].mxu0
      %2399 = vmatprep.mubr.bf16.mxu0 0
      %2400 = vmatmul.mubr.bf16.gmra.mrb[0].mxu0 %v2276
      %v2401 = vpop.f32.mrb[0].mxu0
      %v2402 = vadd.f32 0.0, %v2401
      %v2403 = vpop.f32.mrb[0].mxu0
      %v2404 = vpop.f32.mrb[0].mxu0
      %v2405 = vadd.f32 0.0, %v2404
      %v2406 = vpop.f32.mrb[0].mxu0
      %2407 = vmatprep.mubr.bf16.mxu0 0
      %2408 = vmatmul.mubr.bf16.gmra.mrb[0].mxu0 %v2279
      %v2409 = vpop.f32.mrb[0].mxu0
      %v2410 = vadd.f32 0.0, %v2409
      %v2411 = vpop.f32.mrb[0].mxu0
      %v2412 = vpop.f32.mrb[0].mxu0
      %v2413 = vadd.f32 0.0, %v2412
      %v2414 = vpop.f32.mrb[0].mxu0
      %2415 = vmatprep.mubr.bf16.mxu0 0
      %2416 = vmatmul.mubr.bf16.gmra.mrb[0].mxu0 %v2282
      %v2417 = vpop.f32.mrb[0].mxu0
      %v2418 = vadd.f32 0.0, %v2417
      %v2419 = vpop.f32.mrb[0].mxu0
      %v2420 = vpop.f32.mrb[0].mxu0
      %v2421 = vadd.f32 0.0, %v2420
      %v2422 = vpop.f32.mrb[0].mxu0
      %2423 = vmatprep.mubr.bf16.mxu0 0
      %2424 = vmatmul.mubr.bf16.gmra.mrb[0].mxu0 %v2285
      %v2425 = vpop.f32.mrb[0].mxu0
      %v2426 = vadd.f32 0.0, %v2425
      %v2427 = vpop.f32.mrb[0].mxu0
      %v2428 = vpop.f32.mrb[0].mxu0
      %v2429 = vadd.f32 0.0, %v2428
      %v2430 = vpop.f32.mrb[0].mxu0
      %2431 = vmatprep.mubr.bf16.mxu0 0
      %2432 = vmatmul.mubr.bf16.gmra.mrb[0].mxu0 %v2288
      %v2433 = vpop.f32.mrb[0].mxu0
      %v2434 = vadd.f32 0.0, %v2433
      %v2435 = vpop.f32.mrb[0].mxu0
      %v2436 = vpop.f32.mrb[0].mxu0
      %v2437 = vadd.f32 0.0, %v2436
      %v2438 = vpop.f32.mrb[0].mxu0
      %2439 = vmatprep.mubr.bf16.mxu0 0
      %2440 = vmatmul.mubr.bf16.gmra.mrb[0].mxu0 %v2291
      %v2441 = vpop.f32.mrb[0].mxu0
      %v2442 = vadd.f32 0.0, %v2441
      %v2443 = vpop.f32.mrb[0].mxu0
      %v2444 = vpop.f32.mrb[0].mxu0
      %v2445 = vadd.f32 0.0, %v2444
      %v2446 = vpop.f32.mrb[0].mxu0
      %2447 = vmatprep.mubr.bf16.mxu0 0
      %2448 = vmatmul.mubr.bf16.gmra.mrb[0].mxu0 %v2294
      %v2449 = vpop.f32.mrb[0].mxu0
      %v2450 = vadd.f32 0.0, %v2449
      %v2451 = vpop.f32.mrb[0].mxu0
      %v2452 = vpop.f32.mrb[0].mxu0
      %v2453 = vadd.f32 0.0, %v2452
      %v2454 = vpop.f32.mrb[0].mxu0
      %2455 = vmatprep.mubr.bf16.mxu0 0
      %2456 = vmatmul.mubr.bf16.gmra.mrb[0].mxu0 %v2297
      %v2457 = vpop.f32.mrb[0].mxu0
      %v2458 = vadd.f32 0.0, %v2457
      %v2459 = vpop.f32.mrb[0].mxu0
      %v2460 = vpop.f32.mrb[0].mxu0
      %v2461 = vadd.f32 0.0, %v2460
      %v2462 = vpop.f32.mrb[0].mxu0
      %2463 = vmatprep.mubr.bf16.mxu0 0
      %2464 = vmatmul.mubr.bf16.gmra.mrb[0].mxu0 %v2300
      %v2465 = vpop.f32.mrb[0].mxu0
      %v2466 = vadd.f32 0.0, %v2465
      %v2467 = vpop.f32.mrb[0].mxu0
      %v2468 = vpop.f32.mrb[0].mxu0
      %v2469 = vadd.f32 0.0, %v2468
      %v2470 = vpop.f32.mrb[0].mxu0
      %2471 = vmatprep.mubr.bf16.mxu0 0
      %2472 = vmatmul.mubr.bf16.gmra.mrb[0].mxu0 %v2303
      %v2473 = vpop.f32.mrb[0].mxu0
      %v2474 = vadd.f32 0.0, %v2473
      %v2475 = vpop.f32.mrb[0].mxu0
      %v2476 = vpop.f32.mrb[0].mxu0
      %v2477 = vadd.f32 0.0, %v2476
      %v2478 = vpop.f32.mrb[0].mxu0
      %2479 = vmatprep.mubr.bf16.mxu0 0
      %2480 = vmatmul.mubr.bf16.gmra.mrb[0].mxu0 %v2306
      %v2481 = vpop.f32.mrb[0].mxu0
      %v2482 = vadd.f32 0.0, %v2481
      %v2483 = vpop.f32.mrb[0].mxu0
      %v2484 = vpop.f32.mrb[0].mxu0
      %v2485 = vadd.f32 0.0, %v2484
      %v2486 = vpop.f32.mrb[0].mxu0
      %2487 = vdwg.mxu0
      %v2488 = vadd.f32 %v2171, %v2346
      %v2489 = vadd.f32 %v2172, %v2349
      %v2490 = vadd.f32 %v2173, %v2354
      %v2491 = vadd.f32 %v2174, %v2357
      %v2492 = vadd.f32 %v2175, %v2362
      %v2493 = vadd.f32 %v2176, %v2365
      %v2494 = vadd.f32 %v2177, %v2370
      %v2495 = vadd.f32 %v2178, %v2373
      %v2496 = vadd.f32 %v2179, %v2378
      %v2497 = vadd.f32 %v2180, %v2381
      %v2498 = vadd.f32 %v2181, %v2386
      %v2499 = vadd.f32 %v2182, %v2389
      %v2500 = vadd.f32 %v2183, %v2394
      %v2501 = vadd.f32 %v2184, %v2397
      %v2502 = vadd.f32 %v2185, %v2402
      %v2503 = vadd.f32 %v2186, %v2405
      %v2504 = vadd.f32 %v2187, %v2410
      %v2505 = vadd.f32 %v2188, %v2413
      %v2506 = vadd.f32 %v2189, %v2418
      %v2507 = vadd.f32 %v2190, %v2421
      %v2508 = vadd.f32 %v2191, %v2426
      %v2509 = vadd.f32 %v2192, %v2429
      %v2510 = vadd.f32 %v2193, %v2434
      %v2511 = vadd.f32 %v2194, %v2437
      %v2512 = vadd.f32 %v2195, %v2442
      %v2513 = vadd.f32 %v2196, %v2445
      %v2514 = vadd.f32 %v2197, %v2450
      %v2515 = vadd.f32 %v2198, %v2453
      %v2516 = vadd.f32 %v2199, %v2458
      %v2517 = vadd.f32 %v2200, %v2461
      %v2518 = vadd.f32 %v2201, %v2466
      %v2519 = vadd.f32 %v2202, %v2469
      %v2520 = vadd.f32 %v2203, %v2474
      %v2521 = vadd.f32 %v2204, %v2477
      %v2522 = vadd.f32 %v2205, %v2482
      %v2523 = vadd.f32 %v2206, %v2485
      %v2524 = vld [vmem:[%s243 + $0x10] sm:$0xc]
      %v2525 = vld [vmem:[%s243 + $0x14] sm:$0xf]
      %v2526 = vld [vmem:[%s243 + $0x18] sm:$0xf]
      %v2527 = vld [vmem:[%s243 + $0x1c] sm:$0xf]
      %v2528 = vld [vmem:[%s243 + $0x20] sm:$0xf]
      %v2529 = vld [vmem:[%s243 + $0x24] sm:$0xf]
      %v2530 = vld [vmem:[%s243 + $0x28] sm:$0xf]
      %v2531 = vld [vmem:[%s243 + $0x2c] sm:$0xf]
      %v2532 = vld [vmem:[%s243 + $0x30] sm:$0xf]
      %v2533 = vld [vmem:[%s243 + $0x34] sm:$0xf]
      %v2534 = vld [vmem:[%s243 + $0x38] sm:$0xf]
      %v2535 = vld [vmem:[%s243 + $0x3c] sm:$0xf]
      %v2536 = vld [vmem:[%s243 + $0x40] sm:$0xf]
      %v2537 = vld [vmem:[%s243 + $0x44] sm:$0xf]
      %v2538 = vld [vmem:[%s243 + $0x48] sm:$0xf]
      %v2539 = vld [vmem:[%s243 + $0x4c] sm:$0xf]
      %v2540 = vld [vmem:[%s243 + $0x50] sm:$0xf]
      %v2541 = vld [vmem:[%s243 + $0x54] sm:$0xf]
      %v2542 = vld [vmem:[%s243 + $0x58] sm:$0xf]
      %v2543 = vld [vmem:[%s243 + $0x5c] sm:$0xf]
      %v2544 = vld [vmem:[%s243 + $0x60] sm:$0xf]
      %v2545 = vld [vmem:[%s243 + $0x64] sm:$0xf]
      %v2546 = vld [vmem:[%s243 + $0x68] sm:$0xf]
      %v2547 = vld [vmem:[%s243 + $0x6c] sm:$0xf]
      %v2548 = vld [vmem:[%s243 + $0x70] sm:$0xf]
      %v2549 = vld [vmem:[%s243 + $0x74] sm:$0xf]
      %v2550 = vld [vmem:[%s243 + $0x78] sm:$0xf]
      %v2551 = vld [vmem:[%s243 + $0x7c] sm:$0xf]
      %v2552 = vld [vmem:[%s243 + $0x80] sm:$0xf]
      %v2553 = vld [vmem:[%s243 + $0x84] sm:$0xf]
      %v2554 = vld [vmem:[%s243 + $0x88] sm:$0xf]
      %v2555 = vld [vmem:[%s243 + $0x8c] sm:$0xf]
      %v2556 = vld [vmem:[%s243 + $0x90] sm:$0xf]
      %v2557 = vld [vmem:[%s243 + $0x94] sm:$0xf]
      %v2558 = vld [vmem:[%s243 + $0x98] sm:$0xf]
      %v2559 = vld [vmem:[%s243 + $0x9c] sm:$0xf]
      %v2560 = vld [vmem:[%s243 + $0xa0] sm:$0x3]
      %v2561 = vld [vmem:[%s247 + $0xc] sm:$0x3]
      %v2599 = vunpack.c.l.b16 %v2524
      %v2600 = vunpack.c.l.b16 %v2525
      %v2601 = vunpack.c.l.b16 %v2526
      %v2602 = vunpack.c.l.b16 %v2527
      %v2603 = vunpack.c.l.b16 %v2528
      %v2604 = vunpack.c.l.b16 %v2529
      %v2605 = vunpack.c.l.b16 %v2530
      %v2606 = vunpack.c.l.b16 %v2531
      %v2607 = vunpack.c.l.b16 %v2532
      %v2608 = vunpack.c.l.b16 %v2533
      %v2609 = vunpack.c.l.b16 %v2534
      %v2610 = vunpack.c.l.b16 %v2535
      %v2611 = vunpack.c.l.b16 %v2536
      %v2612 = vunpack.c.l.b16 %v2537
      %v2613 = vunpack.c.l.b16 %v2538
      %v2614 = vunpack.c.l.b16 %v2539
      %v2615 = vunpack.c.l.b16 %v2540
      %v2616 = vunpack.c.l.b16 %v2541
      %v2617 = vunpack.c.l.b16 %v2542
      %v2618 = vunpack.c.l.b16 %v2543
      %v2619 = vunpack.c.l.b16 %v2544
      %v2620 = vunpack.c.l.b16 %v2545
      %v2621 = vunpack.c.l.b16 %v2546
      %v2622 = vunpack.c.l.b16 %v2547
      %v2623 = vunpack.c.l.b16 %v2548
      %v2624 = vunpack.c.l.b16 %v2549
      %v2625 = vunpack.c.l.b16 %v2550
      %v2626 = vunpack.c.l.b16 %v2551
      %v2627 = vunpack.c.l.b16 %v2552
      %v2628 = vunpack.c.l.b16 %v2553
      %v2629 = vunpack.c.l.b16 %v2554
      %v2630 = vunpack.c.l.b16 %v2555
      %v2631 = vunpack.c.l.b16 %v2556
      %v2632 = vunpack.c.l.b16 %v2557
      %v2633 = vunpack.c.l.b16 %v2558
      %v2634 = vunpack.c.l.b16 %v2559
      %v2635 = vunpack.c.l.b16 %v2560
      %v2636 = vpack.c.b16 %v2600, %v2599
      %v2637 = vpack.c.b16 %v2602, %v2601
      %v2638 = vpack.c.b16 %v2604, %v2603
      %v2639 = vpack.c.b16 %v2606, %v2605
      %v2640 = vpack.c.b16 %v2608, %v2607
      %v2641 = vpack.c.b16 %v2610, %v2609
      %v2642 = vpack.c.b16 %v2612, %v2611
      %v2643 = vpack.c.b16 %v2614, %v2613
      %v2644 = vpack.c.b16 %v2616, %v2615
      %v2645 = vpack.c.b16 %v2618, %v2617
      %v2646 = vpack.c.b16 %v2620, %v2619
      %v2647 = vpack.c.b16 %v2622, %v2621
      %v2648 = vpack.c.b16 %v2624, %v2623
      %v2649 = vpack.c.b16 %v2626, %v2625
      %v2650 = vpack.c.b16 %v2628, %v2627
      %v2651 = vpack.c.b16 %v2630, %v2629
      %v2652 = vpack.c.b16 %v2632, %v2631
      %v2653 = vpack.c.b16 %v2634, %v2633
      %v2654 = vpack.c.b16 %v2635, %v2635
      %v2655 = vrot.slane %v2636, 2
      %v2656 = vrot.slane %v2637, 2
      %v2657 = vsel %vm2212, %v2655, %v2656
      %v2658 = vrot.slane %v2638, 2
      %v2659 = vsel %vm2212, %v2656, %v2658
      %v2660 = vrot.slane %v2639, 2
      %v2661 = vsel %vm2212, %v2658, %v2660
      %v2662 = vrot.slane %v2640, 2
      %v2663 = vsel %vm2212, %v2660, %v2662
      %v2664 = vrot.slane %v2641, 2
      %v2665 = vsel %vm2212, %v2662, %v2664
      %v2666 = vrot.slane %v2642, 2
      %v2667 = vsel %vm2212, %v2664, %v2666
      %v2668 = vrot.slane %v2643, 2
      %v2669 = vsel %vm2212, %v2666, %v2668
      %v2670 = vrot.slane %v2644, 2
      %v2671 = vsel %vm2212, %v2668, %v2670
      %v2672 = vrot.slane %v2645, 2
      %v2673 = vsel %vm2212, %v2670, %v2672
      %v2674 = vrot.slane %v2646, 2
      %v2675 = vsel %vm2212, %v2672, %v2674
      %v2676 = vrot.slane %v2647, 2
      %v2677 = vsel %vm2212, %v2674, %v2676
      %v2678 = vrot.slane %v2648, 2
      %v2679 = vsel %vm2212, %v2676, %v2678
      %v2680 = vrot.slane %v2649, 2
      %v2681 = vsel %vm2212, %v2678, %v2680
      %v2682 = vrot.slane %v2650, 2
      %v2683 = vsel %vm2212, %v2680, %v2682
      %v2684 = vrot.slane %v2651, 2
      %v2685 = vsel %vm2212, %v2682, %v2684
      %v2686 = vrot.slane %v2652, 2
      %v2687 = vsel %vm2212, %v2684, %v2686
      %v2688 = vrot.slane %v2653, 2
      %v2689 = vsel %vm2212, %v2686, %v2688
      %v2690 = vrot.slane %v2654, 2
      %v2691 = vsel %vm2212, %v2688, %v2690
      %v2693 = vsel %vm554, %v2657, 0
      %v2696 = vsel %vm554, %v2659, 0
      %v2699 = vsel %vm554, %v2661, 0
      %v2702 = vsel %vm554, %v2663, 0
      %v2705 = vsel %vm554, %v2665, 0
      %v2708 = vsel %vm554, %v2667, 0
      %v2711 = vsel %vm554, %v2669, 0
      %v2714 = vsel %vm554, %v2671, 0
      %v2717 = vsel %vm554, %v2673, 0
      %v2720 = vsel %vm554, %v2675, 0
      %v2723 = vsel %vm554, %v2677, 0
      %v2726 = vsel %vm554, %v2679, 0
      %v2729 = vsel %vm554, %v2681, 0
      %v2732 = vsel %vm554, %v2683, 0
      %v2735 = vsel %vm554, %v2685, 0
      %v2738 = vsel %vm554, %v2687, 0
      %v2741 = vsel %vm554, %v2689, 0
      %v2744 = vsel %vm554, %v2691, 0
      %v2747 = vsel %vm609, %v2561, 0
      %2749 = vmatprep.subr.bf16.mxu0 0
      %2750 = vmatpush1.bf16.msra.mxu0 %v2747
      %2751 = vmatprep.subr.bf16.mxu0 0
      %2752 = vmatpush1.bf16.msra.mxu0 0
      %2753 = vmatprep.subr.bf16.mxu0 0
      %2754 = vmatpush1.bf16.msra.mxu0 0
      %2755 = vmatprep.subr.bf16.mxu0 0
      %2756 = vmatpush1.bf16.msra.mxu0 0
      %2757 = vmatprep.subr.bf16.mxu0 0
      %2758 = vmatpush1.bf16.msra.mxu0 0
      %2759 = vmatprep.subr.bf16.mxu0 0
      %2760 = vmatpush1.bf16.msra.mxu0 0
      %2761 = vmatprep.subr.bf16.mxu0 0
      %2762 = vmatpush1.bf16.msra.mxu0 0
      %2763 = vmatprep.subr.bf16.mxu0 0
      %2764 = vmatpush1.bf16.msra.mxu0 0
      %2765 = vmatprep.subr.bf16.mxu0 0
      %2766 = vmatpush1.bf16.msra.mxu0 0
      %2767 = vmatprep.subr.bf16.mxu0 0
      %2768 = vmatpush1.bf16.msra.mxu0 0
      %2769 = vmatprep.subr.bf16.mxu0 0
      %2770 = vmatpush1.bf16.msra.mxu0 0
      %2771 = vmatprep.subr.bf16.mxu0 0
      %2772 = vmatpush1.bf16.msra.mxu0 0
      %2773 = vmatprep.subr.bf16.mxu0 0
      %2774 = vmatpush1.bf16.msra.mxu0 0
      %2775 = vmatprep.subr.bf16.mxu0 0
      %2776 = vmatpush1.bf16.msra.mxu0 0
      %2777 = vmatprep.subr.bf16.mxu0 0
      %2778 = vmatpush1.bf16.msra.mxu0 0
      %2779 = vmatprep.subr.bf16.mxu0 0
      %2780 = vmatpush1.bf16.msra.mxu0 0
      %2781 = vmatprep.mubr.bf16.mxu0 0
      %2782 = vmatmul.mubr.bf16.gmra.mrb[0].mxu0 %v2693
      %v2783 = vpop.f32.mrb[0].mxu0
      %v2784 = vadd.f32 0.0, %v2783
      %v2785 = vpop.f32.mrb[0].mxu0
      %v2786 = vpop.f32.mrb[0].mxu0
      %v2787 = vadd.f32 0.0, %v2786
      %v2788 = vpop.f32.mrb[0].mxu0
      %2789 = vmatprep.mubr.bf16.mxu0 0
      %2790 = vmatmul.mubr.bf16.gmra.mrb[0].mxu0 %v2696
      %v2791 = vpop.f32.mrb[0].mxu0
      %v2792 = vadd.f32 0.0, %v2791
      %v2793 = vpop.f32.mrb[0].mxu0
      %v2794 = vpop.f32.mrb[0].mxu0
      %v2795 = vadd.f32 0.0, %v2794
      %v2796 = vpop.f32.mrb[0].mxu0
      %2797 = vmatprep.mubr.bf16.mxu0 0
      %2798 = vmatmul.mubr.bf16.gmra.mrb[0].mxu0 %v2699
      %v2799 = vpop.f32.mrb[0].mxu0
      %v2800 = vadd.f32 0.0, %v2799
      %v2801 = vpop.f32.mrb[0].mxu0
      %v2802 = vpop.f32.mrb[0].mxu0
      %v2803 = vadd.f32 0.0, %v2802
      %v2804 = vpop.f32.mrb[0].mxu0
      %2805 = vmatprep.mubr.bf16.mxu0 0
      %2806 = vmatmul.mubr.bf16.gmra.mrb[0].mxu0 %v2702
      %v2807 = vpop.f32.mrb[0].mxu0
      %v2808 = vadd.f32 0.0, %v2807
      %v2809 = vpop.f32.mrb[0].mxu0
      %v2810 = vpop.f32.mrb[0].mxu0
      %v2811 = vadd.f32 0.0, %v2810
      %v2812 = vpop.f32.mrb[0].mxu0
      %2813 = vmatprep.mubr.bf16.mxu0 0
      %2814 = vmatmul.mubr.bf16.gmra.mrb[0].mxu0 %v2705
      %v2815 = vpop.f32.mrb[0].mxu0
      %v2816 = vadd.f32 0.0, %v2815
      %v2817 = vpop.f32.mrb[0].mxu0
      %v2818 = vpop.f32.mrb[0].mxu0
      %v2819 = vadd.f32 0.0, %v2818
      %v2820 = vpop.f32.mrb[0].mxu0
      %2821 = vmatprep.mubr.bf16.mxu0 0
      %2822 = vmatmul.mubr.bf16.gmra.mrb[0].mxu0 %v2708
      %v2823 = vpop.f32.mrb[0].mxu0
      %v2824 = vadd.f32 0.0, %v2823
      %v2825 = vpop.f32.mrb[0].mxu0
      %v2826 = vpop.f32.mrb[0].mxu0
      %v2827 = vadd.f32 0.0, %v2826
      %v2828 = vpop.f32.mrb[0].mxu0
      %2829 = vmatprep.mubr.bf16.mxu0 0
      %2830 = vmatmul.mubr.bf16.gmra.mrb[0].mxu0 %v2711
      %v2831 = vpop.f32.mrb[0].mxu0
      %v2832 = vadd.f32 0.0, %v2831
      %v2833 = vpop.f32.mrb[0].mxu0
      %v2834 = vpop.f32.mrb[0].mxu0
      %v2835 = vadd.f32 0.0, %v2834
      %v2836 = vpop.f32.mrb[0].mxu0
      %2837 = vmatprep.mubr.bf16.mxu0 0
      %2838 = vmatmul.mubr.bf16.gmra.mrb[0].mxu0 %v2714
      %v2839 = vpop.f32.mrb[0].mxu0
      %v2840 = vadd.f32 0.0, %v2839
      %v2841 = vpop.f32.mrb[0].mxu0
      %v2842 = vpop.f32.mrb[0].mxu0
      %v2843 = vadd.f32 0.0, %v2842
      %v2844 = vpop.f32.mrb[0].mxu0
      %2845 = vmatprep.mubr.bf16.mxu0 0
      %2846 = vmatmul.mubr.bf16.gmra.mrb[0].mxu0 %v2717
      %v2847 = vpop.f32.mrb[0].mxu0
      %v2848 = vadd.f32 0.0, %v2847
      %v2849 = vpop.f32.mrb[0].mxu0
      %v2850 = vpop.f32.mrb[0].mxu0
      %v2851 = vadd.f32 0.0, %v2850
      %v2852 = vpop.f32.mrb[0].mxu0
      %2853 = vmatprep.mubr.bf16.mxu0 0
      %2854 = vmatmul.mubr.bf16.gmra.mrb[0].mxu0 %v2720
      %v2855 = vpop.f32.mrb[0].mxu0
      %v2856 = vadd.f32 0.0, %v2855
      %v2857 = vpop.f32.mrb[0].mxu0
      %v2858 = vpop.f32.mrb[0].mxu0
      %v2859 = vadd.f32 0.0, %v2858
      %v2860 = vpop.f32.mrb[0].mxu0
      %2861 = vmatprep.mubr.bf16.mxu0 0
      %2862 = vmatmul.mubr.bf16.gmra.mrb[0].mxu0 %v2723
      %v2863 = vpop.f32.mrb[0].mxu0
      %v2864 = vadd.f32 0.0, %v2863
      %v2865 = vpop.f32.mrb[0].mxu0
      %v2866 = vpop.f32.mrb[0].mxu0
      %v2867 = vadd.f32 0.0, %v2866
      %v2868 = vpop.f32.mrb[0].mxu0
      %2869 = vmatprep.mubr.bf16.mxu0 0
      %2870 = vmatmul.mubr.bf16.gmra.mrb[0].mxu0 %v2726
      %v2871 = vpop.f32.mrb[0].mxu0
      %v2872 = vadd.f32 0.0, %v2871
      %v2873 = vpop.f32.mrb[0].mxu0
      %v2874 = vpop.f32.mrb[0].mxu0
      %v2875 = vadd.f32 0.0, %v2874
      %v2876 = vpop.f32.mrb[0].mxu0
      %2877 = vmatprep.mubr.bf16.mxu0 0
      %2878 = vmatmul.mubr.bf16.gmra.mrb[0].mxu0 %v2729
      %v2879 = vpop.f32.mrb[0].mxu0
      %v2880 = vadd.f32 0.0, %v2879
      %v2881 = vpop.f32.mrb[0].mxu0
      %v2882 = vpop.f32.mrb[0].mxu0
      %v2883 = vadd.f32 0.0, %v2882
      %v2884 = vpop.f32.mrb[0].mxu0
      %2885 = vmatprep.mubr.bf16.mxu0 0
      %2886 = vmatmul.mubr.bf16.gmra.mrb[0].mxu0 %v2732
      %v2887 = vpop.f32.mrb[0].mxu0
      %v2888 = vadd.f32 0.0, %v2887
      %v2889 = vpop.f32.mrb[0].mxu0
      %v2890 = vpop.f32.mrb[0].mxu0
      %v2891 = vadd.f32 0.0, %v2890
      %v2892 = vpop.f32.mrb[0].mxu0
      %2893 = vmatprep.mubr.bf16.mxu0 0
      %2894 = vmatmul.mubr.bf16.gmra.mrb[0].mxu0 %v2735
      %v2895 = vpop.f32.mrb[0].mxu0
      %v2896 = vadd.f32 0.0, %v2895
      %v2897 = vpop.f32.mrb[0].mxu0
      %v2898 = vpop.f32.mrb[0].mxu0
      %v2899 = vadd.f32 0.0, %v2898
      %v2900 = vpop.f32.mrb[0].mxu0
      %2901 = vmatprep.mubr.bf16.mxu0 0
      %2902 = vmatmul.mubr.bf16.gmra.mrb[0].mxu0 %v2738
      %v2903 = vpop.f32.mrb[0].mxu0
      %v2904 = vadd.f32 0.0, %v2903
      %v2905 = vpop.f32.mrb[0].mxu0
      %v2906 = vpop.f32.mrb[0].mxu0
      %v2907 = vadd.f32 0.0, %v2906
      %v2908 = vpop.f32.mrb[0].mxu0
      %2909 = vmatprep.mubr.bf16.mxu0 0
      %2910 = vmatmul.mubr.bf16.gmra.mrb[0].mxu0 %v2741
      %v2911 = vpop.f32.mrb[0].mxu0
      %v2912 = vadd.f32 0.0, %v2911
      %v2913 = vpop.f32.mrb[0].mxu0
      %v2914 = vpop.f32.mrb[0].mxu0
      %v2915 = vadd.f32 0.0, %v2914
      %v2916 = vpop.f32.mrb[0].mxu0
      %2917 = vmatprep.mubr.bf16.mxu0 0
      %2918 = vmatmul.mubr.bf16.gmra.mrb[0].mxu0 %v2744
      %v2919 = vpop.f32.mrb[0].mxu0
      %v2920 = vadd.f32 0.0, %v2919
      %v2921 = vpop.f32.mrb[0].mxu0
      %v2922 = vpop.f32.mrb[0].mxu0
      %v2923 = vadd.f32 0.0, %v2922
      %v2924 = vpop.f32.mrb[0].mxu0
      %2925 = vdwg.mxu0
      %v2926 = vadd.f32 %v2488, %v2784
      %v2927 = vadd.f32 %v2489, %v2787
      %v2928 = vadd.f32 %v2490, %v2792
      %v2929 = vadd.f32 %v2491, %v2795
      %v2930 = vadd.f32 %v2492, %v2800
      %v2931 = vadd.f32 %v2493, %v2803
      %v2932 = vadd.f32 %v2494, %v2808
      %v2933 = vadd.f32 %v2495, %v2811
      %v2934 = vadd.f32 %v2496, %v2816
      %v2935 = vadd.f32 %v2497, %v2819
      %v2936 = vadd.f32 %v2498, %v2824
      %v2937 = vadd.f32 %v2499, %v2827
      %v2938 = vadd.f32 %v2500, %v2832
      %v2939 = vadd.f32 %v2501, %v2835
      %v2940 = vadd.f32 %v2502, %v2840
      %v2941 = vadd.f32 %v2503, %v2843
      %v2942 = vadd.f32 %v2504, %v2848
      %v2943 = vadd.f32 %v2505, %v2851
      %v2944 = vadd.f32 %v2506, %v2856
      %v2945 = vadd.f32 %v2507, %v2859
      %v2946 = vadd.f32 %v2508, %v2864
      %v2947 = vadd.f32 %v2509, %v2867
      %v2948 = vadd.f32 %v2510, %v2872
      %v2949 = vadd.f32 %v2511, %v2875
      %v2950 = vadd.f32 %v2512, %v2880
      %v2951 = vadd.f32 %v2513, %v2883
      %v2952 = vadd.f32 %v2514, %v2888
      %v2953 = vadd.f32 %v2515, %v2891
      %v2954 = vadd.f32 %v2516, %v2896
      %v2955 = vadd.f32 %v2517, %v2899
      %v2956 = vadd.f32 %v2518, %v2904
      %v2957 = vadd.f32 %v2519, %v2907
      %v2958 = vadd.f32 %v2520, %v2912
      %v2959 = vadd.f32 %v2521, %v2915
      %v2960 = vadd.f32 %v2522, %v2920
      %v2961 = vadd.f32 %v2523, %v2923
      %v2962 = vld [vmem:[%s243 + $0xa0] sm:$0x7]
      %v2963 = vld [vmem:[%s247 + $0xc] sm:$0xc]
      %v2965 = vunpack.c.l.b16 %v2962
      %v2966 = vpack.c.b16 %v2965, %v2965
      %vm2967 = vsmask.f32 5376
      %v2969 = vshrl.u32 %v2636, 16
      %v2971 = vrot.slane %v2969, 2
      %v2972 = vshll.u32 %v2636, 16
      %v2974 = vrot.slane %v2972, 3
      %v2975 = vor.u32 %v2971, %v2974
      %v2977 = vshrl.u32 %v2637, 16
      %v2979 = vrot.slane %v2977, 2
      %v2980 = vshll.u32 %v2637, 16
      %v2982 = vrot.slane %v2980, 3
      %v2983 = vor.u32 %v2979, %v2982
      %v2984 = vsel %vm2967, %v2975, %v2983
      %v2986 = vshrl.u32 %v2638, 16
      %v2988 = vrot.slane %v2986, 2
      %v2989 = vshll.u32 %v2638, 16
      %v2991 = vrot.slane %v2989, 3
      %v2992 = vor.u32 %v2988, %v2991
      %v2993 = vsel %vm2967, %v2983, %v2992
      %v2995 = vshrl.u32 %v2639, 16
      %v2997 = vrot.slane %v2995, 2
      %v2998 = vshll.u32 %v2639, 16
      %v3000 = vrot.slane %v2998, 3
      %v3001 = vor.u32 %v2997, %v3000
      %v3002 = vsel %vm2967, %v2992, %v3001
      %v3004 = vshrl.u32 %v2640, 16
      %v3006 = vrot.slane %v3004, 2
      %v3007 = vshll.u32 %v2640, 16
      %v3009 = vrot.slane %v3007, 3
      %v3010 = vor.u32 %v3006, %v3009
      %v3011 = vsel %vm2967, %v3001, %v3010
      %v3013 = vshrl.u32 %v2641, 16
      %v3015 = vrot.slane %v3013, 2
      %v3016 = vshll.u32 %v2641, 16
      %v3018 = vrot.slane %v3016, 3
      %v3019 = vor.u32 %v3015, %v3018
      %v3020 = vsel %vm2967, %v3010, %v3019
      %v3022 = vshrl.u32 %v2642, 16
      %v3024 = vrot.slane %v3022, 2
      %v3025 = vshll.u32 %v2642, 16
      %v3027 = vrot.slane %v3025, 3
      %v3028 = vor.u32 %v3024, %v3027
      %v3029 = vsel %vm2967, %v3019, %v3028
      %v3031 = vshrl.u32 %v2643, 16
      %v3033 = vrot.slane %v3031, 2
      %v3034 = vshll.u32 %v2643, 16
      %v3036 = vrot.slane %v3034, 3
      %v3037 = vor.u32 %v3033, %v3036
      %v3038 = vsel %vm2967, %v3028, %v3037
      %v3040 = vshrl.u32 %v2644, 16
      %v3042 = vrot.slane %v3040, 2
      %v3043 = vshll.u32 %v2644, 16
      %v3045 = vrot.slane %v3043, 3
      %v3046 = vor.u32 %v3042, %v3045
      %v3047 = vsel %vm2967, %v3037, %v3046
      %v3049 = vshrl.u32 %v2645, 16
      %v3051 = vrot.slane %v3049, 2
      %v3052 = vshll.u32 %v2645, 16
      %v3054 = vrot.slane %v3052, 3
      %v3055 = vor.u32 %v3051, %v3054
      %v3056 = vsel %vm2967, %v3046, %v3055
      %v3058 = vshrl.u32 %v2646, 16
      %v3060 = vrot.slane %v3058, 2
      %v3061 = vshll.u32 %v2646, 16
      %v3063 = vrot.slane %v3061, 3
      %v3064 = vor.u32 %v3060, %v3063
      %v3065 = vsel %vm2967, %v3055, %v3064
      %v3067 = vshrl.u32 %v2647, 16
      %v3069 = vrot.slane %v3067, 2
      %v3070 = vshll.u32 %v2647, 16
      %v3072 = vrot.slane %v3070, 3
      %v3073 = vor.u32 %v3069, %v3072
      %v3074 = vsel %vm2967, %v3064, %v3073
      %v3076 = vshrl.u32 %v2648, 16
      %v3078 = vrot.slane %v3076, 2
      %v3079 = vshll.u32 %v2648, 16
      %v3081 = vrot.slane %v3079, 3
      %v3082 = vor.u32 %v3078, %v3081
      %v3083 = vsel %vm2967, %v3073, %v3082
      %v3085 = vshrl.u32 %v2649, 16
      %v3087 = vrot.slane %v3085, 2
      %v3088 = vshll.u32 %v2649, 16
      %v3090 = vrot.slane %v3088, 3
      %v3091 = vor.u32 %v3087, %v3090
      %v3092 = vsel %vm2967, %v3082, %v3091
      %v3094 = vshrl.u32 %v2650, 16
      %v3096 = vrot.slane %v3094, 2
      %v3097 = vshll.u32 %v2650, 16
      %v3099 = vrot.slane %v3097, 3
      %v3100 = vor.u32 %v3096, %v3099
      %v3101 = vsel %vm2967, %v3091, %v3100
      %v3103 = vshrl.u32 %v2651, 16
      %v3105 = vrot.slane %v3103, 2
      %v3106 = vshll.u32 %v2651, 16
      %v3108 = vrot.slane %v3106, 3
      %v3109 = vor.u32 %v3105, %v3108
      %v3110 = vsel %vm2967, %v3100, %v3109
      %v3112 = vshrl.u32 %v2652, 16
      %v3114 = vrot.slane %v3112, 2
      %v3115 = vshll.u32 %v2652, 16
      %v3117 = vrot.slane %v3115, 3
      %v3118 = vor.u32 %v3114, %v3117
      %v3119 = vsel %vm2967, %v3109, %v3118
      %v3121 = vshrl.u32 %v2653, 16
      %v3123 = vrot.slane %v3121, 2
      %v3124 = vshll.u32 %v2653, 16
      %v3126 = vrot.slane %v3124, 3
      %v3127 = vor.u32 %v3123, %v3126
      %v3128 = vsel %vm2967, %v3118, %v3127
      %v3130 = vshrl.u32 %v2966, 16
      %v3132 = vrot.slane %v3130, 2
      %v3133 = vshll.u32 %v2966, 16
      %v3135 = vrot.slane %v3133, 3
      %v3136 = vor.u32 %v3132, %v3135
      %v3137 = vsel %vm2967, %v3127, %v3136
      %v3139 = vunpack.c.l.b16 %v2963
      %v3140 = vpack.c.b16 %v3139, %v3139
      %v3141 = vrot.slane %v3140, 2
      %v3143 = vsel %vm554, %v2984, 0
      %v3146 = vsel %vm554, %v2993, 0
      %v3149 = vsel %vm554, %v3002, 0
      %v3152 = vsel %vm554, %v3011, 0
      %v3155 = vsel %vm554, %v3020, 0
      %v3158 = vsel %vm554, %v3029, 0
      %v3161 = vsel %vm554, %v3038, 0
      %v3164 = vsel %vm554, %v3047, 0
      %v3167 = vsel %vm554, %v3056, 0
      %v3170 = vsel %vm554, %v3065, 0
      %v3173 = vsel %vm554, %v3074, 0
      %v3176 = vsel %vm554, %v3083, 0
      %v3179 = vsel %vm554, %v3092, 0
      %v3182 = vsel %vm554, %v3101, 0
      %v3185 = vsel %vm554, %v3110, 0
      %v3188 = vsel %vm554, %v3119, 0
      %v3191 = vsel %vm554, %v3128, 0
      %v3194 = vsel %vm554, %v3137, 0
      %v3197 = vsel %vm609, %v3141, 0
      %3199 = vmatprep.subr.bf16.mxu0 0
      %3200 = vmatpush1.bf16.msra.mxu0 %v3197
      %3201 = vmatprep.subr.bf16.mxu0 0
      %3202 = vmatpush1.bf16.msra.mxu0 0
      %3203 = vmatprep.subr.bf16.mxu0 0
      %3204 = vmatpush1.bf16.msra.mxu0 0
      %3205 = vmatprep.subr.bf16.mxu0 0
      %3206 = vmatpush1.bf16.msra.mxu0 0
      %3207 = vmatprep.subr.bf16.mxu0 0
      %3208 = vmatpush1.bf16.msra.mxu0 0
      %3209 = vmatprep.subr.bf16.mxu0 0
      %3210 = vmatpush1.bf16.msra.mxu0 0
      %3211 = vmatprep.subr.bf16.mxu0 0
      %3212 = vmatpush1.bf16.msra.mxu0 0
      %3213 = vmatprep.subr.bf16.mxu0 0
      %3214 = vmatpush1.bf16.msra.mxu0 0
      %3215 = vmatprep.subr.bf16.mxu0 0
      %3216 = vmatpush1.bf16.msra.mxu0 0
      %3217 = vmatprep.subr.bf16.mxu0 0
      %3218 = vmatpush1.bf16.msra.mxu0 0
      %3219 = vmatprep.subr.bf16.mxu0 0
      %3220 = vmatpush1.bf16.msra.mxu0 0
      %3221 = vmatprep.subr.bf16.mxu0 0
      %3222 = vmatpush1.bf16.msra.mxu0 0
      %3223 = vmatprep.subr.bf16.mxu0 0
      %3224 = vmatpush1.bf16.msra.mxu0 0
      %3225 = vmatprep.subr.bf16.mxu0 0
      %3226 = vmatpush1.bf16.msra.mxu0 0
      %3227 = vmatprep.subr.bf16.mxu0 0
      %3228 = vmatpush1.bf16.msra.mxu0 0
      %3229 = vmatprep.subr.bf16.mxu0 0
      %3230 = vmatpush1.bf16.msra.mxu0 0
      %3231 = vmatprep.mubr.bf16.mxu0 0
      %3232 = vmatmul.mubr.bf16.gmra.mrb[0].mxu0 %v3143
      %v3233 = vpop.f32.mrb[0].mxu0
      %v3234 = vadd.f32 0.0, %v3233
      %v3235 = vpop.f32.mrb[0].mxu0
      %v3236 = vpop.f32.mrb[0].mxu0
      %v3237 = vadd.f32 0.0, %v3236
      %v3238 = vpop.f32.mrb[0].mxu0
      %3239 = vmatprep.mubr.bf16.mxu0 0
      %3240 = vmatmul.mubr.bf16.gmra.mrb[0].mxu0 %v3146
      %v3241 = vpop.f32.mrb[0].mxu0
      %v3242 = vadd.f32 0.0, %v3241
      %v3243 = vpop.f32.mrb[0].mxu0
      %v3244 = vpop.f32.mrb[0].mxu0
      %v3245 = vadd.f32 0.0, %v3244
      %v3246 = vpop.f32.mrb[0].mxu0
      %3247 = vmatprep.mubr.bf16.mxu0 0
      %3248 = vmatmul.mubr.bf16.gmra.mrb[0].mxu0 %v3149
      %v3249 = vpop.f32.mrb[0].mxu0
      %v3250 = vadd.f32 0.0, %v3249
      %v3251 = vpop.f32.mrb[0].mxu0
      %v3252 = vpop.f32.mrb[0].mxu0
      %v3253 = vadd.f32 0.0, %v3252
      %v3254 = vpop.f32.mrb[0].mxu0
      %3255 = vmatprep.mubr.bf16.mxu0 0
      %3256 = vmatmul.mubr.bf16.gmra.mrb[0].mxu0 %v3152
      %v3257 = vpop.f32.mrb[0].mxu0
      %v3258 = vadd.f32 0.0, %v3257
      %v3259 = vpop.f32.mrb[0].mxu0
      %v3260 = vpop.f32.mrb[0].mxu0
      %v3261 = vadd.f32 0.0, %v3260
      %v3262 = vpop.f32.mrb[0].mxu0
      %3263 = vmatprep.mubr.bf16.mxu0 0
      %3264 = vmatmul.mubr.bf16.gmra.mrb[0].mxu0 %v3155
      %v3265 = vpop.f32.mrb[0].mxu0
      %v3266 = vadd.f32 0.0, %v3265
      %v3267 = vpop.f32.mrb[0].mxu0
      %v3268 = vpop.f32.mrb[0].mxu0
      %v3269 = vadd.f32 0.0, %v3268
      %v3270 = vpop.f32.mrb[0].mxu0
      %3271 = vmatprep.mubr.bf16.mxu0 0
      %3272 = vmatmul.mubr.bf16.gmra.mrb[0].mxu0 %v3158
      %v3273 = vpop.f32.mrb[0].mxu0
      %v3274 = vadd.f32 0.0, %v3273
      %v3275 = vpop.f32.mrb[0].mxu0
      %v3276 = vpop.f32.mrb[0].mxu0
      %v3277 = vadd.f32 0.0, %v3276
      %v3278 = vpop.f32.mrb[0].mxu0
      %3279 = vmatprep.mubr.bf16.mxu0 0
      %3280 = vmatmul.mubr.bf16.gmra.mrb[0].mxu0 %v3161
      %v3281 = vpop.f32.mrb[0].mxu0
      %v3282 = vadd.f32 0.0, %v3281
      %v3283 = vpop.f32.mrb[0].mxu0
      %v3284 = vpop.f32.mrb[0].mxu0
      %v3285 = vadd.f32 0.0, %v3284
      %v3286 = vpop.f32.mrb[0].mxu0
      %3287 = vmatprep.mubr.bf16.mxu0 0
      %3288 = vmatmul.mubr.bf16.gmra.mrb[0].mxu0 %v3164
      %v3289 = vpop.f32.mrb[0].mxu0
      %v3290 = vadd.f32 0.0, %v3289
      %v3291 = vpop.f32.mrb[0].mxu0
      %v3292 = vpop.f32.mrb[0].mxu0
      %v3293 = vadd.f32 0.0, %v3292
      %v3294 = vpop.f32.mrb[0].mxu0
      %3295 = vmatprep.mubr.bf16.mxu0 0
      %3296 = vmatmul.mubr.bf16.gmra.mrb[0].mxu0 %v3167
      %v3297 = vpop.f32.mrb[0].mxu0
      %v3298 = vadd.f32 0.0, %v3297
      %v3299 = vpop.f32.mrb[0].mxu0
      %v3300 = vpop.f32.mrb[0].mxu0
      %v3301 = vadd.f32 0.0, %v3300
      %v3302 = vpop.f32.mrb[0].mxu0
      %3303 = vmatprep.mubr.bf16.mxu0 0
      %3304 = vmatmul.mubr.bf16.gmra.mrb[0].mxu0 %v3170
      %v3305 = vpop.f32.mrb[0].mxu0
      %v3306 = vadd.f32 0.0, %v3305
      %v3307 = vpop.f32.mrb[0].mxu0
      %v3308 = vpop.f32.mrb[0].mxu0
      %v3309 = vadd.f32 0.0, %v3308
      %v3310 = vpop.f32.mrb[0].mxu0
      %3311 = vmatprep.mubr.bf16.mxu0 0
      %3312 = vmatmul.mubr.bf16.gmra.mrb[0].mxu0 %v3173
      %v3313 = vpop.f32.mrb[0].mxu0
      %v3314 = vadd.f32 0.0, %v3313
      %v3315 = vpop.f32.mrb[0].mxu0
      %v3316 = vpop.f32.mrb[0].mxu0
      %v3317 = vadd.f32 0.0, %v3316
      %v3318 = vpop.f32.mrb[0].mxu0
      %3319 = vmatprep.mubr.bf16.mxu0 0
      %3320 = vmatmul.mubr.bf16.gmra.mrb[0].mxu0 %v3176
      %v3321 = vpop.f32.mrb[0].mxu0
      %v3322 = vadd.f32 0.0, %v3321
      %v3323 = vpop.f32.mrb[0].mxu0
      %v3324 = vpop.f32.mrb[0].mxu0
      %v3325 = vadd.f32 0.0, %v3324
      %v3326 = vpop.f32.mrb[0].mxu0
      %3327 = vmatprep.mubr.bf16.mxu0 0
      %3328 = vmatmul.mubr.bf16.gmra.mrb[0].mxu0 %v3179
      %v3329 = vpop.f32.mrb[0].mxu0
      %v3330 = vadd.f32 0.0, %v3329
      %v3331 = vpop.f32.mrb[0].mxu0
      %v3332 = vpop.f32.mrb[0].mxu0
      %v3333 = vadd.f32 0.0, %v3332
      %v3334 = vpop.f32.mrb[0].mxu0
      %3335 = vmatprep.mubr.bf16.mxu0 0
      %3336 = vmatmul.mubr.bf16.gmra.mrb[0].mxu0 %v3182
      %v3337 = vpop.f32.mrb[0].mxu0
      %v3338 = vadd.f32 0.0, %v3337
      %v3339 = vpop.f32.mrb[0].mxu0
      %v3340 = vpop.f32.mrb[0].mxu0
      %v3341 = vadd.f32 0.0, %v3340
      %v3342 = vpop.f32.mrb[0].mxu0
      %3343 = vmatprep.mubr.bf16.mxu0 0
      %3344 = vmatmul.mubr.bf16.gmra.mrb[0].mxu0 %v3185
      %v3345 = vpop.f32.mrb[0].mxu0
      %v3346 = vadd.f32 0.0, %v3345
      %v3347 = vpop.f32.mrb[0].mxu0
      %v3348 = vpop.f32.mrb[0].mxu0
      %v3349 = vadd.f32 0.0, %v3348
      %v3350 = vpop.f32.mrb[0].mxu0
      %3351 = vmatprep.mubr.bf16.mxu0 0
      %3352 = vmatmul.mubr.bf16.gmra.mrb[0].mxu0 %v3188
      %v3353 = vpop.f32.mrb[0].mxu0
      %v3354 = vadd.f32 0.0, %v3353
      %v3355 = vpop.f32.mrb[0].mxu0
      %v3356 = vpop.f32.mrb[0].mxu0
      %v3357 = vadd.f32 0.0, %v3356
      %v3358 = vpop.f32.mrb[0].mxu0
      %3359 = vmatprep.mubr.bf16.mxu0 0
      %3360 = vmatmul.mubr.bf16.gmra.mrb[0].mxu0 %v3191
      %v3361 = vpop.f32.mrb[0].mxu0
      %v3362 = vadd.f32 0.0, %v3361
      %v3363 = vpop.f32.mrb[0].mxu0
      %v3364 = vpop.f32.mrb[0].mxu0
      %v3365 = vadd.f32 0.0, %v3364
      %v3366 = vpop.f32.mrb[0].mxu0
      %3367 = vmatprep.mubr.bf16.mxu0 0
      %3368 = vmatmul.mubr.bf16.gmra.mrb[0].mxu0 %v3194
      %v3369 = vpop.f32.mrb[0].mxu0
      %v3370 = vadd.f32 0.0, %v3369
      %v3371 = vpop.f32.mrb[0].mxu0
      %v3372 = vpop.f32.mrb[0].mxu0
      %v3373 = vadd.f32 0.0, %v3372
      %v3374 = vpop.f32.mrb[0].mxu0
      %3375 = vdwg.mxu0
      %v3376 = vadd.f32 %v2926, %v3234
      %v3377 = vadd.f32 %v2927, %v3237
      %v3378 = vadd.f32 %v2928, %v3242
      %v3379 = vadd.f32 %v2929, %v3245
      %v3380 = vadd.f32 %v2930, %v3250
      %v3381 = vadd.f32 %v2931, %v3253
      %v3382 = vadd.f32 %v2932, %v3258
      %v3383 = vadd.f32 %v2933, %v3261
      %v3384 = vadd.f32 %v2934, %v3266
      %v3385 = vadd.f32 %v2935, %v3269
      %v3386 = vadd.f32 %v2936, %v3274
      %v3387 = vadd.f32 %v2937, %v3277
      %v3388 = vadd.f32 %v2938, %v3282
      %v3389 = vadd.f32 %v2939, %v3285
      %v3390 = vadd.f32 %v2940, %v3290
      %v3391 = vadd.f32 %v2941, %v3293
      %v3392 = vadd.f32 %v2942, %v3298
      %v3393 = vadd.f32 %v2943, %v3301
      %v3394 = vadd.f32 %v2944, %v3306
      %v3395 = vadd.f32 %v2945, %v3309
      %v3396 = vadd.f32 %v2946, %v3314
      %v3397 = vadd.f32 %v2947, %v3317
      %v3398 = vadd.f32 %v2948, %v3322
      %v3399 = vadd.f32 %v2949, %v3325
      %v3400 = vadd.f32 %v2950, %v3330
      %v3401 = vadd.f32 %v2951, %v3333
      %v3402 = vadd.f32 %v2952, %v3338
      %v3403 = vadd.f32 %v2953, %v3341
      %v3404 = vadd.f32 %v2954, %v3346
      %v3405 = vadd.f32 %v2955, %v3349
      %v3406 = vadd.f32 %v2956, %v3354
      %v3407 = vadd.f32 %v2957, %v3357
      %v3408 = vadd.f32 %v2958, %v3362
      %v3409 = vadd.f32 %v2959, %v3365
      %v3410 = vadd.f32 %v2960, %v3370
      %v3411 = vadd.f32 %v2961, %v3373
      %v3412 = vld [vmem:[%s243 + $0x10] sm:$0x8]
      %v3413 = vld [vmem:[%s247 + $0x10] sm:$0x3]
      %v3415 = vunpack.c.l.b16 %v3412
      %v3416 = vpack.c.b16 %v2600, %v3415
      %vm3417 = vcmask 1044480
      %v3418 = vrot.slane %v3416, 3
      %v3419 = vrot.slane %v2637, 3
      %v3420 = vsel %vm3417, %v3418, %v3419
      %v3421 = vrot.slane %v2638, 3
      %v3422 = vsel %vm3417, %v3419, %v3421
      %v3423 = vrot.slane %v2639, 3
      %v3424 = vsel %vm3417, %v3421, %v3423
      %v3425 = vrot.slane %v2640, 3
      %v3426 = vsel %vm3417, %v3423, %v3425
      %v3427 = vrot.slane %v2641, 3
      %v3428 = vsel %vm3417, %v3425, %v3427
      %v3429 = vrot.slane %v2642, 3
      %v3430 = vsel %vm3417, %v3427, %v3429
      %v3431 = vrot.slane %v2643, 3
      %v3432 = vsel %vm3417, %v3429, %v3431
      %v3433 = vrot.slane %v2644, 3
      %v3434 = vsel %vm3417, %v3431, %v3433
      %v3435 = vrot.slane %v2645, 3
      %v3436 = vsel %vm3417, %v3433, %v3435
      %v3437 = vrot.slane %v2646, 3
      %v3438 = vsel %vm3417, %v3435, %v3437
      %v3439 = vrot.slane %v2647, 3
      %v3440 = vsel %vm3417, %v3437, %v3439
      %v3441 = vrot.slane %v2648, 3
      %v3442 = vsel %vm3417, %v3439, %v3441
      %v3443 = vrot.slane %v2649, 3
      %v3444 = vsel %vm3417, %v3441, %v3443
      %v3445 = vrot.slane %v2650, 3
      %v3446 = vsel %vm3417, %v3443, %v3445
      %v3447 = vrot.slane %v2651, 3
      %v3448 = vsel %vm3417, %v3445, %v3447
      %v3449 = vrot.slane %v2652, 3
      %v3450 = vsel %vm3417, %v3447, %v3449
      %v3451 = vrot.slane %v2653, 3
      %v3452 = vsel %vm3417, %v3449, %v3451
      %v3453 = vrot.slane %v2966, 3
      %v3454 = vsel %vm3417, %v3451, %v3453
      %v3456 = vsel %vm554, %v3420, 0
      %v3459 = vsel %vm554, %v3422, 0
      %v3462 = vsel %vm554, %v3424, 0
      %v3465 = vsel %vm554, %v3426, 0
      %v3468 = vsel %vm554, %v3428, 0
      %v3471 = vsel %vm554, %v3430, 0
      %v3474 = vsel %vm554, %v3432, 0
      %v3477 = vsel %vm554, %v3434, 0
      %v3480 = vsel %vm554, %v3436, 0
      %v3483 = vsel %vm554, %v3438, 0
      %v3486 = vsel %vm554, %v3440, 0
      %v3489 = vsel %vm554, %v3442, 0
      %v3492 = vsel %vm554, %v3444, 0
      %v3495 = vsel %vm554, %v3446, 0
      %v3498 = vsel %vm554, %v3448, 0
      %v3501 = vsel %vm554, %v3450, 0
      %v3504 = vsel %vm554, %v3452, 0
      %v3507 = vsel %vm554, %v3454, 0
      %v3510 = vsel %vm609, %v3413, 0
      %3512 = vmatprep.subr.bf16.mxu0 0
      %3513 = vmatpush1.bf16.msra.mxu0 %v3510
      %3514 = vmatprep.subr.bf16.mxu0 0
      %3515 = vmatpush1.bf16.msra.mxu0 0
      %3516 = vmatprep.subr.bf16.mxu0 0
      %3517 = vmatpush1.bf16.msra.mxu0 0
      %3518 = vmatprep.subr.bf16.mxu0 0
      %3519 = vmatpush1.bf16.msra.mxu0 0
      %3520 = vmatprep.subr.bf16.mxu0 0
      %3521 = vmatpush1.bf16.msra.mxu0 0
      %3522 = vmatprep.subr.bf16.mxu0 0
      %3523 = vmatpush1.bf16.msra.mxu0 0
      %3524 = vmatprep.subr.bf16.mxu0 0
      %3525 = vmatpush1.bf16.msra.mxu0 0
      %3526 = vmatprep.subr.bf16.mxu0 0
      %3527 = vmatpush1.bf16.msra.mxu0 0
      %3528 = vmatprep.subr.bf16.mxu0 0
      %3529 = vmatpush1.bf16.msra.mxu0 0
      %3530 = vmatprep.subr.bf16.mxu0 0
      %3531 = vmatpush1.bf16.msra.mxu0 0
      %3532 = vmatprep.subr.bf16.mxu0 0
      %3533 = vmatpush1.bf16.msra.mxu0 0
      %3534 = vmatprep.subr.bf16.mxu0 0
      %3535 = vmatpush1.bf16.msra.mxu0 0
      %3536 = vmatprep.subr.bf16.mxu0 0
      %3537 = vmatpush1.bf16.msra.mxu0 0
      %3538 = vmatprep.subr.bf16.mxu0 0
      %3539 = vmatpush1.bf16.msra.mxu0 0
      %3540 = vmatprep.subr.bf16.mxu0 0
      %3541 = vmatpush1.bf16.msra.mxu0 0
      %3542 = vmatprep.subr.bf16.mxu0 0
      %3543 = vmatpush1.bf16.msra.mxu0 0
      %3544 = vmatprep.mubr.bf16.mxu0 0
      %3545 = vmatmul.mubr.bf16.gmra.mrb[0].mxu0 %v3456
      %v3546 = vpop.f32.mrb[0].mxu0
      %v3547 = vadd.f32 0.0, %v3546
      %v3548 = vpop.f32.mrb[0].mxu0
      %v3549 = vpop.f32.mrb[0].mxu0
      %v3550 = vadd.f32 0.0, %v3549
      %v3551 = vpop.f32.mrb[0].mxu0
      %3552 = vmatprep.mubr.bf16.mxu0 0
      %3553 = vmatmul.mubr.bf16.gmra.mrb[0].mxu0 %v3459
      %v3554 = vpop.f32.mrb[0].mxu0
      %v3555 = vadd.f32 0.0, %v3554
      %v3556 = vpop.f32.mrb[0].mxu0
      %v3557 = vpop.f32.mrb[0].mxu0
      %v3558 = vadd.f32 0.0, %v3557
      %v3559 = vpop.f32.mrb[0].mxu0
      %3560 = vmatprep.mubr.bf16.mxu0 0
      %3561 = vmatmul.mubr.bf16.gmra.mrb[0].mxu0 %v3462
      %v3562 = vpop.f32.mrb[0].mxu0
      %v3563 = vadd.f32 0.0, %v3562
      %v3564 = vpop.f32.mrb[0].mxu0
      %v3565 = vpop.f32.mrb[0].mxu0
      %v3566 = vadd.f32 0.0, %v3565
      %v3567 = vpop.f32.mrb[0].mxu0
      %3568 = vmatprep.mubr.bf16.mxu0 0
      %3569 = vmatmul.mubr.bf16.gmra.mrb[0].mxu0 %v3465
      %v3570 = vpop.f32.mrb[0].mxu0
      %v3571 = vadd.f32 0.0, %v3570
      %v3572 = vpop.f32.mrb[0].mxu0
      %v3573 = vpop.f32.mrb[0].mxu0
      %v3574 = vadd.f32 0.0, %v3573
      %v3575 = vpop.f32.mrb[0].mxu0
      %3576 = vmatprep.mubr.bf16.mxu0 0
      %3577 = vmatmul.mubr.bf16.gmra.mrb[0].mxu0 %v3468
      %v3578 = vpop.f32.mrb[0].mxu0
      %v3579 = vadd.f32 0.0, %v3578
      %v3580 = vpop.f32.mrb[0].mxu0
      %v3581 = vpop.f32.mrb[0].mxu0
      %v3582 = vadd.f32 0.0, %v3581
      %v3583 = vpop.f32.mrb[0].mxu0
      %3584 = vmatprep.mubr.bf16.mxu0 0
      %3585 = vmatmul.mubr.bf16.gmra.mrb[0].mxu0 %v3471
      %v3586 = vpop.f32.mrb[0].mxu0
      %v3587 = vadd.f32 0.0, %v3586
      %v3588 = vpop.f32.mrb[0].mxu0
      %v3589 = vpop.f32.mrb[0].mxu0
      %v3590 = vadd.f32 0.0, %v3589
      %v3591 = vpop.f32.mrb[0].mxu0
      %3592 = vmatprep.mubr.bf16.mxu0 0
      %3593 = vmatmul.mubr.bf16.gmra.mrb[0].mxu0 %v3474
      %v3594 = vpop.f32.mrb[0].mxu0
      %v3595 = vadd.f32 0.0, %v3594
      %v3596 = vpop.f32.mrb[0].mxu0
      %v3597 = vpop.f32.mrb[0].mxu0
      %v3598 = vadd.f32 0.0, %v3597
      %v3599 = vpop.f32.mrb[0].mxu0
      %3600 = vmatprep.mubr.bf16.mxu0 0
      %3601 = vmatmul.mubr.bf16.gmra.mrb[0].mxu0 %v3477
      %v3602 = vpop.f32.mrb[0].mxu0
      %v3603 = vadd.f32 0.0, %v3602
      %v3604 = vpop.f32.mrb[0].mxu0
      %v3605 = vpop.f32.mrb[0].mxu0
      %v3606 = vadd.f32 0.0, %v3605
      %v3607 = vpop.f32.mrb[0].mxu0
      %3608 = vmatprep.mubr.bf16.mxu0 0
      %3609 = vmatmul.mubr.bf16.gmra.mrb[0].mxu0 %v3480
      %v3610 = vpop.f32.mrb[0].mxu0
      %v3611 = vadd.f32 0.0, %v3610
      %v3612 = vpop.f32.mrb[0].mxu0
      %v3613 = vpop.f32.mrb[0].mxu0
      %v3614 = vadd.f32 0.0, %v3613
      %v3615 = vpop.f32.mrb[0].mxu0
      %3616 = vmatprep.mubr.bf16.mxu0 0
      %3617 = vmatmul.mubr.bf16.gmra.mrb[0].mxu0 %v3483
      %v3618 = vpop.f32.mrb[0].mxu0
      %v3619 = vadd.f32 0.0, %v3618
      %v3620 = vpop.f32.mrb[0].mxu0
      %v3621 = vpop.f32.mrb[0].mxu0
      %v3622 = vadd.f32 0.0, %v3621
      %v3623 = vpop.f32.mrb[0].mxu0
      %3624 = vmatprep.mubr.bf16.mxu0 0
      %3625 = vmatmul.mubr.bf16.gmra.mrb[0].mxu0 %v3486
      %v3626 = vpop.f32.mrb[0].mxu0
      %v3627 = vadd.f32 0.0, %v3626
      %v3628 = vpop.f32.mrb[0].mxu0
      %v3629 = vpop.f32.mrb[0].mxu0
      %v3630 = vadd.f32 0.0, %v3629
      %v3631 = vpop.f32.mrb[0].mxu0
      %3632 = vmatprep.mubr.bf16.mxu0 0
      %3633 = vmatmul.mubr.bf16.gmra.mrb[0].mxu0 %v3489
      %v3634 = vpop.f32.mrb[0].mxu0
      %v3635 = vadd.f32 0.0, %v3634
      %v3636 = vpop.f32.mrb[0].mxu0
      %v3637 = vpop.f32.mrb[0].mxu0
      %v3638 = vadd.f32 0.0, %v3637
      %v3639 = vpop.f32.mrb[0].mxu0
      %3640 = vmatprep.mubr.bf16.mxu0 0
      %3641 = vmatmul.mubr.bf16.gmra.mrb[0].mxu0 %v3492
      %v3642 = vpop.f32.mrb[0].mxu0
      %v3643 = vadd.f32 0.0, %v3642
      %v3644 = vpop.f32.mrb[0].mxu0
      %v3645 = vpop.f32.mrb[0].mxu0
      %v3646 = vadd.f32 0.0, %v3645
      %v3647 = vpop.f32.mrb[0].mxu0
      %3648 = vmatprep.mubr.bf16.mxu0 0
      %3649 = vmatmul.mubr.bf16.gmra.mrb[0].mxu0 %v3495
      %v3650 = vpop.f32.mrb[0].mxu0
      %v3651 = vadd.f32 0.0, %v3650
      %v3652 = vpop.f32.mrb[0].mxu0
      %v3653 = vpop.f32.mrb[0].mxu0
      %v3654 = vadd.f32 0.0, %v3653
      %v3655 = vpop.f32.mrb[0].mxu0
      %3656 = vmatprep.mubr.bf16.mxu0 0
      %3657 = vmatmul.mubr.bf16.gmra.mrb[0].mxu0 %v3498
      %v3658 = vpop.f32.mrb[0].mxu0
      %v3659 = vadd.f32 0.0, %v3658
      %v3660 = vpop.f32.mrb[0].mxu0
      %v3661 = vpop.f32.mrb[0].mxu0
      %v3662 = vadd.f32 0.0, %v3661
      %v3663 = vpop.f32.mrb[0].mxu0
      %3664 = vmatprep.mubr.bf16.mxu0 0
      %3665 = vmatmul.mubr.bf16.gmra.mrb[0].mxu0 %v3501
      %v3666 = vpop.f32.mrb[0].mxu0
      %v3667 = vadd.f32 0.0, %v3666
      %v3668 = vpop.f32.mrb[0].mxu0
      %v3669 = vpop.f32.mrb[0].mxu0
      %v3670 = vadd.f32 0.0, %v3669
      %v3671 = vpop.f32.mrb[0].mxu0
      %3672 = vmatprep.mubr.bf16.mxu0 0
      %3673 = vmatmul.mubr.bf16.gmra.mrb[0].mxu0 %v3504
      %v3674 = vpop.f32.mrb[0].mxu0
      %v3675 = vadd.f32 0.0, %v3674
      %v3676 = vpop.f32.mrb[0].mxu0
      %v3677 = vpop.f32.mrb[0].mxu0
      %v3678 = vadd.f32 0.0, %v3677
      %v3679 = vpop.f32.mrb[0].mxu0
      %3680 = vmatprep.mubr.bf16.mxu0 0
      %3681 = vmatmul.mubr.bf16.gmra.mrb[0].mxu0 %v3507
      %v3682 = vpop.f32.mrb[0].mxu0
      %v3683 = vadd.f32 0.0, %v3682
      %v3684 = vpop.f32.mrb[0].mxu0
      %v3685 = vpop.f32.mrb[0].mxu0
      %v3686 = vadd.f32 0.0, %v3685
      %v3687 = vpop.f32.mrb[0].mxu0
      %3688 = vdwg.mxu0
      %v3689 = vadd.f32 %v3376, %v3547
      %v3690 = vadd.f32 %v3377, %v3550
      %v3691 = vadd.f32 %v3378, %v3555
      %v3692 = vadd.f32 %v3379, %v3558
      %v3693 = vadd.f32 %v3380, %v3563
      %v3694 = vadd.f32 %v3381, %v3566
      %v3695 = vadd.f32 %v3382, %v3571
      %v3696 = vadd.f32 %v3383, %v3574
      %v3697 = vadd.f32 %v3384, %v3579
      %v3698 = vadd.f32 %v3385, %v3582
      %v3699 = vadd.f32 %v3386, %v3587
      %v3700 = vadd.f32 %v3387, %v3590
      %v3701 = vadd.f32 %v3388, %v3595
      %v3702 = vadd.f32 %v3389, %v3598
      %v3703 = vadd.f32 %v3390, %v3603
      %v3704 = vadd.f32 %v3391, %v3606
      %v3705 = vadd.f32 %v3392, %v3611
      %v3706 = vadd.f32 %v3393, %v3614
      %v3707 = vadd.f32 %v3394, %v3619
      %v3708 = vadd.f32 %v3395, %v3622
      %v3709 = vadd.f32 %v3396, %v3627
      %v3710 = vadd.f32 %v3397, %v3630
      %v3711 = vadd.f32 %v3398, %v3635
      %v3712 = vadd.f32 %v3399, %v3638
      %v3713 = vadd.f32 %v3400, %v3643
      %v3714 = vadd.f32 %v3401, %v3646
      %v3715 = vadd.f32 %v3402, %v3651
      %v3716 = vadd.f32 %v3403, %v3654
      %v3717 = vadd.f32 %v3404, %v3659
      %v3718 = vadd.f32 %v3405, %v3662
      %v3719 = vadd.f32 %v3406, %v3667
      %v3720 = vadd.f32 %v3407, %v3670
      %v3721 = vadd.f32 %v3408, %v3675
      %v3722 = vadd.f32 %v3409, %v3678
      %v3723 = vadd.f32 %v3410, %v3683
      %v3724 = vadd.f32 %v3411, %v3686
      %3725 = vst [vmem:[%s255] sm:$0xff] %v3689
      %3726 = vst [vmem:[%s255 + $0x8] sm:$0xff] %v3690
      %3727 = vst [vmem:[%s255 + $0x10] sm:$0xff] %v3691
      %3728 = vst [vmem:[%s255 + $0x18] sm:$0xff] %v3692
      %3729 = vst [vmem:[%s255 + $0x20] sm:$0xff] %v3693
      %3730 = vst [vmem:[%s255 + $0x28] sm:$0xff] %v3694
      %3731 = vst [vmem:[%s255 + $0x30] sm:$0xff] %v3695
      %3732 = vst [vmem:[%s255 + $0x38] sm:$0xff] %v3696
      %3733 = vst [vmem:[%s255 + $0x40] sm:$0xff] %v3697
      %3734 = vst [vmem:[%s255 + $0x48] sm:$0xff] %v3698
      %3735 = vst [vmem:[%s255 + $0x50] sm:$0xff] %v3699
      %3736 = vst [vmem:[%s255 + $0x58] sm:$0xff] %v3700
      %3737 = vst [vmem:[%s255 + $0x60] sm:$0xff] %v3701
      %3738 = vst [vmem:[%s255 + $0x68] sm:$0xff] %v3702
      %3739 = vst [vmem:[%s255 + $0x70] sm:$0xff] %v3703
      %3740 = vst [vmem:[%s255 + $0x78] sm:$0xff] %v3704
      %3741 = vst [vmem:[%s255 + $0x80] sm:$0xff] %v3705
      %3742 = vst [vmem:[%s255 + $0x88] sm:$0xff] %v3706
      %3743 = vst [vmem:[%s255 + $0x90] sm:$0xff] %v3707
      %3744 = vst [vmem:[%s255 + $0x98] sm:$0xff] %v3708
      %3745 = vst [vmem:[%s255 + $0xa0] sm:$0xff] %v3709
      %3746 = vst [vmem:[%s255 + $0xa8] sm:$0xff] %v3710
      %3747 = vst [vmem:[%s255 + $0xb0] sm:$0xff] %v3711
      %3748 = vst [vmem:[%s255 + $0xb8] sm:$0xff] %v3712
      %3749 = vst [vmem:[%s255 + $0xc0] sm:$0xff] %v3713
      %3750 = vst [vmem:[%s255 + $0xc8] sm:$0xff] %v3714
      %3751 = vst [vmem:[%s255 + $0xd0] sm:$0xff] %v3715
      %3752 = vst [vmem:[%s255 + $0xd8] sm:$0xff] %v3716
      %3753 = vst [vmem:[%s255 + $0xe0] sm:$0xff] %v3717
      %3754 = vst [vmem:[%s255 + $0xe8] sm:$0xff] %v3718
      %3755 = vst [vmem:[%s255 + $0xf0] sm:$0xff] %v3719
      %3756 = vst [vmem:[%s255 + $0xf8] sm:$0xff] %v3720
      %3757 = vst [vmem:[%s255 + $0x100] sm:$0xff] %v3721
      %3758 = vst [vmem:[%s255 + $0x108] sm:$0xff] %v3722
      %3759 = vst [vmem:[%s255 + $0x110] sm:$0xff] %v3723
      %3760 = vst [vmem:[%s255 + $0x118] sm:$0xff] %v3724
      %v3761 = vlaneseq
      %v3762 = vshrl.u32 %v3761, 7
      %v3763 = vadd.s32 %v3762, 8
      %v3764 = vadd.s32 %v3762, 16
      %v3765 = vadd.s32 %v3762, 24
      %v3766 = vadd.s32 %v3762, 32
      %v3767 = vadd.s32 %v3762, 40
      %v3768 = vadd.s32 %v3762, 48
      %v3769 = vadd.s32 %v3762, 56
      %v3770 = vadd.s32 %v3762, 64
      %v3771 = vadd.s32 %v3762, 72
      %v3772 = vadd.s32 %v3762, 80
      %v3773 = vadd.s32 %v3762, 88
      %v3774 = vadd.s32 %v3762, 96
      %v3775 = vadd.s32 %v3762, 104
      %v3776 = vadd.s32 %v3762, 112
      %v3777 = vadd.s32 %v3762, 120
      %v3778 = vadd.s32 %v3762, 128
      %v3779 = vadd.s32 %v3762, 136
      %v3780 = vadd.s32 %v3762, 144
      %v3781 = vadd.s32 %v3762, 152
      %v3782 = vadd.s32 %v3762, 160
      %v3783 = vadd.s32 %v3762, 168
      %v3784 = vadd.s32 %v3762, 176
      %v3785 = vadd.s32 %v3762, 184
      %v3786 = vadd.s32 %v3762, 192
      %v3787 = vadd.s32 %v3762, 200
      %v3788 = vadd.s32 %v3762, 208
      %v3789 = vadd.s32 %v3762, 216
      %v3790 = vadd.s32 %v3762, 224
      %v3791 = vadd.s32 %v3762, 232
      %v3792 = vadd.s32 %v3762, 240
      %v3793 = vadd.s32 %v3762, 248
      %v3794 = vadd.s32 %v3762, 256
      %v3795 = vadd.s32 %v3762, 264
      %v3796 = vadd.s32 %v3762, 272
      %v3797 = vadd.s32 %v3762, 280
      %vm3798 = vcmp.lt.s32.totalorder %v3762, 0
      %v3799 = vsub.s32 0, %v3762
      %v3800 = vsel %vm3798, %v3799, %v3762
      %v3801 = vmul.u32.u64.compose %v3800, 3817748708
      %v3802 = vextract.low.u32 %v3801
      %v3803 = vextract.high.u32 %v3801
      %v3804 = vshrl.u32 %v3803, 4
      %v3805 = vmul.u32 %v3804, 18
      %v3806 = vsub.s32 %v3800, %v3805
      %v3807 = vsub.s32 0, %v3806
      %v3808 = vsel %vm3798, %v3807, %v3806
      %vm3809 = vcmp.lt.s32.totalorder %v3763, 0
      %v3810 = vsub.s32 0, %v3763
      %v3811 = vsel %vm3809, %v3810, %v3763
      %v3812 = vmul.u32.u64.compose %v3811, 3817748708
      %v3813 = vextract.low.u32 %v3812
      %v3814 = vextract.high.u32 %v3812
      %v3815 = vshrl.u32 %v3814, 4
      %v3816 = vmul.u32 %v3815, 18
      %v3817 = vsub.s32 %v3811, %v3816
      %v3818 = vsub.s32 0, %v3817
      %v3819 = vsel %vm3809, %v3818, %v3817
      %vm3820 = vcmp.lt.s32.totalorder %v3764, 0
      %v3821 = vsub.s32 0, %v3764
      %v3822 = vsel %vm3820, %v3821, %v3764
      %v3823 = vmul.u32.u64.compose %v3822, 3817748708
      %v3824 = vextract.low.u32 %v3823
      %v3825 = vextract.high.u32 %v3823
      %v3826 = vshrl.u32 %v3825, 4
      %v3827 = vmul.u32 %v3826, 18
      %v3828 = vsub.s32 %v3822, %v3827
      %v3829 = vsub.s32 0, %v3828
      %v3830 = vsel %vm3820, %v3829, %v3828
      %vm3831 = vcmp.lt.s32.totalorder %v3765, 0
      %v3832 = vsub.s32 0, %v3765
      %v3833 = vsel %vm3831, %v3832, %v3765
      %v3834 = vmul.u32.u64.compose %v3833, 3817748708
      %v3835 = vextract.low.u32 %v3834
      %v3836 = vextract.high.u32 %v3834
      %v3837 = vshrl.u32 %v3836, 4
      %v3838 = vmul.u32 %v3837, 18
      %v3839 = vsub.s32 %v3833, %v3838
      %v3840 = vsub.s32 0, %v3839
      %v3841 = vsel %vm3831, %v3840, %v3839
      %vm3842 = vcmp.lt.s32.totalorder %v3766, 0
      %v3843 = vsub.s32 0, %v3766
      %v3844 = vsel %vm3842, %v3843, %v3766
      %v3845 = vmul.u32.u64.compose %v3844, 3817748708
      %v3846 = vextract.low.u32 %v3845
      %v3847 = vextract.high.u32 %v3845
      %v3848 = vshrl.u32 %v3847, 4
      %v3849 = vmul.u32 %v3848, 18
      %v3850 = vsub.s32 %v3844, %v3849
      %v3851 = vsub.s32 0, %v3850
      %v3852 = vsel %vm3842, %v3851, %v3850
      %vm3853 = vcmp.lt.s32.totalorder %v3767, 0
      %v3854 = vsub.s32 0, %v3767
      %v3855 = vsel %vm3853, %v3854, %v3767
      %v3856 = vmul.u32.u64.compose %v3855, 3817748708
      %v3857 = vextract.low.u32 %v3856
      %v3858 = vextract.high.u32 %v3856
      %v3859 = vshrl.u32 %v3858, 4
      %v3860 = vmul.u32 %v3859, 18
      %v3861 = vsub.s32 %v3855, %v3860
      %v3862 = vsub.s32 0, %v3861
      %v3863 = vsel %vm3853, %v3862, %v3861
      %vm3864 = vcmp.lt.s32.totalorder %v3768, 0
      %v3865 = vsub.s32 0, %v3768
      %v3866 = vsel %vm3864, %v3865, %v3768
      %v3867 = vmul.u32.u64.compose %v3866, 3817748708
      %v3868 = vextract.low.u32 %v3867
      %v3869 = vextract.high.u32 %v3867
      %v3870 = vshrl.u32 %v3869, 4
      %v3871 = vmul.u32 %v3870, 18
      %v3872 = vsub.s32 %v3866, %v3871
      %v3873 = vsub.s32 0, %v3872
      %v3874 = vsel %vm3864, %v3873, %v3872
      %vm3875 = vcmp.lt.s32.totalorder %v3769, 0
      %v3876 = vsub.s32 0, %v3769
      %v3877 = vsel %vm3875, %v3876, %v3769
      %v3878 = vmul.u32.u64.compose %v3877, 3817748708
      %v3879 = vextract.low.u32 %v3878
      %v3880 = vextract.high.u32 %v3878
      %v3881 = vshrl.u32 %v3880, 4
      %v3882 = vmul.u32 %v3881, 18
      %v3883 = vsub.s32 %v3877, %v3882
      %v3884 = vsub.s32 0, %v3883
      %v3885 = vsel %vm3875, %v3884, %v3883
      %vm3886 = vcmp.lt.s32.totalorder %v3770, 0
      %v3887 = vsub.s32 0, %v3770
      %v3888 = vsel %vm3886, %v3887, %v3770
      %v3889 = vmul.u32.u64.compose %v3888, 3817748708
      %v3890 = vextract.low.u32 %v3889
      %v3891 = vextract.high.u32 %v3889
      %v3892 = vshrl.u32 %v3891, 4
      %v3893 = vmul.u32 %v3892, 18
      %v3894 = vsub.s32 %v3888, %v3893
      %v3895 = vsub.s32 0, %v3894
      %v3896 = vsel %vm3886, %v3895, %v3894
      %vm3897 = vcmp.lt.s32.totalorder %v3771, 0
      %v3898 = vsub.s32 0, %v3771
      %v3899 = vsel %vm3897, %v3898, %v3771
      %v3900 = vmul.u32.u64.compose %v3899, 3817748708
      %v3901 = vextract.low.u32 %v3900
      %v3902 = vextract.high.u32 %v3900
      %v3903 = vshrl.u32 %v3902, 4
      %v3904 = vmul.u32 %v3903, 18
      %v3905 = vsub.s32 %v3899, %v3904
      %v3906 = vsub.s32 0, %v3905
      %v3907 = vsel %vm3897, %v3906, %v3905
      %vm3908 = vcmp.lt.s32.totalorder %v3772, 0
      %v3909 = vsub.s32 0, %v3772
      %v3910 = vsel %vm3908, %v3909, %v3772
      %v3911 = vmul.u32.u64.compose %v3910, 3817748708
      %v3912 = vextract.low.u32 %v3911
      %v3913 = vextract.high.u32 %v3911
      %v3914 = vshrl.u32 %v3913, 4
      %v3915 = vmul.u32 %v3914, 18
      %v3916 = vsub.s32 %v3910, %v3915
      %v3917 = vsub.s32 0, %v3916
      %v3918 = vsel %vm3908, %v3917, %v3916
      %vm3919 = vcmp.lt.s32.totalorder %v3773, 0
      %v3920 = vsub.s32 0, %v3773
      %v3921 = vsel %vm3919, %v3920, %v3773
      %v3922 = vmul.u32.u64.compose %v3921, 3817748708
      %v3923 = vextract.low.u32 %v3922
      %v3924 = vextract.high.u32 %v3922
      %v3925 = vshrl.u32 %v3924, 4
      %v3926 = vmul.u32 %v3925, 18
      %v3927 = vsub.s32 %v3921, %v3926
      %v3928 = vsub.s32 0, %v3927
      %v3929 = vsel %vm3919, %v3928, %v3927
      %vm3930 = vcmp.lt.s32.totalorder %v3774, 0
      %v3931 = vsub.s32 0, %v3774
      %v3932 = vsel %vm3930, %v3931, %v3774
      %v3933 = vmul.u32.u64.compose %v3932, 3817748708
      %v3934 = vextract.low.u32 %v3933
      %v3935 = vextract.high.u32 %v3933
      %v3936 = vshrl.u32 %v3935, 4
      %v3937 = vmul.u32 %v3936, 18
      %v3938 = vsub.s32 %v3932, %v3937
      %v3939 = vsub.s32 0, %v3938
      %v3940 = vsel %vm3930, %v3939, %v3938
      %vm3941 = vcmp.lt.s32.totalorder %v3775, 0
      %v3942 = vsub.s32 0, %v3775
      %v3943 = vsel %vm3941, %v3942, %v3775
      %v3944 = vmul.u32.u64.compose %v3943, 3817748708
      %v3945 = vextract.low.u32 %v3944
      %v3946 = vextract.high.u32 %v3944
      %v3947 = vshrl.u32 %v3946, 4
      %v3948 = vmul.u32 %v3947, 18
      %v3949 = vsub.s32 %v3943, %v3948
      %v3950 = vsub.s32 0, %v3949
      %v3951 = vsel %vm3941, %v3950, %v3949
      %vm3952 = vcmp.lt.s32.totalorder %v3776, 0
      %v3953 = vsub.s32 0, %v3776
      %v3954 = vsel %vm3952, %v3953, %v3776
      %v3955 = vmul.u32.u64.compose %v3954, 3817748708
      %v3956 = vextract.low.u32 %v3955
      %v3957 = vextract.high.u32 %v3955
      %v3958 = vshrl.u32 %v3957, 4
      %v3959 = vmul.u32 %v3958, 18
      %v3960 = vsub.s32 %v3954, %v3959
      %v3961 = vsub.s32 0, %v3960
      %v3962 = vsel %vm3952, %v3961, %v3960
      %vm3963 = vcmp.lt.s32.totalorder %v3777, 0
      %v3964 = vsub.s32 0, %v3777
      %v3965 = vsel %vm3963, %v3964, %v3777
      %v3966 = vmul.u32.u64.compose %v3965, 3817748708
      %v3967 = vextract.low.u32 %v3966
      %v3968 = vextract.high.u32 %v3966
      %v3969 = vshrl.u32 %v3968, 4
      %v3970 = vmul.u32 %v3969, 18
      %v3971 = vsub.s32 %v3965, %v3970
      %v3972 = vsub.s32 0, %v3971
      %v3973 = vsel %vm3963, %v3972, %v3971
      %vm3974 = vcmp.lt.s32.totalorder %v3778, 0
      %v3975 = vsub.s32 0, %v3778
      %v3976 = vsel %vm3974, %v3975, %v3778
      %v3977 = vmul.u32.u64.compose %v3976, 3817748708
      %v3978 = vextract.low.u32 %v3977
      %v3979 = vextract.high.u32 %v3977
      %v3980 = vshrl.u32 %v3979, 4
      %v3981 = vmul.u32 %v3980, 18
      %v3982 = vsub.s32 %v3976, %v3981
      %v3983 = vsub.s32 0, %v3982
      %v3984 = vsel %vm3974, %v3983, %v3982
      %vm3985 = vcmp.lt.s32.totalorder %v3779, 0
      %v3986 = vsub.s32 0, %v3779
      %v3987 = vsel %vm3985, %v3986, %v3779
      %v3988 = vmul.u32.u64.compose %v3987, 3817748708
      %v3989 = vextract.low.u32 %v3988
      %v3990 = vextract.high.u32 %v3988
      %v3991 = vshrl.u32 %v3990, 4
      %v3992 = vmul.u32 %v3991, 18
      %v3993 = vsub.s32 %v3987, %v3992
      %v3994 = vsub.s32 0, %v3993
      %v3995 = vsel %vm3985, %v3994, %v3993
      %vm3996 = vcmp.lt.s32.totalorder %v3780, 0
      %v3997 = vsub.s32 0, %v3780
      %v3998 = vsel %vm3996, %v3997, %v3780
      %v3999 = vmul.u32.u64.compose %v3998, 3817748708
      %v4000 = vextract.low.u32 %v3999
      %v4001 = vextract.high.u32 %v3999
      %v4002 = vshrl.u32 %v4001, 4
      %v4003 = vmul.u32 %v4002, 18
      %v4004 = vsub.s32 %v3998, %v4003
      %v4005 = vsub.s32 0, %v4004
      %v4006 = vsel %vm3996, %v4005, %v4004
      %vm4007 = vcmp.lt.s32.totalorder %v3781, 0
      %v4008 = vsub.s32 0, %v3781
      %v4009 = vsel %vm4007, %v4008, %v3781
      %v4010 = vmul.u32.u64.compose %v4009, 3817748708
      %v4011 = vextract.low.u32 %v4010
      %v4012 = vextract.high.u32 %v4010
      %v4013 = vshrl.u32 %v4012, 4
      %v4014 = vmul.u32 %v4013, 18
      %v4015 = vsub.s32 %v4009, %v4014
      %v4016 = vsub.s32 0, %v4015
      %v4017 = vsel %vm4007, %v4016, %v4015
      %vm4018 = vcmp.lt.s32.totalorder %v3782, 0
      %v4019 = vsub.s32 0, %v3782
      %v4020 = vsel %vm4018, %v4019, %v3782
      %v4021 = vmul.u32.u64.compose %v4020, 3817748708
      %v4022 = vextract.low.u32 %v4021
      %v4023 = vextract.high.u32 %v4021
      %v4024 = vshrl.u32 %v4023, 4
      %v4025 = vmul.u32 %v4024, 18
      %v4026 = vsub.s32 %v4020, %v4025
      %v4027 = vsub.s32 0, %v4026
      %v4028 = vsel %vm4018, %v4027, %v4026
      %vm4029 = vcmp.lt.s32.totalorder %v3783, 0
      %v4030 = vsub.s32 0, %v3783
      %v4031 = vsel %vm4029, %v4030, %v3783
      %v4032 = vmul.u32.u64.compose %v4031, 3817748708
      %v4033 = vextract.low.u32 %v4032
      %v4034 = vextract.high.u32 %v4032
      %v4035 = vshrl.u32 %v4034, 4
      %v4036 = vmul.u32 %v4035, 18
      %v4037 = vsub.s32 %v4031, %v4036
      %v4038 = vsub.s32 0, %v4037
      %v4039 = vsel %vm4029, %v4038, %v4037
      %vm4040 = vcmp.lt.s32.totalorder %v3784, 0
      %v4041 = vsub.s32 0, %v3784
      %v4042 = vsel %vm4040, %v4041, %v3784
      %v4043 = vmul.u32.u64.compose %v4042, 3817748708
      %v4044 = vextract.low.u32 %v4043
      %v4045 = vextract.high.u32 %v4043
      %v4046 = vshrl.u32 %v4045, 4
      %v4047 = vmul.u32 %v4046, 18
      %v4048 = vsub.s32 %v4042, %v4047
      %v4049 = vsub.s32 0, %v4048
      %v4050 = vsel %vm4040, %v4049, %v4048
      %vm4051 = vcmp.lt.s32.totalorder %v3785, 0
      %v4052 = vsub.s32 0, %v3785
      %v4053 = vsel %vm4051, %v4052, %v3785
      %v4054 = vmul.u32.u64.compose %v4053, 3817748708
      %v4055 = vextract.low.u32 %v4054
      %v4056 = vextract.high.u32 %v4054
      %v4057 = vshrl.u32 %v4056, 4
      %v4058 = vmul.u32 %v4057, 18
      %v4059 = vsub.s32 %v4053, %v4058
      %v4060 = vsub.s32 0, %v4059
      %v4061 = vsel %vm4051, %v4060, %v4059
      %vm4062 = vcmp.lt.s32.totalorder %v3786, 0
      %v4063 = vsub.s32 0, %v3786
      %v4064 = vsel %vm4062, %v4063, %v3786
      %v4065 = vmul.u32.u64.compose %v4064, 3817748708
      %v4066 = vextract.low.u32 %v4065
      %v4067 = vextract.high.u32 %v4065
      %v4068 = vshrl.u32 %v4067, 4
      %v4069 = vmul.u32 %v4068, 18
      %v4070 = vsub.s32 %v4064, %v4069
      %v4071 = vsub.s32 0, %v4070
      %v4072 = vsel %vm4062, %v4071, %v4070
      %vm4073 = vcmp.lt.s32.totalorder %v3787, 0
      %v4074 = vsub.s32 0, %v3787
      %v4075 = vsel %vm4073, %v4074, %v3787
      %v4076 = vmul.u32.u64.compose %v4075, 3817748708
      %v4077 = vextract.low.u32 %v4076
      %v4078 = vextract.high.u32 %v4076
      %v4079 = vshrl.u32 %v4078, 4
      %v4080 = vmul.u32 %v4079, 18
      %v4081 = vsub.s32 %v4075, %v4080
      %v4082 = vsub.s32 0, %v4081
      %v4083 = vsel %vm4073, %v4082, %v4081
      %vm4084 = vcmp.lt.s32.totalorder %v3788, 0
      %v4085 = vsub.s32 0, %v3788
      %v4086 = vsel %vm4084, %v4085, %v3788
      %v4087 = vmul.u32.u64.compose %v4086, 3817748708
      %v4088 = vextract.low.u32 %v4087
      %v4089 = vextract.high.u32 %v4087
      %v4090 = vshrl.u32 %v4089, 4
      %v4091 = vmul.u32 %v4090, 18
      %v4092 = vsub.s32 %v4086, %v4091
      %v4093 = vsub.s32 0, %v4092
      %v4094 = vsel %vm4084, %v4093, %v4092
      %vm4095 = vcmp.lt.s32.totalorder %v3789, 0
      %v4096 = vsub.s32 0, %v3789
      %v4097 = vsel %vm4095, %v4096, %v3789
      %v4098 = vmul.u32.u64.compose %v4097, 3817748708
      %v4099 = vextract.low.u32 %v4098
      %v4100 = vextract.high.u32 %v4098
      %v4101 = vshrl.u32 %v4100, 4
      %v4102 = vmul.u32 %v4101, 18
      %v4103 = vsub.s32 %v4097, %v4102
      %v4104 = vsub.s32 0, %v4103
      %v4105 = vsel %vm4095, %v4104, %v4103
      %vm4106 = vcmp.lt.s32.totalorder %v3790, 0
      %v4107 = vsub.s32 0, %v3790
      %v4108 = vsel %vm4106, %v4107, %v3790
      %v4109 = vmul.u32.u64.compose %v4108, 3817748708
      %v4110 = vextract.low.u32 %v4109
      %v4111 = vextract.high.u32 %v4109
      %v4112 = vshrl.u32 %v4111, 4
      %v4113 = vmul.u32 %v4112, 18
      %v4114 = vsub.s32 %v4108, %v4113
      %v4115 = vsub.s32 0, %v4114
      %v4116 = vsel %vm4106, %v4115, %v4114
      %vm4117 = vcmp.lt.s32.totalorder %v3791, 0
      %v4118 = vsub.s32 0, %v3791
      %v4119 = vsel %vm4117, %v4118, %v3791
      %v4120 = vmul.u32.u64.compose %v4119, 3817748708
      %v4121 = vextract.low.u32 %v4120
      %v4122 = vextract.high.u32 %v4120
      %v4123 = vshrl.u32 %v4122, 4
      %v4124 = vmul.u32 %v4123, 18
      %v4125 = vsub.s32 %v4119, %v4124
      %v4126 = vsub.s32 0, %v4125
      %v4127 = vsel %vm4117, %v4126, %v4125
      %vm4128 = vcmp.lt.s32.totalorder %v3792, 0
      %v4129 = vsub.s32 0, %v3792
      %v4130 = vsel %vm4128, %v4129, %v3792
      %v4131 = vmul.u32.u64.compose %v4130, 3817748708
      %v4132 = vextract.low.u32 %v4131
      %v4133 = vextract.high.u32 %v4131
      %v4134 = vshrl.u32 %v4133, 4
      %v4135 = vmul.u32 %v4134, 18
      %v4136 = vsub.s32 %v4130, %v4135
      %v4137 = vsub.s32 0, %v4136
      %v4138 = vsel %vm4128, %v4137, %v4136
      %vm4139 = vcmp.lt.s32.totalorder %v3793, 0
      %v4140 = vsub.s32 0, %v3793
      %v4141 = vsel %vm4139, %v4140, %v3793
      %v4142 = vmul.u32.u64.compose %v4141, 3817748708
      %v4143 = vextract.low.u32 %v4142
      %v4144 = vextract.high.u32 %v4142
      %v4145 = vshrl.u32 %v4144, 4
      %v4146 = vmul.u32 %v4145, 18
      %v4147 = vsub.s32 %v4141, %v4146
      %v4148 = vsub.s32 0, %v4147
      %v4149 = vsel %vm4139, %v4148, %v4147
      %vm4150 = vcmp.lt.s32.totalorder %v3794, 0
      %v4151 = vsub.s32 0, %v3794
      %v4152 = vsel %vm4150, %v4151, %v3794
      %v4153 = vmul.u32.u64.compose %v4152, 3817748708
      %v4154 = vextract.low.u32 %v4153
      %v4155 = vextract.high.u32 %v4153
      %v4156 = vshrl.u32 %v4155, 4
      %v4157 = vmul.u32 %v4156, 18
      %v4158 = vsub.s32 %v4152, %v4157
      %v4159 = vsub.s32 0, %v4158
      %v4160 = vsel %vm4150, %v4159, %v4158
      %vm4161 = vcmp.lt.s32.totalorder %v3795, 0
      %v4162 = vsub.s32 0, %v3795
      %v4163 = vsel %vm4161, %v4162, %v3795
      %v4164 = vmul.u32.u64.compose %v4163, 3817748708
      %v4165 = vextract.low.u32 %v4164
      %v4166 = vextract.high.u32 %v4164
      %v4167 = vshrl.u32 %v4166, 4
      %v4168 = vmul.u32 %v4167, 18
      %v4169 = vsub.s32 %v4163, %v4168
      %v4170 = vsub.s32 0, %v4169
      %v4171 = vsel %vm4161, %v4170, %v4169
      %vm4172 = vcmp.lt.s32.totalorder %v3796, 0
      %v4173 = vsub.s32 0, %v3796
      %v4174 = vsel %vm4172, %v4173, %v3796
      %v4175 = vmul.u32.u64.compose %v4174, 3817748708
      %v4176 = vextract.low.u32 %v4175
      %v4177 = vextract.high.u32 %v4175
      %v4178 = vshrl.u32 %v4177, 4
      %v4179 = vmul.u32 %v4178, 18
      %v4180 = vsub.s32 %v4174, %v4179
      %v4181 = vsub.s32 0, %v4180
      %v4182 = vsel %vm4172, %v4181, %v4180
      %vm4183 = vcmp.lt.s32.totalorder %v3797, 0
      %v4184 = vsub.s32 0, %v3797
      %v4185 = vsel %vm4183, %v4184, %v3797
      %v4186 = vmul.u32.u64.compose %v4185, 3817748708
      %v4187 = vextract.low.u32 %v4186
      %v4188 = vextract.high.u32 %v4186
      %v4189 = vshrl.u32 %v4188, 4
      %v4190 = vmul.u32 %v4189, 18
      %v4191 = vsub.s32 %v4185, %v4190
      %v4192 = vsub.s32 0, %v4191
      %v4193 = vsel %vm4183, %v4192, %v4191
      %vm4194 = vcmp.ne.s32.totalorder %v3808, 0
      %vm4195 = vcmp.ne.s32.totalorder %v3819, 0
      %vm4196 = vcmp.ne.s32.totalorder %v3830, 0
      %vm4197 = vcmp.ne.s32.totalorder %v3841, 0
      %vm4198 = vcmp.ne.s32.totalorder %v3852, 0
      %vm4199 = vcmp.ne.s32.totalorder %v3863, 0
      %vm4200 = vcmp.ne.s32.totalorder %v3874, 0
      %vm4201 = vcmp.ne.s32.totalorder %v3885, 0
      %vm4202 = vcmp.ne.s32.totalorder %v3896, 0
      %vm4203 = vcmp.ne.s32.totalorder %v3907, 0
      %vm4204 = vcmp.ne.s32.totalorder %v3918, 0
      %vm4205 = vcmp.ne.s32.totalorder %v3929, 0
      %vm4206 = vcmp.ne.s32.totalorder %v3940, 0
      %vm4207 = vcmp.ne.s32.totalorder %v3951, 0
      %vm4208 = vcmp.ne.s32.totalorder %v3962, 0
      %vm4209 = vcmp.ne.s32.totalorder %v3973, 0
      %vm4210 = vcmp.ne.s32.totalorder %v3984, 0
      %vm4211 = vcmp.ne.s32.totalorder %v3995, 0
      %vm4212 = vcmp.ne.s32.totalorder %v4006, 0
      %vm4213 = vcmp.ne.s32.totalorder %v4017, 0
      %vm4214 = vcmp.ne.s32.totalorder %v4028, 0
      %vm4215 = vcmp.ne.s32.totalorder %v4039, 0
      %vm4216 = vcmp.ne.s32.totalorder %v4050, 0
      %vm4217 = vcmp.ne.s32.totalorder %v4061, 0
      %vm4218 = vcmp.ne.s32.totalorder %v4072, 0
      %vm4219 = vcmp.ne.s32.totalorder %v4083, 0
      %vm4220 = vcmp.ne.s32.totalorder %v4094, 0
      %vm4221 = vcmp.ne.s32.totalorder %v4105, 0
      %vm4222 = vcmp.ne.s32.totalorder %v4116, 0
      %vm4223 = vcmp.ne.s32.totalorder %v4127, 0
      %vm4224 = vcmp.ne.s32.totalorder %v4138, 0
      %vm4225 = vcmp.ne.s32.totalorder %v4149, 0
      %vm4226 = vcmp.ne.s32.totalorder %v4160, 0
      %vm4227 = vcmp.ne.s32.totalorder %v4171, 0
      %vm4228 = vcmp.ne.s32.totalorder %v4182, 0
      %vm4229 = vcmp.ne.s32.totalorder %v4193, 0
      %vm4230 = vcmp.lt.s32.totalorder %v3808, 0
      %vm4231 = vcmp.lt.s32.totalorder %v3819, 0
      %vm4232 = vcmp.lt.s32.totalorder %v3830, 0
      %vm4233 = vcmp.lt.s32.totalorder %v3841, 0
      %vm4234 = vcmp.lt.s32.totalorder %v3852, 0
      %vm4235 = vcmp.lt.s32.totalorder %v3863, 0
      %vm4236 = vcmp.lt.s32.totalorder %v3874, 0
      %vm4237 = vcmp.lt.s32.totalorder %v3885, 0
      %vm4238 = vcmp.lt.s32.totalorder %v3896, 0
      %vm4239 = vcmp.lt.s32.totalorder %v3907, 0
      %vm4240 = vcmp.lt.s32.totalorder %v3918, 0
      %vm4241 = vcmp.lt.s32.totalorder %v3929, 0
      %vm4242 = vcmp.lt.s32.totalorder %v3940, 0
      %vm4243 = vcmp.lt.s32.totalorder %v3951, 0
      %vm4244 = vcmp.lt.s32.totalorder %v3962, 0
      %vm4245 = vcmp.lt.s32.totalorder %v3973, 0
      %vm4246 = vcmp.lt.s32.totalorder %v3984, 0
      %vm4247 = vcmp.lt.s32.totalorder %v3995, 0
      %vm4248 = vcmp.lt.s32.totalorder %v4006, 0
      %vm4249 = vcmp.lt.s32.totalorder %v4017, 0
      %vm4250 = vcmp.lt.s32.totalorder %v4028, 0
      %vm4251 = vcmp.lt.s32.totalorder %v4039, 0
      %vm4252 = vcmp.lt.s32.totalorder %v4050, 0
      %vm4253 = vcmp.lt.s32.totalorder %v4061, 0
      %vm4254 = vcmp.lt.s32.totalorder %v4072, 0
      %vm4255 = vcmp.lt.s32.totalorder %v4083, 0
      %vm4256 = vcmp.lt.s32.totalorder %v4094, 0
      %vm4257 = vcmp.lt.s32.totalorder %v4105, 0
      %vm4258 = vcmp.lt.s32.totalorder %v4116, 0
      %vm4259 = vcmp.lt.s32.totalorder %v4127, 0
      %vm4260 = vcmp.lt.s32.totalorder %v4138, 0
      %vm4261 = vcmp.lt.s32.totalorder %v4149, 0
      %vm4262 = vcmp.lt.s32.totalorder %v4160, 0
      %vm4263 = vcmp.lt.s32.totalorder %v4171, 0
      %vm4264 = vcmp.lt.s32.totalorder %v4182, 0
      %vm4265 = vcmp.lt.s32.totalorder %v4193, 0
      %vm4266 = vmand %vm4230, %vm4194
      %vm4267 = vmand %vm4231, %vm4195
      %vm4268 = vmand %vm4232, %vm4196
      %vm4269 = vmand %vm4233, %vm4197
      %vm4270 = vmand %vm4234, %vm4198
      %vm4271 = vmand %vm4235, %vm4199
      %vm4272 = vmand %vm4236, %vm4200
      %vm4273 = vmand %vm4237, %vm4201
      %vm4274 = vmand %vm4238, %vm4202
      %vm4275 = vmand %vm4239, %vm4203
      %vm4276 = vmand %vm4240, %vm4204
      %vm4277 = vmand %vm4241, %vm4205
      %vm4278 = vmand %vm4242, %vm4206
      %vm4279 = vmand %vm4243, %vm4207
      %vm4280 = vmand %vm4244, %vm4208
      %vm4281 = vmand %vm4245, %vm4209
      %vm4282 = vmand %vm4246, %vm4210
      %vm4283 = vmand %vm4247, %vm4211
      %vm4284 = vmand %vm4248, %vm4212
      %vm4285 = vmand %vm4249, %vm4213
      %vm4286 = vmand %vm4250, %vm4214
      %vm4287 = vmand %vm4251, %vm4215
      %vm4288 = vmand %vm4252, %vm4216
      %vm4289 = vmand %vm4253, %vm4217
      %vm4290 = vmand %vm4254, %vm4218
      %vm4291 = vmand %vm4255, %vm4219
      %vm4292 = vmand %vm4256, %vm4220
      %vm4293 = vmand %vm4257, %vm4221
      %vm4294 = vmand %vm4258, %vm4222
      %vm4295 = vmand %vm4259, %vm4223
      %vm4296 = vmand %vm4260, %vm4224
      %vm4297 = vmand %vm4261, %vm4225
      %vm4298 = vmand %vm4262, %vm4226
      %vm4299 = vmand %vm4263, %vm4227
      %vm4300 = vmand %vm4264, %vm4228
      %vm4301 = vmand %vm4265, %vm4229
      %v4302 = vadd.s32 %v3808, 18
      %v4303 = vadd.s32 %v3819, 18
      %v4304 = vadd.s32 %v3830, 18
      %v4305 = vadd.s32 %v3841, 18
      %v4306 = vadd.s32 %v3852, 18
      %v4307 = vadd.s32 %v3863, 18
      %v4308 = vadd.s32 %v3874, 18
      %v4309 = vadd.s32 %v3885, 18
      %v4310 = vadd.s32 %v3896, 18
      %v4311 = vadd.s32 %v3907, 18
      %v4312 = vadd.s32 %v3918, 18
      %v4313 = vadd.s32 %v3929, 18
      %v4314 = vadd.s32 %v3940, 18
      %v4315 = vadd.s32 %v3951, 18
      %v4316 = vadd.s32 %v3962, 18
      %v4317 = vadd.s32 %v3973, 18
      %v4318 = vadd.s32 %v3984, 18
      %v4319 = vadd.s32 %v3995, 18
      %v4320 = vadd.s32 %v4006, 18
      %v4321 = vadd.s32 %v4017, 18
      %v4322 = vadd.s32 %v4028, 18
      %v4323 = vadd.s32 %v4039, 18
      %v4324 = vadd.s32 %v4050, 18
      %v4325 = vadd.s32 %v4061, 18
      %v4326 = vadd.s32 %v4072, 18
      %v4327 = vadd.s32 %v4083, 18
      %v4328 = vadd.s32 %v4094, 18
      %v4329 = vadd.s32 %v4105, 18
      %v4330 = vadd.s32 %v4116, 18
      %v4331 = vadd.s32 %v4127, 18
      %v4332 = vadd.s32 %v4138, 18
      %v4333 = vadd.s32 %v4149, 18
      %v4334 = vadd.s32 %v4160, 18
      %v4335 = vadd.s32 %v4171, 18
      %v4336 = vadd.s32 %v4182, 18
      %v4337 = vadd.s32 %v4193, 18
      %v4338 = vsel %vm4266, %v4302, %v3808
      %v4339 = vsel %vm4267, %v4303, %v3819
      %v4340 = vsel %vm4268, %v4304, %v3830
      %v4341 = vsel %vm4269, %v4305, %v3841
      %v4342 = vsel %vm4270, %v4306, %v3852
      %v4343 = vsel %vm4271, %v4307, %v3863
      %v4344 = vsel %vm4272, %v4308, %v3874
      %v4345 = vsel %vm4273, %v4309, %v3885
      %v4346 = vsel %vm4274, %v4310, %v3896
      %v4347 = vsel %vm4275, %v4311, %v3907
      %v4348 = vsel %vm4276, %v4312, %v3918
      %v4349 = vsel %vm4277, %v4313, %v3929
      %v4350 = vsel %vm4278, %v4314, %v3940
      %v4351 = vsel %vm4279, %v4315, %v3951
      %v4352 = vsel %vm4280, %v4316, %v3962
      %v4353 = vsel %vm4281, %v4317, %v3973
      %v4354 = vsel %vm4282, %v4318, %v3984
      %v4355 = vsel %vm4283, %v4319, %v3995
      %v4356 = vsel %vm4284, %v4320, %v4006
      %v4357 = vsel %vm4285, %v4321, %v4017
      %v4358 = vsel %vm4286, %v4322, %v4028
      %v4359 = vsel %vm4287, %v4323, %v4039
      %v4360 = vsel %vm4288, %v4324, %v4050
      %v4361 = vsel %vm4289, %v4325, %v4061
      %v4362 = vsel %vm4290, %v4326, %v4072
      %v4363 = vsel %vm4291, %v4327, %v4083
      %v4364 = vsel %vm4292, %v4328, %v4094
      %v4365 = vsel %vm4293, %v4329, %v4105
      %v4366 = vsel %vm4294, %v4330, %v4116
      %v4367 = vsel %vm4295, %v4331, %v4127
      %v4368 = vsel %vm4296, %v4332, %v4138
      %v4369 = vsel %vm4297, %v4333, %v4149
      %v4370 = vsel %vm4298, %v4334, %v4160
      %v4371 = vsel %vm4299, %v4335, %v4171
      %v4372 = vsel %vm4300, %v4336, %v4182
      %v4373 = vsel %vm4301, %v4337, %v4193
      %vm4374 = vcmp.lt.s32.totalorder %v4338, 16
      %vm4375 = vcmp.lt.s32.totalorder %v4339, 16
      %vm4376 = vcmp.lt.s32.totalorder %v4340, 16
      %vm4377 = vcmp.lt.s32.totalorder %v4341, 16
      %vm4378 = vcmp.lt.s32.totalorder %v4342, 16
      %vm4379 = vcmp.lt.s32.totalorder %v4343, 16
      %vm4380 = vcmp.lt.s32.totalorder %v4344, 16
      %vm4381 = vcmp.lt.s32.totalorder %v4345, 16
      %vm4382 = vcmp.lt.s32.totalorder %v4346, 16
      %vm4383 = vcmp.lt.s32.totalorder %v4347, 16
      %vm4384 = vcmp.lt.s32.totalorder %v4348, 16
      %vm4385 = vcmp.lt.s32.totalorder %v4349, 16
      %vm4386 = vcmp.lt.s32.totalorder %v4350, 16
      %vm4387 = vcmp.lt.s32.totalorder %v4351, 16
      %vm4388 = vcmp.lt.s32.totalorder %v4352, 16
      %vm4389 = vcmp.lt.s32.totalorder %v4353, 16
      %vm4390 = vcmp.lt.s32.totalorder %v4354, 16
      %vm4391 = vcmp.lt.s32.totalorder %v4355, 16
      %vm4392 = vcmp.lt.s32.totalorder %v4356, 16
      %vm4393 = vcmp.lt.s32.totalorder %v4357, 16
      %vm4394 = vcmp.lt.s32.totalorder %v4358, 16
      %vm4395 = vcmp.lt.s32.totalorder %v4359, 16
      %vm4396 = vcmp.lt.s32.totalorder %v4360, 16
      %vm4397 = vcmp.lt.s32.totalorder %v4361, 16
      %vm4398 = vcmp.lt.s32.totalorder %v4362, 16
      %vm4399 = vcmp.lt.s32.totalorder %v4363, 16
      %vm4400 = vcmp.lt.s32.totalorder %v4364, 16
      %vm4401 = vcmp.lt.s32.totalorder %v4365, 16
      %vm4402 = vcmp.lt.s32.totalorder %v4366, 16
      %vm4403 = vcmp.lt.s32.totalorder %v4367, 16
      %vm4404 = vcmp.lt.s32.totalorder %v4368, 16
      %vm4405 = vcmp.lt.s32.totalorder %v4369, 16
      %vm4406 = vcmp.lt.s32.totalorder %v4370, 16
      %vm4407 = vcmp.lt.s32.totalorder %v4371, 16
      %vm4408 = vcmp.lt.s32.totalorder %v4372, 16
      %vm4409 = vcmp.lt.s32.totalorder %v4373, 16
      %v4410 = vsel %vm4374, 1, 0
      %v4411 = vsel %vm4375, 1, 0
      %v4412 = vsel %vm4376, 1, 0
      %v4413 = vsel %vm4377, 1, 0
      %v4414 = vsel %vm4378, 1, 0
      %v4415 = vsel %vm4379, 1, 0
      %v4416 = vsel %vm4380, 1, 0
      %v4417 = vsel %vm4381, 1, 0
      %v4418 = vsel %vm4382, 1, 0
      %v4419 = vsel %vm4383, 1, 0
      %v4420 = vsel %vm4384, 1, 0
      %v4421 = vsel %vm4385, 1, 0
      %v4422 = vsel %vm4386, 1, 0
      %v4423 = vsel %vm4387, 1, 0
      %v4424 = vsel %vm4388, 1, 0
      %v4425 = vsel %vm4389, 1, 0
      %v4426 = vsel %vm4390, 1, 0
      %v4427 = vsel %vm4391, 1, 0
      %v4428 = vsel %vm4392, 1, 0
      %v4429 = vsel %vm4393, 1, 0
      %v4430 = vsel %vm4394, 1, 0
      %v4431 = vsel %vm4395, 1, 0
      %v4432 = vsel %vm4396, 1, 0
      %v4433 = vsel %vm4397, 1, 0
      %v4434 = vsel %vm4398, 1, 0
      %v4435 = vsel %vm4399, 1, 0
      %v4436 = vsel %vm4400, 1, 0
      %v4437 = vsel %vm4401, 1, 0
      %v4438 = vsel %vm4402, 1, 0
      %v4439 = vsel %vm4403, 1, 0
      %v4440 = vsel %vm4404, 1, 0
      %v4441 = vsel %vm4405, 1, 0
      %v4442 = vsel %vm4406, 1, 0
      %v4443 = vsel %vm4407, 1, 0
      %v4444 = vsel %vm4408, 1, 0
      %v4445 = vsel %vm4409, 1, 0
      %v4446 = vcvt.s32.f32 %v4410
      %v4447 = vcvt.s32.f32 %v4411
      %v4448 = vcvt.s32.f32 %v4412
      %v4449 = vcvt.s32.f32 %v4413
      %v4450 = vcvt.s32.f32 %v4414
      %v4451 = vcvt.s32.f32 %v4415
      %v4452 = vcvt.s32.f32 %v4416
      %v4453 = vcvt.s32.f32 %v4417
      %v4454 = vcvt.s32.f32 %v4418
      %v4455 = vcvt.s32.f32 %v4419
      %v4456 = vcvt.s32.f32 %v4420
      %v4457 = vcvt.s32.f32 %v4421
      %v4458 = vcvt.s32.f32 %v4422
      %v4459 = vcvt.s32.f32 %v4423
      %v4460 = vcvt.s32.f32 %v4424
      %v4461 = vcvt.s32.f32 %v4425
      %v4462 = vcvt.s32.f32 %v4426
      %v4463 = vcvt.s32.f32 %v4427
      %v4464 = vcvt.s32.f32 %v4428
      %v4465 = vcvt.s32.f32 %v4429
      %v4466 = vcvt.s32.f32 %v4430
      %v4467 = vcvt.s32.f32 %v4431
      %v4468 = vcvt.s32.f32 %v4432
      %v4469 = vcvt.s32.f32 %v4433
      %v4470 = vcvt.s32.f32 %v4434
      %v4471 = vcvt.s32.f32 %v4435
      %v4472 = vcvt.s32.f32 %v4436
      %v4473 = vcvt.s32.f32 %v4437
      %v4474 = vcvt.s32.f32 %v4438
      %v4475 = vcvt.s32.f32 %v4439
      %v4476 = vcvt.s32.f32 %v4440
      %v4477 = vcvt.s32.f32 %v4441
      %v4478 = vcvt.s32.f32 %v4442
      %v4479 = vcvt.s32.f32 %v4443
      %v4480 = vcvt.s32.f32 %v4444
      %v4481 = vcvt.s32.f32 %v4445
      %v4482 = vmul.f32 %v3689, %v4446
      %v4483 = vmul.f32 %v3690, %v4447
      %v4484 = vmul.f32 %v3691, %v4448
      %v4485 = vmul.f32 %v3692, %v4449
      %v4486 = vmul.f32 %v3693, %v4450
      %v4487 = vmul.f32 %v3694, %v4451
      %v4488 = vmul.f32 %v3695, %v4452
      %v4489 = vmul.f32 %v3696, %v4453
      %v4490 = vmul.f32 %v3697, %v4454
      %v4491 = vmul.f32 %v3698, %v4455
      %v4492 = vmul.f32 %v3699, %v4456
      %v4493 = vmul.f32 %v3700, %v4457
      %v4494 = vmul.f32 %v3701, %v4458
      %v4495 = vmul.f32 %v3702, %v4459
      %v4496 = vmul.f32 %v3703, %v4460
      %v4497 = vmul.f32 %v3704, %v4461
      %v4498 = vmul.f32 %v3705, %v4462
      %v4499 = vmul.f32 %v3706, %v4463
      %v4500 = vmul.f32 %v3707, %v4464
      %v4501 = vmul.f32 %v3708, %v4465
      %v4502 = vmul.f32 %v3709, %v4466
      %v4503 = vmul.f32 %v3710, %v4467
      %v4504 = vmul.f32 %v3711, %v4468
      %v4505 = vmul.f32 %v3712, %v4469
      %v4506 = vmul.f32 %v3713, %v4470
      %v4507 = vmul.f32 %v3714, %v4471
      %v4508 = vmul.f32 %v3715, %v4472
      %v4509 = vmul.f32 %v3716, %v4473
      %v4510 = vmul.f32 %v3717, %v4474
      %v4511 = vmul.f32 %v3718, %v4475
      %v4512 = vmul.f32 %v3719, %v4476
      %v4513 = vmul.f32 %v3720, %v4477
      %v4514 = vmul.f32 %v3721, %v4478
      %v4515 = vmul.f32 %v3722, %v4479
      %v4516 = vmul.f32 %v3723, %v4480
      %v4517 = vmul.f32 %v3724, %v4481
      %v4518 = vadd.f32 %v4482, %v4483
      %v4519 = vadd.f32 %v4518, %v4484
      %v4520 = vadd.f32 %v4519, %v4485
      %v4521 = vadd.f32 %v4520, %v4486
      %v4522 = vadd.f32 %v4521, %v4487
      %v4523 = vadd.f32 %v4522, %v4488
      %v4524 = vadd.f32 %v4523, %v4489
      %v4525 = vadd.f32 %v4524, %v4490
      %v4526 = vadd.f32 %v4525, %v4491
      %v4527 = vadd.f32 %v4526, %v4492
      %v4528 = vadd.f32 %v4527, %v4493
      %v4529 = vadd.f32 %v4528, %v4494
      %v4530 = vadd.f32 %v4529, %v4495
      %v4531 = vadd.f32 %v4530, %v4496
      %v4532 = vadd.f32 %v4531, %v4497
      %v4533 = vadd.f32 %v4532, %v4498
      %v4534 = vadd.f32 %v4533, %v4499
      %v4535 = vadd.f32 %v4534, %v4500
      %v4536 = vadd.f32 %v4535, %v4501
      %v4537 = vadd.f32 %v4536, %v4502
      %v4538 = vadd.f32 %v4537, %v4503
      %v4539 = vadd.f32 %v4538, %v4504
      %v4540 = vadd.f32 %v4539, %v4505
      %v4541 = vadd.f32 %v4540, %v4506
      %v4542 = vadd.f32 %v4541, %v4507
      %v4543 = vadd.f32 %v4542, %v4508
      %v4544 = vadd.f32 %v4543, %v4509
      %v4545 = vadd.f32 %v4544, %v4510
      %v4546 = vadd.f32 %v4545, %v4511
      %v4547 = vadd.f32 %v4546, %v4512
      %v4548 = vadd.f32 %v4547, %v4513
      %v4549 = vadd.f32 %v4548, %v4514
      %v4550 = vadd.f32 %v4549, %v4515
      %v4551 = vadd.f32 %v4550, %v4516
      %v4552 = vadd.f32 %v4551, %v4517
      %v4553 = vrot.slane %v4552, 4
      %v4554 = vadd.f32 %v4552, %v4553
      %v4555 = vrot.slane %v4554, 2
      %v4556 = vadd.f32 %v4554, %v4555
      %v4557 = vrot.slane %v4556, 1
      %v4558 = vadd.f32 %v4556, %v4557
      %4559 = vst [vmem:[%s261] sm:$0x1] %v4558
      %v4560 = vmul.f32 %v4482, %v3689
      %v4561 = vmul.f32 %v4483, %v3690
      %v4562 = vmul.f32 %v4484, %v3691
      %v4563 = vmul.f32 %v4485, %v3692
      %v4564 = vmul.f32 %v4486, %v3693
      %v4565 = vmul.f32 %v4487, %v3694
      %v4566 = vmul.f32 %v4488, %v3695
      %v4567 = vmul.f32 %v4489, %v3696
      %v4568 = vmul.f32 %v4490, %v3697
      %v4569 = vmul.f32 %v4491, %v3698
      %v4570 = vmul.f32 %v4492, %v3699
      %v4571 = vmul.f32 %v4493, %v3700
      %v4572 = vmul.f32 %v4494, %v3701
      %v4573 = vmul.f32 %v4495, %v3702
      %v4574 = vmul.f32 %v4496, %v3703
      %v4575 = vmul.f32 %v4497, %v3704
      %v4576 = vmul.f32 %v4498, %v3705
      %v4577 = vmul.f32 %v4499, %v3706
      %v4578 = vmul.f32 %v4500, %v3707
      %v4579 = vmul.f32 %v4501, %v3708
      %v4580 = vmul.f32 %v4502, %v3709
      %v4581 = vmul.f32 %v4503, %v3710
      %v4582 = vmul.f32 %v4504, %v3711
      %v4583 = vmul.f32 %v4505, %v3712
      %v4584 = vmul.f32 %v4506, %v3713
      %v4585 = vmul.f32 %v4507, %v3714
      %v4586 = vmul.f32 %v4508, %v3715
      %v4587 = vmul.f32 %v4509, %v3716
      %v4588 = vmul.f32 %v4510, %v3717
      %v4589 = vmul.f32 %v4511, %v3718
      %v4590 = vmul.f32 %v4512, %v3719
      %v4591 = vmul.f32 %v4513, %v3720
      %v4592 = vmul.f32 %v4514, %v3721
      %v4593 = vmul.f32 %v4515, %v3722
      %v4594 = vmul.f32 %v4516, %v3723
      %v4595 = vmul.f32 %v4517, %v3724
      %v4596 = vadd.f32 %v4560, %v4561
      %v4597 = vadd.f32 %v4596, %v4562
      %v4598 = vadd.f32 %v4597, %v4563
      %v4599 = vadd.f32 %v4598, %v4564
      %v4600 = vadd.f32 %v4599, %v4565
      %v4601 = vadd.f32 %v4600, %v4566
      %v4602 = vadd.f32 %v4601, %v4567
      %v4603 = vadd.f32 %v4602, %v4568
      %v4604 = vadd.f32 %v4603, %v4569
      %v4605 = vadd.f32 %v4604, %v4570
      %v4606 = vadd.f32 %v4605, %v4571
      %v4607 = vadd.f32 %v4606, %v4572
      %v4608 = vadd.f32 %v4607, %v4573
      %v4609 = vadd.f32 %v4608, %v4574
      %v4610 = vadd.f32 %v4609, %v4575
      %v4611 = vadd.f32 %v4610, %v4576
      %v4612 = vadd.f32 %v4611, %v4577
      %v4613 = vadd.f32 %v4612, %v4578
      %v4614 = vadd.f32 %v4613, %v4579
      %v4615 = vadd.f32 %v4614, %v4580
      %v4616 = vadd.f32 %v4615, %v4581
      %v4617 = vadd.f32 %v4616, %v4582
      %v4618 = vadd.f32 %v4617, %v4583
      %v4619 = vadd.f32 %v4618, %v4584
      %v4620 = vadd.f32 %v4619, %v4585
      %v4621 = vadd.f32 %v4620, %v4586
      %v4622 = vadd.f32 %v4621, %v4587
      %v4623 = vadd.f32 %v4622, %v4588
      %v4624 = vadd.f32 %v4623, %v4589
      %v4625 = vadd.f32 %v4624, %v4590
      %v4626 = vadd.f32 %v4625, %v4591
      %v4627 = vadd.f32 %v4626, %v4592
      %v4628 = vadd.f32 %v4627, %v4593
      %v4629 = vadd.f32 %v4628, %v4594
      %v4630 = vadd.f32 %v4629, %v4595
      %v4631 = vrot.slane %v4630, 4
      %v4632 = vadd.f32 %v4630, %v4631
      %v4633 = vrot.slane %v4632, 2
      %v4634 = vadd.f32 %v4632, %v4633
      %v4635 = vrot.slane %v4634, 1
      %v4636 = vadd.f32 %v4634, %v4635
      %4637 = vst [vmem:[%s267] sm:$0x1] %v4636
      %p4638 = scmp.lt.s32.totalorder %s20, 1
      %s4639 = scalar_select %p4638, %s20, 1
      %p4640 = scmp.lt.s32.totalorder %s21, 0
      %s4641 = scalar_select %p4640, %s21, 0
      %s4642 = smul.addr %s4639, 36
      %s4643 = sadd.s32 %s4641, %s4642
      %s4644 = smul.addr %s4643, 8
      %s4645 = scalar_lea.vmem %s2, %s4644
      %p4646 = scmp.lt.s32.totalorder %s20, 1
      %s4647 = scalar_select %p4646, %s20, 1
      %p4648 = scmp.lt.s32.totalorder %s21, 0
      %s4649 = scalar_select %p4648, %s21, 0
      %s4650 = sadd.s32 %s4649, %s4647
      %s4651 = scalar_lea.vmem %s3, %s4650
      %p4652 = scmp.lt.s32.totalorder %s20, 1
      %s4653 = scalar_select %p4652, %s20, 1
      %p4654 = scmp.lt.s32.totalorder %s21, 0
      %s4655 = scalar_select %p4654, %s21, 0
      %s4656 = sadd.s32 %s4655, %s4653
      %s4657 = scalar_lea.vmem %s4, %s4656
      // Predicated region
      $region29: #{conv_block_pallas.2} parent=27 // pred_check
        %p4658 = pneg %p100
      $region30: #{conv_block_pallas.2} parent=27 // pred_check_branch
        %4660 = sbr.rel (%p4658) target = $region32
      $region31: #{conv_block_pallas.2} parent=27 // pred_region
        _
      $region32: #{conv_block_pallas.2} parent=27 // pred_fallthru
        _
      // Predicated region
      $region33: #{conv_block_pallas.2} parent=27 // pred_check
        %p4661 = pneg %p128
      $region34: #{conv_block_pallas.2} parent=27 // pred_check_branch
        %4663 = sbr.rel (%p4661) target = $region36
      $region35: #{conv_block_pallas.2} parent=27 // pred_region
        _
      $region36: #{conv_block_pallas.2} parent=27 // pred_fallthru
        _
      // Predicated region
      $region37: #{conv_block_pallas.2} parent=27 // pred_check
        %p4664 = pneg %p156
      $region38: #{conv_block_pallas.2} parent=27 // pred_check_branch
        %4666 = sbr.rel (%p4664) target = $region40
      $region39: #{conv_block_pallas.2} parent=27 // pred_region
        _
      $region40: #{conv_block_pallas.2} parent=27 // pred_fallthru
        _
    $region28: #{conv_block_pallas.2} parent=5 // pred_fallthru
      _
    %p4667 = scmp.le.s32.totalorder 2, %s11
    // Predicated region
    $region41: #{conv_block_pallas.2} parent=5 // pred_check
      %p4668 = pneg %p4667
    $region42: #{conv_block_pallas.2} parent=5 // pred_check_branch
      %4670 = sbr.rel (%p4668) target = $region44
    $region43: #{conv_block_pallas.2} parent=5 // pred_region
      %s4671 = ssub.s32 %s11, 2
      // Predicated region
      $region45: #{conv_block_pallas.2} parent=43 // pred_check
        %p4672 = pneg %p106
      $region46: #{conv_block_pallas.2} parent=43 // pred_check_branch
        %4674 = sbr.rel (%p4672) target = $region48
      $region47: #{conv_block_pallas.2} parent=43 // pred_region
        %p4675 = scmp.lt.s32.totalorder %s22, 1
        %s4676 = scalar_select %p4675, %s22, 1
        %p4677 = scmp.lt.s32.totalorder %s23, 0
        %s4678 = scalar_select %p4677, %s23, 0
        %s4679 = smul.addr %s4676, 36
        %s4680 = sadd.s32 %s4678, %s4679
        %s4681 = smul.addr %s4680, 8
        %s4682 = scalar_lea.vmem %s2, %s4681
      $region48: #{conv_block_pallas.2} parent=43 // pred_fallthru
        _
      // Predicated region
      $region49: #{conv_block_pallas.2} parent=43 // pred_check
        %p4683 = pneg %p134
      $region50: #{conv_block_pallas.2} parent=43 // pred_check_branch
        %4685 = sbr.rel (%p4683) target = $region52
      $region51: #{conv_block_pallas.2} parent=43 // pred_region
        %p4686 = scmp.lt.s32.totalorder %s22, 1
        %s4687 = scalar_select %p4686, %s22, 1
        %p4688 = scmp.lt.s32.totalorder %s23, 0
        %s4689 = scalar_select %p4688, %s23, 0
        %s4690 = sadd.s32 %s4689, %s4687
        %s4691 = scalar_lea.vmem %s3, %s4690
      $region52: #{conv_block_pallas.2} parent=43 // pred_fallthru
        _
      // Predicated region
      $region53: #{conv_block_pallas.2} parent=43 // pred_check
        %p4692 = pneg %p162
      $region54: #{conv_block_pallas.2} parent=43 // pred_check_branch
        %4694 = sbr.rel (%p4692) target = $region56
      $region55: #{conv_block_pallas.2} parent=43 // pred_region
        %p4695 = scmp.lt.s32.totalorder %s22, 1
        %s4696 = scalar_select %p4695, %s22, 1
        %p4697 = scmp.lt.s32.totalorder %s23, 0
        %s4698 = scalar_select %p4697, %s23, 0
        %s4699 = sadd.s32 %s4698, %s4696
        %s4700 = scalar_lea.vmem %s4, %s4699
      $region56: #{conv_block_pallas.2} parent=43 // pred_fallthru
        _
    $region44: #{conv_block_pallas.2} parent=5 // pred_fallthru
      _
  $region6: #{conv_block_pallas.2} parent=0 // loop_footer
    %s15 = sadd.s32 1, %s11
  $region7: #{conv_block_pallas.2} parent=0 // loop_footer_branch
    %10 = sbr.rel target = $region3
  $region8: #{conv_block_pallas.2} parent=0 // loop_exit
    _

</llo_original>
